<compile_context>
chip_gen: v6e
topology: v6e:2x2x1
jax: 0.10.0
libtpu: 0.0.40
codegen_flags: <defaults>
</compile_context>

<pallas_src>
import functools

import jax
import jax.numpy as jnp
from jax.experimental import pallas as pl
from jax.experimental.pallas import tpu as pltpu


def make_lstm_kernel(num_layers, T, B, D, H, O):
    """Build a Pallas kernel closure for a `num_layers`-layer LSTM + final FC."""
    G = 4 * H

    def kernel(x_ref, *refs):
        # refs layout:
        #   [w_ih_t, w_hh_t, bias] * num_layers, w_fc_t, b_fc,   (inputs)
        #   out_ref                                              (output)
        nL = 3 * num_layers
        w_fc = refs[nL][...]          # (H, O)
        b_fc = refs[nL + 1][...]      # (1, O)
        out_ref = refs[nL + 2]        # (B, O)

        # Hoist all weight / bias loads out of the recurrence (read VMEM once).
        w_ih = [refs[3 * l][...] for l in range(num_layers)]      # l0: (D, 4H); else (H, 4H)
        w_hh = [refs[3 * l + 1][...] for l in range(num_layers)]  # (H, 4H)
        bias = [refs[3 * l + 2][...] for l in range(num_layers)]  # (1, 4H)

        def cell(pre_gates, h, c, w_hh_l):
            # pre_gates already holds the x-side projection + bias for this (layer, t).
            gates = pre_gates + jnp.dot(h, w_hh_l, preferred_element_type=jnp.float32)
            i = jax.nn.sigmoid(gates[:, 0 * H:1 * H])
            f = jax.nn.sigmoid(gates[:, 1 * H:2 * H])
            g = jnp.tanh(gates[:, 2 * H:3 * H])
            o = jax.nn.sigmoid(gates[:, 3 * H:4 * H])
            c_new = f * c + i * g
            h_new = o * jnp.tanh(c_new)
            return h_new, c_new

        # Layer-0 input projection (+bias) for ALL timesteps in one MXU matmul.
        # x_ref is (B*T, D) with b-major rows; result reshaped to (B, T, 4H).
        seq0 = (
            jnp.dot(x_ref[...], w_ih[0], preferred_element_type=jnp.float32) + bias[0]
        ).reshape(B, T, G)

        # Wavefront recurrence: one unrolled time loop, all layers per timestep.
        # Dependency chain length = T + num_layers - 1 cells; the scheduler overlaps
        # layer l at time t with layer l-1 at time t+1 automatically.
        h = [jnp.zeros((B, H), jnp.float32) for _ in range(num_layers)]
        c = [jnp.zeros((B, H), jnp.float32) for _ in range(num_layers)]
        for t in range(T):
            h[0], c[0] = cell(seq0[:, t, :], h[0], c[0], w_hh[0])
            for l in range(1, num_layers):
                pre = (
                    jnp.dot(h[l - 1], w_ih[l], preferred_element_type=jnp.float32)
                    + bias[l]
                )
                h[l], c[l] = cell(pre, h[l], c[l], w_hh[l])

        # Final FC on the last timestep of the last layer (== out[:, -1, :]).
        out_ref[...] = jnp.dot(h[-1], w_fc, preferred_element_type=jnp.float32) + b_fc

    return kernel


def lstm_model_forward(x, params, *, num_layers, hidden_dim, output_dim):
    """Wrapper: parameter plumbing + pallas_call. x is (B, T, D) float32."""
    B, T, D = x.shape
    H, O = hidden_dim, output_dim
    G = 4 * H

    # Free, contiguity-preserving reshape (no transpose / no extra HBM traffic):
    # rows are b-major (row b*T + t holds x[b, t, :]).
    x2d = x.reshape(B * T, D).astype(jnp.float32)

    flat_inputs = [x2d]
    for l in range(num_layers):
        w_ih, w_hh, b_ih, b_hh = params[f"layer{l}"]
        flat_inputs.append(jnp.transpose(w_ih).astype(jnp.float32))    # (in, 4H)
        flat_inputs.append(jnp.transpose(w_hh).astype(jnp.float32))    # (H, 4H)
        flat_inputs.append((b_ih + b_hh).reshape(1, G).astype(jnp.float32))
    w_fc, b_fc = params["fc"]
    flat_inputs.append(jnp.transpose(w_fc).astype(jnp.float32))        # (H, O)
    flat_inputs.append(b_fc.reshape(1, O).astype(jnp.float32))         # (1, O)

    kernel = make_lstm_kernel(num_layers, T, B, D, H, O)
    return pl.pallas_call(
        kernel,
        out_shape=jax.ShapeDtypeStruct((B, O), jnp.float32),
        in_specs=[pl.BlockSpec(memory_space=pltpu.MemorySpace.VMEM)]
        * len(flat_inputs),
        out_specs=pl.BlockSpec(memory_space=pltpu.MemorySpace.VMEM),
        compiler_params=pltpu.CompilerParams(vmem_limit_bytes=32 * 1024 * 1024),
    )(*flat_inputs)


def init_params(key, input_dim, hidden_dim, num_layers, output_dim):
    """Deterministic init matching nn.LSTM / nn.Linear parameter shapes."""
    params = {}
    H = hidden_dim
    bound = 1.0 / (H ** 0.5)
    keys = jax.random.split(key, 4 * num_layers + 2)
    ki = 0
    for l in range(num_layers):
        in_dim = input_dim if l == 0 else H
        w_ih = jax.random.uniform(keys[ki], (4 * H, in_dim), jnp.float32, -bound, bound); ki += 1
        w_hh = jax.random.uniform(keys[ki], (4 * H, H), jnp.float32, -bound, bound); ki += 1
        b_ih = jax.random.uniform(keys[ki], (4 * H,), jnp.float32, -bound, bound); ki += 1
        b_hh = jax.random.uniform(keys[ki], (4 * H,), jnp.float32, -bound, bound); ki += 1
        params[f"layer{l}"] = (w_ih, w_hh, b_ih, b_hh)
    w_fc = jax.random.uniform(keys[ki], (output_dim, H), jnp.float32, -bound, bound); ki += 1
    b_fc = jax.random.uniform(keys[ki], (output_dim,), jnp.float32, -bound, bound)
    params["fc"] = (w_fc, b_fc)
    return params


def reference_forward(x, params, *, num_layers, hidden_dim, output_dim):
    """Pure-JAX reference mirroring PyTorch nn.LSTM + nn.Linear semantics."""
    B, T, D = x.shape
    H = hidden_dim
    inp_seq = x
    for l in range(num_layers):
        w_ih, w_hh, b_ih, b_hh = params[f"layer{l}"]
        h = jnp.zeros((B, H), jnp.float32)
        c = jnp.zeros((B, H), jnp.float32)
        outs = []
        for t in range(T):
            gates = inp_seq[:, t, :] @ w_ih.T + h @ w_hh.T + b_ih + b_hh
            i = jax.nn.sigmoid(gates[:, 0 * H:1 * H])
            f = jax.nn.sigmoid(gates[:, 1 * H:2 * H])
            g = jnp.tanh(gates[:, 2 * H:3 * H])
            o = jax.nn.sigmoid(gates[:, 3 * H:4 * H])
            c = f * c + i * g
            h = o * jnp.tanh(c)
            outs.append(h)
        inp_seq = jnp.stack(outs, axis=1)
    w_fc, b_fc = params["fc"]
    return inp_seq[:, -1, :] @ w_fc.T + b_fc


if __name__ == "__main__":
    # Small shapes consistent with the module's forward.
    batch, seq_len = 2, 8
    input_dim, hidden_dim, num_layers, output_dim = 8, 32, 2, 1

    key = jax.random.PRNGKey(0)
    kx, kp = jax.random.split(key)
    x = jax.random.normal(kx, (batch, seq_len, input_dim), jnp.float32)
    params = init_params(kp, input_dim, hidden_dim, num_layers, output_dim)

    fwd = functools.partial(
        lstm_model_forward,
        num_layers=num_layers,
        hidden_dim=hidden_dim,
        output_dim=output_dim,
    )
    out = jax.block_until_ready(jax.jit(fwd)(x, params))

    ref = reference_forward(
        x, params, num_layers=num_layers, hidden_dim=hidden_dim, output_dim=output_dim
    )
    assert out.shape == (batch, output_dim)
    assert jnp.allclose(out, ref, atol=1e-4, rtol=1e-4), (out, ref)
    print("KERNEL_OK")
</pallas_src>

<mosaic_0001>
module attributes {stable_mosaic.version = 11 : i64} {
  func.func @kernel(%arg0: memref<16x8xf32, #tpu.memory_space<vmem>>, %arg1: memref<8x128xf32, #tpu.memory_space<vmem>>, %arg2: memref<32x128xf32, #tpu.memory_space<vmem>>, %arg3: memref<1x128xf32, #tpu.memory_space<vmem>>, %arg4: memref<32x128xf32, #tpu.memory_space<vmem>>, %arg5: memref<32x128xf32, #tpu.memory_space<vmem>>, %arg6: memref<1x128xf32, #tpu.memory_space<vmem>>, %arg7: memref<32x1xf32, #tpu.memory_space<vmem>>, %arg8: memref<1x1xf32, #tpu.memory_space<vmem>>, %arg9: memref<2x1xf32, #tpu.memory_space<vmem>>) attributes {dimension_semantics = [], scalar_prefetch = 0 : i64, scratch_operands = 0 : i64, tpu.core_type = #tpu.core_type<tc>} {
    %c0 = arith.constant 0 : index
    %c0_0 = arith.constant 0 : index
    %0 = vector.load %arg7[%c0, %c0_0] : memref<32x1xf32, #tpu.memory_space<vmem>>, vector<32x1xf32>
    %c0_1 = arith.constant 0 : index
    %c0_2 = arith.constant 0 : index
    %1 = vector.load %arg8[%c0_1, %c0_2] : memref<1x1xf32, #tpu.memory_space<vmem>>, vector<1x1xf32>
    %c0_3 = arith.constant 0 : index
    %c0_4 = arith.constant 0 : index
    %2 = vector.load %arg1[%c0_3, %c0_4] : memref<8x128xf32, #tpu.memory_space<vmem>>, vector<8x128xf32>
    %c0_5 = arith.constant 0 : index
    %c0_6 = arith.constant 0 : index
    %3 = vector.load %arg4[%c0_5, %c0_6] : memref<32x128xf32, #tpu.memory_space<vmem>>, vector<32x128xf32>
    %c0_7 = arith.constant 0 : index
    %c0_8 = arith.constant 0 : index
    %4 = vector.load %arg2[%c0_7, %c0_8] : memref<32x128xf32, #tpu.memory_space<vmem>>, vector<32x128xf32>
    %c0_9 = arith.constant 0 : index
    %c0_10 = arith.constant 0 : index
    %5 = vector.load %arg5[%c0_9, %c0_10] : memref<32x128xf32, #tpu.memory_space<vmem>>, vector<32x128xf32>
    %c0_11 = arith.constant 0 : index
    %c0_12 = arith.constant 0 : index
    %6 = vector.load %arg3[%c0_11, %c0_12] : memref<1x128xf32, #tpu.memory_space<vmem>>, vector<1x128xf32>
    %c0_13 = arith.constant 0 : index
    %c0_14 = arith.constant 0 : index
    %7 = vector.load %arg6[%c0_13, %c0_14] : memref<1x128xf32, #tpu.memory_space<vmem>>, vector<1x128xf32>
    %c0_15 = arith.constant 0 : index
    %c0_16 = arith.constant 0 : index
    %8 = vector.load %arg0[%c0_15, %c0_16] : memref<16x8xf32, #tpu.memory_space<vmem>>, vector<16x8xf32>
    %cst = arith.constant dense<0.000000e+00> : vector<16x128xf32>
    %9 = tpu.matmul %8, %2, %cst {dimension_numbers = #tpu.dot_dimension_numbers<[1], [0], [0], [1], [0, 0, 1, 1], [], []>} : vector<16x8xf32>, vector<8x128xf32>, vector<16x128xf32> -> vector<16x128xf32>
    %10 = vector.broadcast %6 : vector<1x128xf32> to vector<16x128xf32>
    %11 = arith.addf %9, %10 : vector<16x128xf32>
    %12 = vector.shape_cast %11 : vector<16x128xf32> to vector<2x8x128xf32>
    %cst_17 = arith.constant 0.000000e+00 : f32
    %13 = vector.broadcast %cst_17 : f32 to vector<2x32xf32>
    %cst_18 = arith.constant 0.000000e+00 : f32
    %14 = vector.broadcast %cst_18 : f32 to vector<2x32xf32>
    %cst_19 = arith.constant 0.000000e+00 : f32
    %15 = vector.broadcast %cst_19 : f32 to vector<2x32xf32>
    %cst_20 = arith.constant 0.000000e+00 : f32
    %16 = vector.broadcast %cst_20 : f32 to vector<2x32xf32>
    %17 = vector.extract_strided_slice %12 {offsets = [0, 0, 0], sizes = [2, 1, 128], strides = [1, 1, 1]} : vector<2x8x128xf32> to vector<2x1x128xf32>
    %18 = vector.shape_cast %17 : vector<2x1x128xf32> to vector<2x128xf32>
    %cst_21 = arith.constant dense<0.000000e+00> : vector<2x128xf32>
    %19 = tpu.matmul %13, %4, %cst_21 {dimension_numbers = #tpu.dot_dimension_numbers<[1], [0], [0], [1], [0, 0, 1, 1], [], []>} : vector<2x32xf32>, vector<32x128xf32>, vector<2x128xf32> -> vector<2x128xf32>
    %20 = arith.addf %18, %19 : vector<2x128xf32>
    %21 = vector.extract_strided_slice %20 {offsets = [0, 0], sizes = [2, 32], strides = [1, 1]} : vector<2x128xf32> to vector<2x32xf32>
    %22 = arith.negf %21 : vector<2x32xf32>
    %23 = math.exp %22 : vector<2x32xf32>
    %cst_22 = arith.constant 1.000000e+00 : f32
    %24 = vector.broadcast %cst_22 : f32 to vector<2x32xf32>
    %25 = arith.addf %24, %23 : vector<2x32xf32>
    %26 = arith.divf %24, %25 : vector<2x32xf32>
    %27 = vector.extract_strided_slice %20 {offsets = [0, 32], sizes = [2, 32], strides = [1, 1]} : vector<2x128xf32> to vector<2x32xf32>
    %28 = arith.negf %27 : vector<2x32xf32>
    %29 = math.exp %28 : vector<2x32xf32>
    %cst_23 = arith.constant 1.000000e+00 : f32
    %30 = vector.broadcast %cst_23 : f32 to vector<2x32xf32>
    %31 = arith.addf %30, %29 : vector<2x32xf32>
    %32 = arith.divf %30, %31 : vector<2x32xf32>
    %33 = vector.extract_strided_slice %20 {offsets = [0, 64], sizes = [2, 32], strides = [1, 1]} : vector<2x128xf32> to vector<2x32xf32>
    %34 = math.tanh %33 : vector<2x32xf32>
    %35 = vector.extract_strided_slice %20 {offsets = [0, 96], sizes = [2, 32], strides = [1, 1]} : vector<2x128xf32> to vector<2x32xf32>
    %36 = arith.negf %35 : vector<2x32xf32>
    %37 = math.exp %36 : vector<2x32xf32>
    %cst_24 = arith.constant 1.000000e+00 : f32
    %38 = vector.broadcast %cst_24 : f32 to vector<2x32xf32>
    %39 = arith.addf %38, %37 : vector<2x32xf32>
    %40 = arith.divf %38, %39 : vector<2x32xf32>
    %41 = arith.mulf %32, %15 : vector<2x32xf32>
    %42 = arith.mulf %26, %34 : vector<2x32xf32>
    %43 = arith.addf %41, %42 : vector<2x32xf32>
    %44 = math.tanh %43 : vector<2x32xf32>
    %45 = arith.mulf %40, %44 : vector<2x32xf32>
    %cst_25 = arith.constant dense<0.000000e+00> : vector<2x128xf32>
    %46 = tpu.matmul %45, %3, %cst_25 {dimension_numbers = #tpu.dot_dimension_numbers<[1], [0], [0], [1], [0, 0, 1, 1], [], []>} : vector<2x32xf32>, vector<32x128xf32>, vector<2x128xf32> -> vector<2x128xf32>
    %47 = vector.broadcast %7 : vector<1x128xf32> to vector<2x128xf32>
    %48 = arith.addf %46, %47 : vector<2x128xf32>
    %cst_26 = arith.constant dense<0.000000e+00> : vector<2x128xf32>
    %49 = tpu.matmul %14, %5, %cst_26 {dimension_numbers = #tpu.dot_dimension_numbers<[1], [0], [0], [1], [0, 0, 1, 1], [], []>} : vector<2x32xf32>, vector<32x128xf32>, vector<2x128xf32> -> vector<2x128xf32>
    %50 = arith.addf %48, %49 : vector<2x128xf32>
    %51 = vector.extract_strided_slice %50 {offsets = [0, 0], sizes = [2, 32], strides = [1, 1]} : vector<2x128xf32> to vector<2x32xf32>
    %52 = arith.negf %51 : vector<2x32xf32>
    %53 = math.exp %52 : vector<2x32xf32>
    %cst_27 = arith.constant 1.000000e+00 : f32
    %54 = vector.broadcast %cst_27 : f32 to vector<2x32xf32>
    %55 = arith.addf %54, %53 : vector<2x32xf32>
    %56 = arith.divf %54, %55 : vector<2x32xf32>
    %57 = vector.extract_strided_slice %50 {offsets = [0, 32], sizes = [2, 32], strides = [1, 1]} : vector<2x128xf32> to vector<2x32xf32>
    %58 = arith.negf %57 : vector<2x32xf32>
    %59 = math.exp %58 : vector<2x32xf32>
    %cst_28 = arith.constant 1.000000e+00 : f32
    %60 = vector.broadcast %cst_28 : f32 to vector<2x32xf32>
    %61 = arith.addf %60, %59 : vector<2x32xf32>
    %62 = arith.divf %60, %61 : vector<2x32xf32>
    %63 = vector.extract_strided_slice %50 {offsets = [0, 64], sizes = [2, 32], strides = [1, 1]} : vector<2x128xf32> to vector<2x32xf32>
    %64 = math.tanh %63 : vector<2x32xf32>
    %65 = vector.extract_strided_slice %50 {offsets = [0, 96], sizes = [2, 32], strides = [1, 1]} : vector<2x128xf32> to vector<2x32xf32>
    %66 = arith.negf %65 : vector<2x32xf32>
    %67 = math.exp %66 : vector<2x32xf32>
    %cst_29 = arith.constant 1.000000e+00 : f32
    %68 = vector.broadcast %cst_29 : f32 to vector<2x32xf32>
    %69 = arith.addf %68, %67 : vector<2x32xf32>
    %70 = arith.divf %68, %69 : vector<2x32xf32>
    %71 = arith.mulf %62, %16 : vector<2x32xf32>
    %72 = arith.mulf %56, %64 : vector<2x32xf32>
    %73 = arith.addf %71, %72 : vector<2x32xf32>
    %74 = math.tanh %73 : vector<2x32xf32>
    %75 = arith.mulf %70, %74 : vector<2x32xf32>
    %76 = vector.extract_strided_slice %12 {offsets = [0, 1, 0], sizes = [2, 1, 128], strides = [1, 1, 1]} : vector<2x8x128xf32> to vector<2x1x128xf32>
    %77 = vector.shape_cast %76 : vector<2x1x128xf32> to vector<2x128xf32>
    %cst_30 = arith.constant dense<0.000000e+00> : vector<2x128xf32>
    %78 = tpu.matmul %45, %4, %cst_30 {dimension_numbers = #tpu.dot_dimension_numbers<[1], [0], [0], [1], [0, 0, 1, 1], [], []>} : vector<2x32xf32>, vector<32x128xf32>, vector<2x128xf32> -> vector<2x128xf32>
    %79 = arith.addf %77, %78 : vector<2x128xf32>
    %80 = vector.extract_strided_slice %79 {offsets = [0, 0], sizes = [2, 32], strides = [1, 1]} : vector<2x128xf32> to vector<2x32xf32>
    %81 = arith.negf %80 : vector<2x32xf32>
    %82 = math.exp %81 : vector<2x32xf32>
    %cst_31 = arith.constant 1.000000e+00 : f32
    %83 = vector.broadcast %cst_31 : f32 to vector<2x32xf32>
    %84 = arith.addf %83, %82 : vector<2x32xf32>
    %85 = arith.divf %83, %84 : vector<2x32xf32>
    %86 = vector.extract_strided_slice %79 {offsets = [0, 32], sizes = [2, 32], strides = [1, 1]} : vector<2x128xf32> to vector<2x32xf32>
    %87 = arith.negf %86 : vector<2x32xf32>
    %88 = math.exp %87 : vector<2x32xf32>
    %cst_32 = arith.constant 1.000000e+00 : f32
    %89 = vector.broadcast %cst_32 : f32 to vector<2x32xf32>
    %90 = arith.addf %89, %88 : vector<2x32xf32>
    %91 = arith.divf %89, %90 : vector<2x32xf32>
    %92 = vector.extract_strided_slice %79 {offsets = [0, 64], sizes = [2, 32], strides = [1, 1]} : vector<2x128xf32> to vector<2x32xf32>
    %93 = math.tanh %92 : vector<2x32xf32>
    %94 = vector.extract_strided_slice %79 {offsets = [0, 96], sizes = [2, 32], strides = [1, 1]} : vector<2x128xf32> to vector<2x32xf32>
    %95 = arith.negf %94 : vector<2x32xf32>
    %96 = math.exp %95 : vector<2x32xf32>
    %cst_33 = arith.constant 1.000000e+00 : f32
    %97 = vector.broadcast %cst_33 : f32 to vector<2x32xf32>
    %98 = arith.addf %97, %96 : vector<2x32xf32>
    %99 = arith.divf %97, %98 : vector<2x32xf32>
    %100 = arith.mulf %91, %43 : vector<2x32xf32>
    %101 = arith.mulf %85, %93 : vector<2x32xf32>
    %102 = arith.addf %100, %101 : vector<2x32xf32>
    %103 = math.tanh %102 : vector<2x32xf32>
    %104 = arith.mulf %99, %103 : vector<2x32xf32>
    %cst_34 = arith.constant dense<0.000000e+00> : vector<2x128xf32>
    %105 = tpu.matmul %104, %3, %cst_34 {dimension_numbers = #tpu.dot_dimension_numbers<[1], [0], [0], [1], [0, 0, 1, 1], [], []>} : vector<2x32xf32>, vector<32x128xf32>, vector<2x128xf32> -> vector<2x128xf32>
    %106 = vector.broadcast %7 : vector<1x128xf32> to vector<2x128xf32>
    %107 = arith.addf %105, %106 : vector<2x128xf32>
    %cst_35 = arith.constant dense<0.000000e+00> : vector<2x128xf32>
    %108 = tpu.matmul %75, %5, %cst_35 {dimension_numbers = #tpu.dot_dimension_numbers<[1], [0], [0], [1], [0, 0, 1, 1], [], []>} : vector<2x32xf32>, vector<32x128xf32>, vector<2x128xf32> -> vector<2x128xf32>
    %109 = arith.addf %107, %108 : vector<2x128xf32>
    %110 = vector.extract_strided_slice %109 {offsets = [0, 0], sizes = [2, 32], strides = [1, 1]} : vector<2x128xf32> to vector<2x32xf32>
    %111 = arith.negf %110 : vector<2x32xf32>
    %112 = math.exp %111 : vector<2x32xf32>
    %cst_36 = arith.constant 1.000000e+00 : f32
    %113 = vector.broadcast %cst_36 : f32 to vector<2x32xf32>
    %114 = arith.addf %113, %112 : vector<2x32xf32>
    %115 = arith.divf %113, %114 : vector<2x32xf32>
    %116 = vector.extract_strided_slice %109 {offsets = [0, 32], sizes = [2, 32], strides = [1, 1]} : vector<2x128xf32> to vector<2x32xf32>
    %117 = arith.negf %116 : vector<2x32xf32>
    %118 = math.exp %117 : vector<2x32xf32>
    %cst_37 = arith.constant 1.000000e+00 : f32
    %119 = vector.broadcast %cst_37 : f32 to vector<2x32xf32>
    %120 = arith.addf %119, %118 : vector<2x32xf32>
    %121 = arith.divf %119, %120 : vector<2x32xf32>
    %122 = vector.extract_strided_slice %109 {offsets = [0, 64], sizes = [2, 32], strides = [1, 1]} : vector<2x128xf32> to vector<2x32xf32>
    %123 = math.tanh %122 : vector<2x32xf32>
    %124 = vector.extract_strided_slice %109 {offsets = [0, 96], sizes = [2, 32], strides = [1, 1]} : vector<2x128xf32> to vector<2x32xf32>
    %125 = arith.negf %124 : vector<2x32xf32>
    %126 = math.exp %125 : vector<2x32xf32>
    %cst_38 = arith.constant 1.000000e+00 : f32
    %127 = vector.broadcast %cst_38 : f32 to vector<2x32xf32>
    %128 = arith.addf %127, %126 : vector<2x32xf32>
    %129 = arith.divf %127, %128 : vector<2x32xf32>
    %130 = arith.mulf %121, %73 : vector<2x32xf32>
    %131 = arith.mulf %115, %123 : vector<2x32xf32>
    %132 = arith.addf %130, %131 : vector<2x32xf32>
    %133 = math.tanh %132 : vector<2x32xf32>
    %134 = arith.mulf %129, %133 : vector<2x32xf32>
    %135 = vector.extract_strided_slice %12 {offsets = [0, 2, 0], sizes = [2, 1, 128], strides = [1, 1, 1]} : vector<2x8x128xf32> to vector<2x1x128xf32>
    %136 = vector.shape_cast %135 : vector<2x1x128xf32> to vector<2x128xf32>
    %cst_39 = arith.constant dense<0.000000e+00> : vector<2x128xf32>
    %137 = tpu.matmul %104, %4, %cst_39 {dimension_numbers = #tpu.dot_dimension_numbers<[1], [0], [0], [1], [0, 0, 1, 1], [], []>} : vector<2x32xf32>, vector<32x128xf32>, vector<2x128xf32> -> vector<2x128xf32>
    %138 = arith.addf %136, %137 : vector<2x128xf32>
    %139 = vector.extract_strided_slice %138 {offsets = [0, 0], sizes = [2, 32], strides = [1, 1]} : vector<2x128xf32> to vector<2x32xf32>
    %140 = arith.negf %139 : vector<2x32xf32>
    %141 = math.exp %140 : vector<2x32xf32>
    %cst_40 = arith.constant 1.000000e+00 : f32
    %142 = vector.broadcast %cst_40 : f32 to vector<2x32xf32>
    %143 = arith.addf %142, %141 : vector<2x32xf32>
    %144 = arith.divf %142, %143 : vector<2x32xf32>
    %145 = vector.extract_strided_slice %138 {offsets = [0, 32], sizes = [2, 32], strides = [1, 1]} : vector<2x128xf32> to vector<2x32xf32>
    %146 = arith.negf %145 : vector<2x32xf32>
    %147 = math.exp %146 : vector<2x32xf32>
    %cst_41 = arith.constant 1.000000e+00 : f32
    %148 = vector.broadcast %cst_41 : f32 to vector<2x32xf32>
    %149 = arith.addf %148, %147 : vector<2x32xf32>
    %150 = arith.divf %148, %149 : vector<2x32xf32>
    %151 = vector.extract_strided_slice %138 {offsets = [0, 64], sizes = [2, 32], strides = [1, 1]} : vector<2x128xf32> to vector<2x32xf32>
    %152 = math.tanh %151 : vector<2x32xf32>
    %153 = vector.extract_strided_slice %138 {offsets = [0, 96], sizes = [2, 32], strides = [1, 1]} : vector<2x128xf32> to vector<2x32xf32>
    %154 = arith.negf %153 : vector<2x32xf32>
    %155 = math.exp %154 : vector<2x32xf32>
    %cst_42 = arith.constant 1.000000e+00 : f32
    %156 = vector.broadcast %cst_42 : f32 to vector<2x32xf32>
    %157 = arith.addf %156, %155 : vector<2x32xf32>
    %158 = arith.divf %156, %157 : vector<2x32xf32>
    %159 = arith.mulf %150, %102 : vector<2x32xf32>
    %160 = arith.mulf %144, %152 : vector<2x32xf32>
    %161 = arith.addf %159, %160 : vector<2x32xf32>
    %162 = math.tanh %161 : vector<2x32xf32>
    %163 = arith.mulf %158, %162 : vector<2x32xf32>
    %cst_43 = arith.constant dense<0.000000e+00> : vector<2x128xf32>
    %164 = tpu.matmul %163, %3, %cst_43 {dimension_numbers = #tpu.dot_dimension_numbers<[1], [0], [0], [1], [0, 0, 1, 1], [], []>} : vector<2x32xf32>, vector<32x128xf32>, vector<2x128xf32> -> vector<2x128xf32>
    %165 = vector.broadcast %7 : vector<1x128xf32> to vector<2x128xf32>
    %166 = arith.addf %164, %165 : vector<2x128xf32>
    %cst_44 = arith.constant dense<0.000000e+00> : vector<2x128xf32>
    %167 = tpu.matmul %134, %5, %cst_44 {dimension_numbers = #tpu.dot_dimension_numbers<[1], [0], [0], [1], [0, 0, 1, 1], [], []>} : vector<2x32xf32>, vector<32x128xf32>, vector<2x128xf32> -> vector<2x128xf32>
    %168 = arith.addf %166, %167 : vector<2x128xf32>
    %169 = vector.extract_strided_slice %168 {offsets = [0, 0], sizes = [2, 32], strides = [1, 1]} : vector<2x128xf32> to vector<2x32xf32>
    %170 = arith.negf %169 : vector<2x32xf32>
    %171 = math.exp %170 : vector<2x32xf32>
    %cst_45 = arith.constant 1.000000e+00 : f32
    %172 = vector.broadcast %cst_45 : f32 to vector<2x32xf32>
    %173 = arith.addf %172, %171 : vector<2x32xf32>
    %174 = arith.divf %172, %173 : vector<2x32xf32>
    %175 = vector.extract_strided_slice %168 {offsets = [0, 32], sizes = [2, 32], strides = [1, 1]} : vector<2x128xf32> to vector<2x32xf32>
    %176 = arith.negf %175 : vector<2x32xf32>
    %177 = math.exp %176 : vector<2x32xf32>
    %cst_46 = arith.constant 1.000000e+00 : f32
    %178 = vector.broadcast %cst_46 : f32 to vector<2x32xf32>
    %179 = arith.addf %178, %177 : vector<2x32xf32>
    %180 = arith.divf %178, %179 : vector<2x32xf32>
    %181 = vector.extract_strided_slice %168 {offsets = [0, 64], sizes = [2, 32], strides = [1, 1]} : vector<2x128xf32> to vector<2x32xf32>
    %182 = math.tanh %181 : vector<2x32xf32>
    %183 = vector.extract_strided_slice %168 {offsets = [0, 96], sizes = [2, 32], strides = [1, 1]} : vector<2x128xf32> to vector<2x32xf32>
    %184 = arith.negf %183 : vector<2x32xf32>
    %185 = math.exp %184 : vector<2x32xf32>
    %cst_47 = arith.constant 1.000000e+00 : f32
    %186 = vector.broadcast %cst_47 : f32 to vector<2x32xf32>
    %187 = arith.addf %186, %185 : vector<2x32xf32>
    %188 = arith.divf %186, %187 : vector<2x32xf32>
    %189 = arith.mulf %180, %132 : vector<2x32xf32>
    %190 = arith.mulf %174, %182 : vector<2x32xf32>
    %191 = arith.addf %189, %190 : vector<2x32xf32>
    %192 = math.tanh %191 : vector<2x32xf32>
    %193 = arith.mulf %188, %192 : vector<2x32xf32>
    %194 = vector.extract_strided_slice %12 {offsets = [0, 3, 0], sizes = [2, 1, 128], strides = [1, 1, 1]} : vector<2x8x128xf32> to vector<2x1x128xf32>
    %195 = vector.shape_cast %194 : vector<2x1x128xf32> to vector<2x128xf32>
    %cst_48 = arith.constant dense<0.000000e+00> : vector<2x128xf32>
    %196 = tpu.matmul %163, %4, %cst_48 {dimension_numbers = #tpu.dot_dimension_numbers<[1], [0], [0], [1], [0, 0, 1, 1], [], []>} : vector<2x32xf32>, vector<32x128xf32>, vector<2x128xf32> -> vector<2x128xf32>
    %197 = arith.addf %195, %196 : vector<2x128xf32>
    %198 = vector.extract_strided_slice %197 {offsets = [0, 0], sizes = [2, 32], strides = [1, 1]} : vector<2x128xf32> to vector<2x32xf32>
    %199 = arith.negf %198 : vector<2x32xf32>
    %200 = math.exp %199 : vector<2x32xf32>
    %cst_49 = arith.constant 1.000000e+00 : f32
    %201 = vector.broadcast %cst_49 : f32 to vector<2x32xf32>
    %202 = arith.addf %201, %200 : vector<2x32xf32>
    %203 = arith.divf %201, %202 : vector<2x32xf32>
    %204 = vector.extract_strided_slice %197 {offsets = [0, 32], sizes = [2, 32], strides = [1, 1]} : vector<2x128xf32> to vector<2x32xf32>
    %205 = arith.negf %204 : vector<2x32xf32>
    %206 = math.exp %205 : vector<2x32xf32>
    %cst_50 = arith.constant 1.000000e+00 : f32
    %207 = vector.broadcast %cst_50 : f32 to vector<2x32xf32>
    %208 = arith.addf %207, %206 : vector<2x32xf32>
    %209 = arith.divf %207, %208 : vector<2x32xf32>
    %210 = vector.extract_strided_slice %197 {offsets = [0, 64], sizes = [2, 32], strides = [1, 1]} : vector<2x128xf32> to vector<2x32xf32>
    %211 = math.tanh %210 : vector<2x32xf32>
    %212 = vector.extract_strided_slice %197 {offsets = [0, 96], sizes = [2, 32], strides = [1, 1]} : vector<2x128xf32> to vector<2x32xf32>
    %213 = arith.negf %212 : vector<2x32xf32>
    %214 = math.exp %213 : vector<2x32xf32>
    %cst_51 = arith.constant 1.000000e+00 : f32
    %215 = vector.broadcast %cst_51 : f32 to vector<2x32xf32>
    %216 = arith.addf %215, %214 : vector<2x32xf32>
    %217 = arith.divf %215, %216 : vector<2x32xf32>
    %218 = arith.mulf %209, %161 : vector<2x32xf32>
    %219 = arith.mulf %203, %211 : vector<2x32xf32>
    %220 = arith.addf %218, %219 : vector<2x32xf32>
    %221 = math.tanh %220 : vector<2x32xf32>
    %222 = arith.mulf %217, %221 : vector<2x32xf32>
    %cst_52 = arith.constant dense<0.000000e+00> : vector<2x128xf32>
    %223 = tpu.matmul %222, %3, %cst_52 {dimension_numbers = #tpu.dot_dimension_numbers<[1], [0], [0], [1], [0, 0, 1, 1], [], []>} : vector<2x32xf32>, vector<32x128xf32>, vector<2x128xf32> -> vector<2x128xf32>
    %224 = vector.broadcast %7 : vector<1x128xf32> to vector<2x128xf32>
    %225 = arith.addf %223, %224 : vector<2x128xf32>
    %cst_53 = arith.constant dense<0.000000e+00> : vector<2x128xf32>
    %226 = tpu.matmul %193, %5, %cst_53 {dimension_numbers = #tpu.dot_dimension_numbers<[1], [0], [0], [1], [0, 0, 1, 1], [], []>} : vector<2x32xf32>, vector<32x128xf32>, vector<2x128xf32> -> vector<2x128xf32>
    %227 = arith.addf %225, %226 : vector<2x128xf32>
    %228 = vector.extract_strided_slice %227 {offsets = [0, 0], sizes = [2, 32], strides = [1, 1]} : vector<2x128xf32> to vector<2x32xf32>
    %229 = arith.negf %228 : vector<2x32xf32>
    %230 = math.exp %229 : vector<2x32xf32>
    %cst_54 = arith.constant 1.000000e+00 : f32
    %231 = vector.broadcast %cst_54 : f32 to vector<2x32xf32>
    %232 = arith.addf %231, %230 : vector<2x32xf32>
    %233 = arith.divf %231, %232 : vector<2x32xf32>
    %234 = vector.extract_strided_slice %227 {offsets = [0, 32], sizes = [2, 32], strides = [1, 1]} : vector<2x128xf32> to vector<2x32xf32>
    %235 = arith.negf %234 : vector<2x32xf32>
    %236 = math.exp %235 : vector<2x32xf32>
    %cst_55 = arith.constant 1.000000e+00 : f32
    %237 = vector.broadcast %cst_55 : f32 to vector<2x32xf32>
    %238 = arith.addf %237, %236 : vector<2x32xf32>
    %239 = arith.divf %237, %238 : vector<2x32xf32>
    %240 = vector.extract_strided_slice %227 {offsets = [0, 64], sizes = [2, 32], strides = [1, 1]} : vector<2x128xf32> to vector<2x32xf32>
    %241 = math.tanh %240 : vector<2x32xf32>
    %242 = vector.extract_strided_slice %227 {offsets = [0, 96], sizes = [2, 32], strides = [1, 1]} : vector<2x128xf32> to vector<2x32xf32>
    %243 = arith.negf %242 : vector<2x32xf32>
    %244 = math.exp %243 : vector<2x32xf32>
    %cst_56 = arith.constant 1.000000e+00 : f32
    %245 = vector.broadcast %cst_56 : f32 to vector<2x32xf32>
    %246 = arith.addf %245, %244 : vector<2x32xf32>
    %247 = arith.divf %245, %246 : vector<2x32xf32>
    %248 = arith.mulf %239, %191 : vector<2x32xf32>
    %249 = arith.mulf %233, %241 : vector<2x32xf32>
    %250 = arith.addf %248, %249 : vector<2x32xf32>
    %251 = math.tanh %250 : vector<2x32xf32>
    %252 = arith.mulf %247, %251 : vector<2x32xf32>
    %253 = vector.extract_strided_slice %12 {offsets = [0, 4, 0], sizes = [2, 1, 128], strides = [1, 1, 1]} : vector<2x8x128xf32> to vector<2x1x128xf32>
    %254 = vector.shape_cast %253 : vector<2x1x128xf32> to vector<2x128xf32>
    %cst_57 = arith.constant dense<0.000000e+00> : vector<2x128xf32>
    %255 = tpu.matmul %222, %4, %cst_57 {dimension_numbers = #tpu.dot_dimension_numbers<[1], [0], [0], [1], [0, 0, 1, 1], [], []>} : vector<2x32xf32>, vector<32x128xf32>, vector<2x128xf32> -> vector<2x128xf32>
    %256 = arith.addf %254, %255 : vector<2x128xf32>
    %257 = vector.extract_strided_slice %256 {offsets = [0, 0], sizes = [2, 32], strides = [1, 1]} : vector<2x128xf32> to vector<2x32xf32>
    %258 = arith.negf %257 : vector<2x32xf32>
    %259 = math.exp %258 : vector<2x32xf32>
    %cst_58 = arith.constant 1.000000e+00 : f32
    %260 = vector.broadcast %cst_58 : f32 to vector<2x32xf32>
    %261 = arith.addf %260, %259 : vector<2x32xf32>
    %262 = arith.divf %260, %261 : vector<2x32xf32>
    %263 = vector.extract_strided_slice %256 {offsets = [0, 32], sizes = [2, 32], strides = [1, 1]} : vector<2x128xf32> to vector<2x32xf32>
    %264 = arith.negf %263 : vector<2x32xf32>
    %265 = math.exp %264 : vector<2x32xf32>
    %cst_59 = arith.constant 1.000000e+00 : f32
    %266 = vector.broadcast %cst_59 : f32 to vector<2x32xf32>
    %267 = arith.addf %266, %265 : vector<2x32xf32>
    %268 = arith.divf %266, %267 : vector<2x32xf32>
    %269 = vector.extract_strided_slice %256 {offsets = [0, 64], sizes = [2, 32], strides = [1, 1]} : vector<2x128xf32> to vector<2x32xf32>
    %270 = math.tanh %269 : vector<2x32xf32>
    %271 = vector.extract_strided_slice %256 {offsets = [0, 96], sizes = [2, 32], strides = [1, 1]} : vector<2x128xf32> to vector<2x32xf32>
    %272 = arith.negf %271 : vector<2x32xf32>
    %273 = math.exp %272 : vector<2x32xf32>
    %cst_60 = arith.constant 1.000000e+00 : f32
    %274 = vector.broadcast %cst_60 : f32 to vector<2x32xf32>
    %275 = arith.addf %274, %273 : vector<2x32xf32>
    %276 = arith.divf %274, %275 : vector<2x32xf32>
    %277 = arith.mulf %268, %220 : vector<2x32xf32>
    %278 = arith.mulf %262, %270 : vector<2x32xf32>
    %279 = arith.addf %277, %278 : vector<2x32xf32>
    %280 = math.tanh %279 : vector<2x32xf32>
    %281 = arith.mulf %276, %280 : vector<2x32xf32>
    %cst_61 = arith.constant dense<0.000000e+00> : vector<2x128xf32>
    %282 = tpu.matmul %281, %3, %cst_61 {dimension_numbers = #tpu.dot_dimension_numbers<[1], [0], [0], [1], [0, 0, 1, 1], [], []>} : vector<2x32xf32>, vector<32x128xf32>, vector<2x128xf32> -> vector<2x128xf32>
    %283 = vector.broadcast %7 : vector<1x128xf32> to vector<2x128xf32>
    %284 = arith.addf %282, %283 : vector<2x128xf32>
    %cst_62 = arith.constant dense<0.000000e+00> : vector<2x128xf32>
    %285 = tpu.matmul %252, %5, %cst_62 {dimension_numbers = #tpu.dot_dimension_numbers<[1], [0], [0], [1], [0, 0, 1, 1], [], []>} : vector<2x32xf32>, vector<32x128xf32>, vector<2x128xf32> -> vector<2x128xf32>
    %286 = arith.addf %284, %285 : vector<2x128xf32>
    %287 = vector.extract_strided_slice %286 {offsets = [0, 0], sizes = [2, 32], strides = [1, 1]} : vector<2x128xf32> to vector<2x32xf32>
    %288 = arith.negf %287 : vector<2x32xf32>
    %289 = math.exp %288 : vector<2x32xf32>
    %cst_63 = arith.constant 1.000000e+00 : f32
    %290 = vector.broadcast %cst_63 : f32 to vector<2x32xf32>
    %291 = arith.addf %290, %289 : vector<2x32xf32>
    %292 = arith.divf %290, %291 : vector<2x32xf32>
    %293 = vector.extract_strided_slice %286 {offsets = [0, 32], sizes = [2, 32], strides = [1, 1]} : vector<2x128xf32> to vector<2x32xf32>
    %294 = arith.negf %293 : vector<2x32xf32>
    %295 = math.exp %294 : vector<2x32xf32>
    %cst_64 = arith.constant 1.000000e+00 : f32
    %296 = vector.broadcast %cst_64 : f32 to vector<2x32xf32>
    %297 = arith.addf %296, %295 : vector<2x32xf32>
    %298 = arith.divf %296, %297 : vector<2x32xf32>
    %299 = vector.extract_strided_slice %286 {offsets = [0, 64], sizes = [2, 32], strides = [1, 1]} : vector<2x128xf32> to vector<2x32xf32>
    %300 = math.tanh %299 : vector<2x32xf32>
    %301 = vector.extract_strided_slice %286 {offsets = [0, 96], sizes = [2, 32], strides = [1, 1]} : vector<2x128xf32> to vector<2x32xf32>
    %302 = arith.negf %301 : vector<2x32xf32>
    %303 = math.exp %302 : vector<2x32xf32>
    %cst_65 = arith.constant 1.000000e+00 : f32
    %304 = vector.broadcast %cst_65 : f32 to vector<2x32xf32>
    %305 = arith.addf %304, %303 : vector<2x32xf32>
    %306 = arith.divf %304, %305 : vector<2x32xf32>
    %307 = arith.mulf %298, %250 : vector<2x32xf32>
    %308 = arith.mulf %292, %300 : vector<2x32xf32>
    %309 = arith.addf %307, %308 : vector<2x32xf32>
    %310 = math.tanh %309 : vector<2x32xf32>
    %311 = arith.mulf %306, %310 : vector<2x32xf32>
    %312 = vector.extract_strided_slice %12 {offsets = [0, 5, 0], sizes = [2, 1, 128], strides = [1, 1, 1]} : vector<2x8x128xf32> to vector<2x1x128xf32>
    %313 = vector.shape_cast %312 : vector<2x1x128xf32> to vector<2x128xf32>
    %cst_66 = arith.constant dense<0.000000e+00> : vector<2x128xf32>
    %314 = tpu.matmul %281, %4, %cst_66 {dimension_numbers = #tpu.dot_dimension_numbers<[1], [0], [0], [1], [0, 0, 1, 1], [], []>} : vector<2x32xf32>, vector<32x128xf32>, vector<2x128xf32> -> vector<2x128xf32>
    %315 = arith.addf %313, %314 : vector<2x128xf32>
    %316 = vector.extract_strided_slice %315 {offsets = [0, 0], sizes = [2, 32], strides = [1, 1]} : vector<2x128xf32> to vector<2x32xf32>
    %317 = arith.negf %316 : vector<2x32xf32>
    %318 = math.exp %317 : vector<2x32xf32>
    %cst_67 = arith.constant 1.000000e+00 : f32
    %319 = vector.broadcast %cst_67 : f32 to vector<2x32xf32>
    %320 = arith.addf %319, %318 : vector<2x32xf32>
    %321 = arith.divf %319, %320 : vector<2x32xf32>
    %322 = vector.extract_strided_slice %315 {offsets = [0, 32], sizes = [2, 32], strides = [1, 1]} : vector<2x128xf32> to vector<2x32xf32>
    %323 = arith.negf %322 : vector<2x32xf32>
    %324 = math.exp %323 : vector<2x32xf32>
    %cst_68 = arith.constant 1.000000e+00 : f32
    %325 = vector.broadcast %cst_68 : f32 to vector<2x32xf32>
    %326 = arith.addf %325, %324 : vector<2x32xf32>
    %327 = arith.divf %325, %326 : vector<2x32xf32>
    %328 = vector.extract_strided_slice %315 {offsets = [0, 64], sizes = [2, 32], strides = [1, 1]} : vector<2x128xf32> to vector<2x32xf32>
    %329 = math.tanh %328 : vector<2x32xf32>
    %330 = vector.extract_strided_slice %315 {offsets = [0, 96], sizes = [2, 32], strides = [1, 1]} : vector<2x128xf32> to vector<2x32xf32>
    %331 = arith.negf %330 : vector<2x32xf32>
    %332 = math.exp %331 : vector<2x32xf32>
    %cst_69 = arith.constant 1.000000e+00 : f32
    %333 = vector.broadcast %cst_69 : f32 to vector<2x32xf32>
    %334 = arith.addf %333, %332 : vector<2x32xf32>
    %335 = arith.divf %333, %334 : vector<2x32xf32>
    %336 = arith.mulf %327, %279 : vector<2x32xf32>
    %337 = arith.mulf %321, %329 : vector<2x32xf32>
    %338 = arith.addf %336, %337 : vector<2x32xf32>
    %339 = math.tanh %338 : vector<2x32xf32>
    %340 = arith.mulf %335, %339 : vector<2x32xf32>
    %cst_70 = arith.constant dense<0.000000e+00> : vector<2x128xf32>
    %341 = tpu.matmul %340, %3, %cst_70 {dimension_numbers = #tpu.dot_dimension_numbers<[1], [0], [0], [1], [0, 0, 1, 1], [], []>} : vector<2x32xf32>, vector<32x128xf32>, vector<2x128xf32> -> vector<2x128xf32>
    %342 = vector.broadcast %7 : vector<1x128xf32> to vector<2x128xf32>
    %343 = arith.addf %341, %342 : vector<2x128xf32>
    %cst_71 = arith.constant dense<0.000000e+00> : vector<2x128xf32>
    %344 = tpu.matmul %311, %5, %cst_71 {dimension_numbers = #tpu.dot_dimension_numbers<[1], [0], [0], [1], [0, 0, 1, 1], [], []>} : vector<2x32xf32>, vector<32x128xf32>, vector<2x128xf32> -> vector<2x128xf32>
    %345 = arith.addf %343, %344 : vector<2x128xf32>
    %346 = vector.extract_strided_slice %345 {offsets = [0, 0], sizes = [2, 32], strides = [1, 1]} : vector<2x128xf32> to vector<2x32xf32>
    %347 = arith.negf %346 : vector<2x32xf32>
    %348 = math.exp %347 : vector<2x32xf32>
    %cst_72 = arith.constant 1.000000e+00 : f32
    %349 = vector.broadcast %cst_72 : f32 to vector<2x32xf32>
    %350 = arith.addf %349, %348 : vector<2x32xf32>
    %351 = arith.divf %349, %350 : vector<2x32xf32>
    %352 = vector.extract_strided_slice %345 {offsets = [0, 32], sizes = [2, 32], strides = [1, 1]} : vector<2x128xf32> to vector<2x32xf32>
    %353 = arith.negf %352 : vector<2x32xf32>
    %354 = math.exp %353 : vector<2x32xf32>
    %cst_73 = arith.constant 1.000000e+00 : f32
    %355 = vector.broadcast %cst_73 : f32 to vector<2x32xf32>
    %356 = arith.addf %355, %354 : vector<2x32xf32>
    %357 = arith.divf %355, %356 : vector<2x32xf32>
    %358 = vector.extract_strided_slice %345 {offsets = [0, 64], sizes = [2, 32], strides = [1, 1]} : vector<2x128xf32> to vector<2x32xf32>
    %359 = math.tanh %358 : vector<2x32xf32>
    %360 = vector.extract_strided_slice %345 {offsets = [0, 96], sizes = [2, 32], strides = [1, 1]} : vector<2x128xf32> to vector<2x32xf32>
    %361 = arith.negf %360 : vector<2x32xf32>
    %362 = math.exp %361 : vector<2x32xf32>
    %cst_74 = arith.constant 1.000000e+00 : f32
    %363 = vector.broadcast %cst_74 : f32 to vector<2x32xf32>
    %364 = arith.addf %363, %362 : vector<2x32xf32>
    %365 = arith.divf %363, %364 : vector<2x32xf32>
    %366 = arith.mulf %357, %309 : vector<2x32xf32>
    %367 = arith.mulf %351, %359 : vector<2x32xf32>
    %368 = arith.addf %366, %367 : vector<2x32xf32>
    %369 = math.tanh %368 : vector<2x32xf32>
    %370 = arith.mulf %365, %369 : vector<2x32xf32>
    %371 = vector.extract_strided_slice %12 {offsets = [0, 6, 0], sizes = [2, 1, 128], strides = [1, 1, 1]} : vector<2x8x128xf32> to vector<2x1x128xf32>
    %372 = vector.shape_cast %371 : vector<2x1x128xf32> to vector<2x128xf32>
    %cst_75 = arith.constant dense<0.000000e+00> : vector<2x128xf32>
    %373 = tpu.matmul %340, %4, %cst_75 {dimension_numbers = #tpu.dot_dimension_numbers<[1], [0], [0], [1], [0, 0, 1, 1], [], []>} : vector<2x32xf32>, vector<32x128xf32>, vector<2x128xf32> -> vector<2x128xf32>
    %374 = arith.addf %372, %373 : vector<2x128xf32>
    %375 = vector.extract_strided_slice %374 {offsets = [0, 0], sizes = [2, 32], strides = [1, 1]} : vector<2x128xf32> to vector<2x32xf32>
    %376 = arith.negf %375 : vector<2x32xf32>
    %377 = math.exp %376 : vector<2x32xf32>
    %cst_76 = arith.constant 1.000000e+00 : f32
    %378 = vector.broadcast %cst_76 : f32 to vector<2x32xf32>
    %379 = arith.addf %378, %377 : vector<2x32xf32>
    %380 = arith.divf %378, %379 : vector<2x32xf32>
    %381 = vector.extract_strided_slice %374 {offsets = [0, 32], sizes = [2, 32], strides = [1, 1]} : vector<2x128xf32> to vector<2x32xf32>
    %382 = arith.negf %381 : vector<2x32xf32>
    %383 = math.exp %382 : vector<2x32xf32>
    %cst_77 = arith.constant 1.000000e+00 : f32
    %384 = vector.broadcast %cst_77 : f32 to vector<2x32xf32>
    %385 = arith.addf %384, %383 : vector<2x32xf32>
    %386 = arith.divf %384, %385 : vector<2x32xf32>
    %387 = vector.extract_strided_slice %374 {offsets = [0, 64], sizes = [2, 32], strides = [1, 1]} : vector<2x128xf32> to vector<2x32xf32>
    %388 = math.tanh %387 : vector<2x32xf32>
    %389 = vector.extract_strided_slice %374 {offsets = [0, 96], sizes = [2, 32], strides = [1, 1]} : vector<2x128xf32> to vector<2x32xf32>
    %390 = arith.negf %389 : vector<2x32xf32>
    %391 = math.exp %390 : vector<2x32xf32>
    %cst_78 = arith.constant 1.000000e+00 : f32
    %392 = vector.broadcast %cst_78 : f32 to vector<2x32xf32>
    %393 = arith.addf %392, %391 : vector<2x32xf32>
    %394 = arith.divf %392, %393 : vector<2x32xf32>
    %395 = arith.mulf %386, %338 : vector<2x32xf32>
    %396 = arith.mulf %380, %388 : vector<2x32xf32>
    %397 = arith.addf %395, %396 : vector<2x32xf32>
    %398 = math.tanh %397 : vector<2x32xf32>
    %399 = arith.mulf %394, %398 : vector<2x32xf32>
    %cst_79 = arith.constant dense<0.000000e+00> : vector<2x128xf32>
    %400 = tpu.matmul %399, %3, %cst_79 {dimension_numbers = #tpu.dot_dimension_numbers<[1], [0], [0], [1], [0, 0, 1, 1], [], []>} : vector<2x32xf32>, vector<32x128xf32>, vector<2x128xf32> -> vector<2x128xf32>
    %401 = vector.broadcast %7 : vector<1x128xf32> to vector<2x128xf32>
    %402 = arith.addf %400, %401 : vector<2x128xf32>
    %cst_80 = arith.constant dense<0.000000e+00> : vector<2x128xf32>
    %403 = tpu.matmul %370, %5, %cst_80 {dimension_numbers = #tpu.dot_dimension_numbers<[1], [0], [0], [1], [0, 0, 1, 1], [], []>} : vector<2x32xf32>, vector<32x128xf32>, vector<2x128xf32> -> vector<2x128xf32>
    %404 = arith.addf %402, %403 : vector<2x128xf32>
    %405 = vector.extract_strided_slice %404 {offsets = [0, 0], sizes = [2, 32], strides = [1, 1]} : vector<2x128xf32> to vector<2x32xf32>
    %406 = arith.negf %405 : vector<2x32xf32>
    %407 = math.exp %406 : vector<2x32xf32>
    %cst_81 = arith.constant 1.000000e+00 : f32
    %408 = vector.broadcast %cst_81 : f32 to vector<2x32xf32>
    %409 = arith.addf %408, %407 : vector<2x32xf32>
    %410 = arith.divf %408, %409 : vector<2x32xf32>
    %411 = vector.extract_strided_slice %404 {offsets = [0, 32], sizes = [2, 32], strides = [1, 1]} : vector<2x128xf32> to vector<2x32xf32>
    %412 = arith.negf %411 : vector<2x32xf32>
    %413 = math.exp %412 : vector<2x32xf32>
    %cst_82 = arith.constant 1.000000e+00 : f32
    %414 = vector.broadcast %cst_82 : f32 to vector<2x32xf32>
    %415 = arith.addf %414, %413 : vector<2x32xf32>
    %416 = arith.divf %414, %415 : vector<2x32xf32>
    %417 = vector.extract_strided_slice %404 {offsets = [0, 64], sizes = [2, 32], strides = [1, 1]} : vector<2x128xf32> to vector<2x32xf32>
    %418 = math.tanh %417 : vector<2x32xf32>
    %419 = vector.extract_strided_slice %404 {offsets = [0, 96], sizes = [2, 32], strides = [1, 1]} : vector<2x128xf32> to vector<2x32xf32>
    %420 = arith.negf %419 : vector<2x32xf32>
    %421 = math.exp %420 : vector<2x32xf32>
    %cst_83 = arith.constant 1.000000e+00 : f32
    %422 = vector.broadcast %cst_83 : f32 to vector<2x32xf32>
    %423 = arith.addf %422, %421 : vector<2x32xf32>
    %424 = arith.divf %422, %423 : vector<2x32xf32>
    %425 = arith.mulf %416, %368 : vector<2x32xf32>
    %426 = arith.mulf %410, %418 : vector<2x32xf32>
    %427 = arith.addf %425, %426 : vector<2x32xf32>
    %428 = math.tanh %427 : vector<2x32xf32>
    %429 = arith.mulf %424, %428 : vector<2x32xf32>
    %430 = vector.extract_strided_slice %12 {offsets = [0, 7, 0], sizes = [2, 1, 128], strides = [1, 1, 1]} : vector<2x8x128xf32> to vector<2x1x128xf32>
    %431 = vector.shape_cast %430 : vector<2x1x128xf32> to vector<2x128xf32>
    %cst_84 = arith.constant dense<0.000000e+00> : vector<2x128xf32>
    %432 = tpu.matmul %399, %4, %cst_84 {dimension_numbers = #tpu.dot_dimension_numbers<[1], [0], [0], [1], [0, 0, 1, 1], [], []>} : vector<2x32xf32>, vector<32x128xf32>, vector<2x128xf32> -> vector<2x128xf32>
    %433 = arith.addf %431, %432 : vector<2x128xf32>
    %434 = vector.extract_strided_slice %433 {offsets = [0, 0], sizes = [2, 32], strides = [1, 1]} : vector<2x128xf32> to vector<2x32xf32>
    %435 = arith.negf %434 : vector<2x32xf32>
    %436 = math.exp %435 : vector<2x32xf32>
    %cst_85 = arith.constant 1.000000e+00 : f32
    %437 = vector.broadcast %cst_85 : f32 to vector<2x32xf32>
    %438 = arith.addf %437, %436 : vector<2x32xf32>
    %439 = arith.divf %437, %438 : vector<2x32xf32>
    %440 = vector.extract_strided_slice %433 {offsets = [0, 32], sizes = [2, 32], strides = [1, 1]} : vector<2x128xf32> to vector<2x32xf32>
    %441 = arith.negf %440 : vector<2x32xf32>
    %442 = math.exp %441 : vector<2x32xf32>
    %cst_86 = arith.constant 1.000000e+00 : f32
    %443 = vector.broadcast %cst_86 : f32 to vector<2x32xf32>
    %444 = arith.addf %443, %442 : vector<2x32xf32>
    %445 = arith.divf %443, %444 : vector<2x32xf32>
    %446 = vector.extract_strided_slice %433 {offsets = [0, 64], sizes = [2, 32], strides = [1, 1]} : vector<2x128xf32> to vector<2x32xf32>
    %447 = math.tanh %446 : vector<2x32xf32>
    %448 = vector.extract_strided_slice %433 {offsets = [0, 96], sizes = [2, 32], strides = [1, 1]} : vector<2x128xf32> to vector<2x32xf32>
    %449 = arith.negf %448 : vector<2x32xf32>
    %450 = math.exp %449 : vector<2x32xf32>
    %cst_87 = arith.constant 1.000000e+00 : f32
    %451 = vector.broadcast %cst_87 : f32 to vector<2x32xf32>
    %452 = arith.addf %451, %450 : vector<2x32xf32>
    %453 = arith.divf %451, %452 : vector<2x32xf32>
    %454 = arith.mulf %445, %397 : vector<2x32xf32>
    %455 = arith.mulf %439, %447 : vector<2x32xf32>
    %456 = arith.addf %454, %455 : vector<2x32xf32>
    %457 = math.tanh %456 : vector<2x32xf32>
    %458 = arith.mulf %453, %457 : vector<2x32xf32>
    %cst_88 = arith.constant dense<0.000000e+00> : vector<2x128xf32>
    %459 = tpu.matmul %458, %3, %cst_88 {dimension_numbers = #tpu.dot_dimension_numbers<[1], [0], [0], [1], [0, 0, 1, 1], [], []>} : vector<2x32xf32>, vector<32x128xf32>, vector<2x128xf32> -> vector<2x128xf32>
    %460 = vector.broadcast %7 : vector<1x128xf32> to vector<2x128xf32>
    %461 = arith.addf %459, %460 : vector<2x128xf32>
    %cst_89 = arith.constant dense<0.000000e+00> : vector<2x128xf32>
    %462 = tpu.matmul %429, %5, %cst_89 {dimension_numbers = #tpu.dot_dimension_numbers<[1], [0], [0], [1], [0, 0, 1, 1], [], []>} : vector<2x32xf32>, vector<32x128xf32>, vector<2x128xf32> -> vector<2x128xf32>
    %463 = arith.addf %461, %462 : vector<2x128xf32>
    %464 = vector.extract_strided_slice %463 {offsets = [0, 0], sizes = [2, 32], strides = [1, 1]} : vector<2x128xf32> to vector<2x32xf32>
    %465 = arith.negf %464 : vector<2x32xf32>
    %466 = math.exp %465 : vector<2x32xf32>
    %cst_90 = arith.constant 1.000000e+00 : f32
    %467 = vector.broadcast %cst_90 : f32 to vector<2x32xf32>
    %468 = arith.addf %467, %466 : vector<2x32xf32>
    %469 = arith.divf %467, %468 : vector<2x32xf32>
    %470 = vector.extract_strided_slice %463 {offsets = [0, 32], sizes = [2, 32], strides = [1, 1]} : vector<2x128xf32> to vector<2x32xf32>
    %471 = arith.negf %470 : vector<2x32xf32>
    %472 = math.exp %471 : vector<2x32xf32>
    %cst_91 = arith.constant 1.000000e+00 : f32
    %473 = vector.broadcast %cst_91 : f32 to vector<2x32xf32>
    %474 = arith.addf %473, %472 : vector<2x32xf32>
    %475 = arith.divf %473, %474 : vector<2x32xf32>
    %476 = vector.extract_strided_slice %463 {offsets = [0, 64], sizes = [2, 32], strides = [1, 1]} : vector<2x128xf32> to vector<2x32xf32>
    %477 = math.tanh %476 : vector<2x32xf32>
    %478 = vector.extract_strided_slice %463 {offsets = [0, 96], sizes = [2, 32], strides = [1, 1]} : vector<2x128xf32> to vector<2x32xf32>
    %479 = arith.negf %478 : vector<2x32xf32>
    %480 = math.exp %479 : vector<2x32xf32>
    %cst_92 = arith.constant 1.000000e+00 : f32
    %481 = vector.broadcast %cst_92 : f32 to vector<2x32xf32>
    %482 = arith.addf %481, %480 : vector<2x32xf32>
    %483 = arith.divf %481, %482 : vector<2x32xf32>
    %484 = arith.mulf %475, %427 : vector<2x32xf32>
    %485 = arith.mulf %469, %477 : vector<2x32xf32>
    %486 = arith.addf %484, %485 : vector<2x32xf32>
    %487 = math.tanh %486 : vector<2x32xf32>
    %488 = arith.mulf %483, %487 : vector<2x32xf32>
    %cst_93 = arith.constant dense<0.000000e+00> : vector<2x1xf32>
    %489 = tpu.matmul %488, %0, %cst_93 {dimension_numbers = #tpu.dot_dimension_numbers<[1], [0], [0], [1], [0, 0, 1, 1], [], []>} : vector<2x32xf32>, vector<32x1xf32>, vector<2x1xf32> -> vector<2x1xf32>
    %490 = vector.broadcast %1 : vector<1x1xf32> to vector<2x1xf32>
    %491 = arith.addf %489, %490 : vector<2x1xf32>
    %c0_94 = arith.constant 0 : index
    %c0_95 = arith.constant 0 : index
    %492 = vector.load %arg9[%c0_94, %c0_95] : memref<2x1xf32, #tpu.memory_space<vmem>>, vector<2x1xf32>
    tpu.vector_store %arg9[%c0_94, %c0_95], %491 {strides = array<i32>} : memref<2x1xf32, #tpu.memory_space<vmem>>, vector<2x1xf32>,
    return
  }
}

</mosaic_0001>

<llo_original>
// kernel: lstm_model_forward.1
$region0: #{lstm_model_forward.1}
  #allocation0 [shape = 'u32[]', space=smem, size = 0x4, offset = 0x4, fixed_abs, tag = 'smem constant byte address 0x4 - core index']
  #allocation1 [shape = 'u32[144,128]{1,0:T(1,128)}', space=vmem, size = 0x12000, scoped, tag = 'internal scratch']
  #allocation2 [shape = 'f32[1,1]{1,0:T(1,128)S(1)}', space=vmem, size = 0x200, scoped, tag = 'scoped memory for lstm_model_forward.1']
  %s0 = inlined_call_operand.hbm [shape: f32[16,8], index: 0, kind: input, shape index: {}]
  %s1 = inlined_call_operand.hbm [shape: f32[8,128], index: 1, kind: input, shape index: {}]
  %s2 = inlined_call_operand.vmem [shape: f32[32,128], index: 2, kind: input, shape index: {}]
  %s3 = inlined_call_operand.vmem [shape: f32[1,128], index: 3, kind: input, shape index: {}]
  %s4 = inlined_call_operand.vmem [shape: f32[32,128], index: 4, kind: input, shape index: {}]
  %s5 = inlined_call_operand.hbm [shape: f32[32,128], index: 5, kind: input, shape index: {}]
  %s6 = inlined_call_operand.vmem [shape: f32[1,128], index: 6, kind: input, shape index: {}]
  %s7 = inlined_call_operand.vmem [shape: f32[32,1], index: 7, kind: input, shape index: {}]
  %s8 = inlined_call_operand.<no memory space> [shape: f32[1,1], index: 8, kind: input, shape index: {}]
  %s9 = inlined_call_operand.vmem [shape: f32[2,1], index: 9, kind: output, shape index: {}]
  %s10 = sld [smem:[#allocation0]]
  $region58: #{lstm_model_forward.1} parent=0
    _
  %s12 = ssub.s32 1, %s10
  %s13 = scalar_select 0, %s12, %s10
  %v14 = vstv %s8
  %15 = vst [vmem:[#allocation2] sm:$0x1] %v14
  $region1: #{lstm_model_forward.1} parent=0
    #allocation3 [shape = 'u8[8192]{0}', space=vmem, size = 0x2000, scoped, tag = 'input window, operand 0, single buffered']
    #allocation4 [shape = 's32[1]{0}', space=sflag, size = 0x4, scoped, tag = 'scoped memory for lstm_model_forward.1']
    #allocation5 [shape = 'u8[4096]{0}', space=vmem, size = 0x1000, scoped, tag = 'input window, operand 1, single buffered']
    #allocation6 [shape = 's32[1]{0}', space=sflag, size = 0x4, scoped, tag = 'scoped memory for lstm_model_forward.1']
    #allocation7 [shape = 'u8[16384]{0}', space=vmem, size = 0x4000, scoped, tag = 'input window, operand 5, single buffered']
    %16 = vsyncpa [#allocation4], 0
    %17 = vsyncpa [#allocation6], 0
    // Predicated region
    $region2: #{lstm_model_forward.1} parent=1 // pred_check
      _
    $region3: #{lstm_model_forward.1} parent=1 // pred_check_branch
      %19 = sbr.rel (0) target = $region5
    $region4: #{lstm_model_forward.1} parent=1 // pred_region
      %s21 = ssub.s32 256, 256
      %22 = vsyncadd [#allocation4], %s21
      %s23 = sshll.u32 [#allocation3], 4
      %s24 = int_to_ptr.vmem [resolvable:$true] %s23
      %29 = dma.hbm_to_vmem [thread:$0]  %s0, 256, %s24, [#allocation4], 128, 128, 8
    $region5: #{lstm_model_forward.1} parent=1 // pred_fallthru
      _
    // Predicated region
    $region6: #{lstm_model_forward.1} parent=1 // pred_check
      _
    $region7: #{lstm_model_forward.1} parent=1 // pred_check_branch
      %31 = sbr.rel (0) target = $region9
    $region8: #{lstm_model_forward.1} parent=1 // pred_region
      %s33 = ssub.s32 128, 128
      %34 = vsyncadd [#allocation6], %s33
      %s36 = sshll.u32 [#allocation5], 4
      %s37 = int_to_ptr.vmem [resolvable:$true] %s36
      %39 = dma.hbm_to_vmem [thread:$0]  %s1, 128, %s37, [#allocation6]
    $region9: #{lstm_model_forward.1} parent=1 // pred_fallthru
      _
    // Predicated region
    $region10: #{lstm_model_forward.1} parent=1 // pred_check
      _
    $region11: #{lstm_model_forward.1} parent=1 // pred_check_branch
      %41 = sbr.rel (0) target = $region13
    $region12: #{lstm_model_forward.1} parent=1 // pred_region
      _
    $region13: #{lstm_model_forward.1} parent=1 // pred_fallthru
      _
    // Predicated region
    $region14: #{lstm_model_forward.1} parent=1 // pred_check
      _
    $region15: #{lstm_model_forward.1} parent=1 // pred_check_branch
      %43 = sbr.rel (0) target = $region17
    $region16: #{lstm_model_forward.1} parent=1 // pred_region
      _
    $region17: #{lstm_model_forward.1} parent=1 // pred_fallthru
      _
    // Predicated region
    $region18: #{lstm_model_forward.1} parent=1 // pred_check
      _
    $region19: #{lstm_model_forward.1} parent=1 // pred_check_branch
      %45 = sbr.rel (0) target = $region21
    $region20: #{lstm_model_forward.1} parent=1 // pred_region
      _
    $region21: #{lstm_model_forward.1} parent=1 // pred_fallthru
      _
    // Predicated region
    $region22: #{lstm_model_forward.1} parent=1 // pred_check
      _
    $region23: #{lstm_model_forward.1} parent=1 // pred_check_branch
      %47 = sbr.rel (0) target = $region25
    $region24: #{lstm_model_forward.1} parent=1 // pred_region
      %s49 = ssub.s32 512, 512
      %50 = vsyncadd [#allocation6], %s49
      %s51 = sshll.u32 [#allocation7], 4
      %s52 = int_to_ptr.vmem [resolvable:$true] %s51
      %57 = dma.hbm_to_vmem [thread:$0]  %s5, 512, %s52, [#allocation6], 128, 128, 8
    $region25: #{lstm_model_forward.1} parent=1 // pred_fallthru
      _
    // Predicated region
    $region26: #{lstm_model_forward.1} parent=1 // pred_check
      _
    $region27: #{lstm_model_forward.1} parent=1 // pred_check_branch
      %59 = sbr.rel (0) target = $region29
    $region28: #{lstm_model_forward.1} parent=1 // pred_region
      _
    $region29: #{lstm_model_forward.1} parent=1 // pred_fallthru
      _
    // Predicated region
    $region30: #{lstm_model_forward.1} parent=1 // pred_check
      _
    $region31: #{lstm_model_forward.1} parent=1 // pred_check_branch
      %61 = sbr.rel (0) target = $region33
    $region32: #{lstm_model_forward.1} parent=1 // pred_region
      _
    $region33: #{lstm_model_forward.1} parent=1 // pred_fallthru
      _
    // Predicated region
    $region34: #{lstm_model_forward.1} parent=1 // pred_check
      _
    $region35: #{lstm_model_forward.1} parent=1 // pred_check_branch
      %63 = sbr.rel (0) target = $region37
    $region36: #{lstm_model_forward.1} parent=1 // pred_region
      _
    $region37: #{lstm_model_forward.1} parent=1 // pred_fallthru
      _
    // Predicated region
    $region38: #{lstm_model_forward.1} parent=1 // pred_check
      _
    $region39: #{lstm_model_forward.1} parent=1 // pred_check_branch
      %65 = sbr.rel (0) target = $region41
    $region40: #{lstm_model_forward.1} parent=1 // pred_region
      %66 = dma.done [#allocation4], 256
    $region41: #{lstm_model_forward.1} parent=1 // pred_fallthru
      _
    // Predicated region
    $region42: #{lstm_model_forward.1} parent=1 // pred_check
      _
    $region43: #{lstm_model_forward.1} parent=1 // pred_check_branch
      %68 = sbr.rel (0) target = $region45
    $region44: #{lstm_model_forward.1} parent=1 // pred_region
      %69 = dma.done [#allocation6], 128
    $region45: #{lstm_model_forward.1} parent=1 // pred_fallthru
      _
    // Predicated region
    $region46: #{lstm_model_forward.1} parent=1 // pred_check
      _
    $region47: #{lstm_model_forward.1} parent=1 // pred_check_branch
      %71 = sbr.rel (0) target = $region49
    $region48: #{lstm_model_forward.1} parent=1 // pred_region
      %72 = dma.done [#allocation6], 512
    $region49: #{lstm_model_forward.1} parent=1 // pred_fallthru
      _
    %v73 = vld [vmem:[%s7] sm:$0xff]
    %v74 = vld [vmem:[%s7 + $0x8] sm:$0xff]
    %v75 = vld [vmem:[%s7 + $0x10] sm:$0xff]
    %v76 = vld [vmem:[%s7 + $0x18] sm:$0xff]
    %v77 = vld [vmem:[#allocation2] sm:$0x1]
    %v78 = vld [vmem:[#allocation5] sm:$0xff]
    %v79 = vld [vmem:[%s4] sm:$0xff]
    %v80 = vld [vmem:[%s4 + $0x8] sm:$0xff]
    %v81 = vld [vmem:[%s4 + $0x10] sm:$0xff]
    %v82 = vld [vmem:[%s4 + $0x18] sm:$0xff]
    %v83 = vld [vmem:[%s2] sm:$0xff]
    %v84 = vld [vmem:[%s2 + $0x8] sm:$0xff]
    %v85 = vld [vmem:[%s2 + $0x10] sm:$0xff]
    %v86 = vld [vmem:[%s2 + $0x18] sm:$0xff]
    %v87 = vld [vmem:[#allocation7] sm:$0xff]
    %v88 = vld [vmem:[#allocation7 + $0x8] sm:$0xff]
    %v89 = vld [vmem:[#allocation7 + $0x10] sm:$0xff]
    %v90 = vld [vmem:[#allocation7 + $0x18] sm:$0xff]
    %v91 = vld [vmem:[%s3] sm:$0x1]
    %v92 = vld [vmem:[%s6] sm:$0x1]
    %v93 = vld [vmem:[#allocation3] sm:$0xff]
    %v94 = vld [vmem:[#allocation3 + $0x8] sm:$0xff]
    %v96 = vlaneseq
    %v97 = vshrl.u32 %v96, 7
    %v98 = vsub.s32 0, %v97
    %v99 = vrot.slane %v91, %v98
    %vm101 = vcmask 64512
    %v103 = vsel %vm101, %v93, 0
    %v106 = vsel %vm101, %v94, 0
    %108 = vmatprep.subr.mxu0 0.0
    %109 = vmatpush1.msra.mxu0 0.0
    %110 = vmatprep.subr.mxu0 0.0
    %111 = vmatpush1.msra.mxu0 0.0
    %112 = vmatprep.subr.mxu0 0.0
    %113 = vmatpush1.msra.mxu0 0.0
    %114 = vmatprep.subr.mxu0 0.0
    %115 = vmatpush1.msra.mxu0 0.0
    %116 = vmatprep.subr.mxu0 0.0
    %117 = vmatpush1.msra.mxu0 0.0
    %118 = vmatprep.subr.mxu0 0.0
    %119 = vmatpush1.msra.mxu0 0.0
    %120 = vmatprep.subr.mxu0 0.0
    %121 = vmatpush1.msra.mxu0 0.0
    %122 = vmatprep.subr.mxu0 0.0
    %123 = vmatpush1.msra.mxu0 0.0
    %124 = vmatprep.subr.mxu0 0.0
    %125 = vmatpush1.msra.mxu0 0.0
    %126 = vmatprep.subr.mxu0 0.0
    %127 = vmatpush1.msra.mxu0 0.0
    %128 = vmatprep.subr.mxu0 0.0
    %129 = vmatpush1.msra.mxu0 0.0
    %130 = vmatprep.subr.mxu0 0.0
    %131 = vmatpush1.msra.mxu0 0.0
    %132 = vmatprep.subr.mxu0 0.0
    %133 = vmatpush1.msra.mxu0 0.0
    %134 = vmatprep.subr.mxu0 0.0
    %135 = vmatpush1.msra.mxu0 0.0
    %136 = vmatprep.subr.mxu0 0.0
    %137 = vmatpush1.msra.mxu0 0.0
    %138 = vmatprep.subr.mxu0 0.0
    %139 = vmatpush1.msra.mxu0 %v78
    %140 = vmatprep.subr.mxu0 0.0
    %141 = vmatpush2.msra.mxu0 0.0
    %142 = vmatprep.subr.mxu0 0.0
    %143 = vmatpush2.msra.mxu0 0.0
    %144 = vmatprep.subr.mxu0 0.0
    %145 = vmatpush2.msra.mxu0 0.0
    %146 = vmatprep.subr.mxu0 0.0
    %147 = vmatpush2.msra.mxu0 0.0
    %148 = vmatprep.subr.mxu0 0.0
    %149 = vmatpush2.msra.mxu0 0.0
    %150 = vmatprep.subr.mxu0 0.0
    %151 = vmatpush2.msra.mxu0 0.0
    %152 = vmatprep.subr.mxu0 0.0
    %153 = vmatpush2.msra.mxu0 0.0
    %154 = vmatprep.subr.mxu0 0.0
    %155 = vmatpush2.msra.mxu0 0.0
    %156 = vmatprep.subr.mxu0 0.0
    %157 = vmatpush2.msra.mxu0 0.0
    %158 = vmatprep.subr.mxu0 0.0
    %159 = vmatpush2.msra.mxu0 0.0
    %160 = vmatprep.subr.mxu0 0.0
    %161 = vmatpush2.msra.mxu0 0.0
    %162 = vmatprep.subr.mxu0 0.0
    %163 = vmatpush2.msra.mxu0 0.0
    %164 = vmatprep.subr.mxu0 0.0
    %165 = vmatpush2.msra.mxu0 0.0
    %166 = vmatprep.subr.mxu0 0.0
    %167 = vmatpush2.msra.mxu0 0.0
    %168 = vmatprep.subr.mxu0 0.0
    %169 = vmatpush2.msra.mxu0 0.0
    %170 = vmatprep.subr.mxu0 0.0
    %171 = vmatpush2.msra.mxu0 0.0
    %172 = vmatprep.mubr.f32.mxu0 0.0
    %173 = vmatmul.mubr.f32.gmra.mxu0 %v103
    %v174 = vpop.f32.mrf.mxu0
    %v175 = vadd.f32 %v99, %v174
    %v176 = vpop.f32.mrf.mxu0
    %177 = vmatprep.mubr.f32.mxu0 0.0
    %178 = vmatmul.mubr.f32.gmra.mxu0 %v106
    %v179 = vpop.f32.mrf.mxu0
    %v180 = vadd.f32 %v99, %v179
    %v181 = vpop.f32.mrf.mxu0
    %182 = vdwg.mxu0
    %vm183 = vcmask 261120
    %v185 = vsel %vm183, 0.0, 0
    %187 = vmatprep.subr.mxu0 0.0
    %188 = vmatpush1.msra.mxu0 0.0
    %189 = vmatprep.subr.mxu0 0.0
    %190 = vmatpush1.msra.mxu0 0.0
    %191 = vmatprep.subr.mxu0 0.0
    %192 = vmatpush1.msra.mxu0 0.0
    %193 = vmatprep.subr.mxu0 0.0
    %194 = vmatpush1.msra.mxu0 0.0
    %195 = vmatprep.subr.mxu0 0.0
    %196 = vmatpush1.msra.mxu0 0.0
    %197 = vmatprep.subr.mxu0 0.0
    %198 = vmatpush1.msra.mxu0 0.0
    %199 = vmatprep.subr.mxu0 0.0
    %200 = vmatpush1.msra.mxu0 0.0
    %201 = vmatprep.subr.mxu0 0.0
    %202 = vmatpush1.msra.mxu0 0.0
    %203 = vmatprep.subr.mxu0 0.0
    %204 = vmatpush1.msra.mxu0 0.0
    %205 = vmatprep.subr.mxu0 0.0
    %206 = vmatpush1.msra.mxu0 0.0
    %207 = vmatprep.subr.mxu0 0.0
    %208 = vmatpush1.msra.mxu0 0.0
    %209 = vmatprep.subr.mxu0 0.0
    %210 = vmatpush1.msra.mxu0 0.0
    %211 = vmatprep.subr.mxu0 0.0
    %212 = vmatpush1.msra.mxu0 %v86
    %213 = vmatprep.subr.mxu0 0.0
    %214 = vmatpush1.msra.mxu0 %v85
    %215 = vmatprep.subr.mxu0 0.0
    %216 = vmatpush1.msra.mxu0 %v84
    %217 = vmatprep.subr.mxu0 0.0
    %218 = vmatpush1.msra.mxu0 %v83
    %219 = vmatprep.subr.mxu0 0.0
    %220 = vmatpush2.msra.mxu0 0.0
    %221 = vmatprep.subr.mxu0 0.0
    %222 = vmatpush2.msra.mxu0 0.0
    %223 = vmatprep.subr.mxu0 0.0
    %224 = vmatpush2.msra.mxu0 0.0
    %225 = vmatprep.subr.mxu0 0.0
    %226 = vmatpush2.msra.mxu0 0.0
    %227 = vmatprep.subr.mxu0 0.0
    %228 = vmatpush2.msra.mxu0 0.0
    %229 = vmatprep.subr.mxu0 0.0
    %230 = vmatpush2.msra.mxu0 0.0
    %231 = vmatprep.subr.mxu0 0.0
    %232 = vmatpush2.msra.mxu0 0.0
    %233 = vmatprep.subr.mxu0 0.0
    %234 = vmatpush2.msra.mxu0 0.0
    %235 = vmatprep.subr.mxu0 0.0
    %236 = vmatpush2.msra.mxu0 0.0
    %237 = vmatprep.subr.mxu0 0.0
    %238 = vmatpush2.msra.mxu0 0.0
    %239 = vmatprep.subr.mxu0 0.0
    %240 = vmatpush2.msra.mxu0 0.0
    %241 = vmatprep.subr.mxu0 0.0
    %242 = vmatpush2.msra.mxu0 0.0
    %243 = vmatprep.subr.mxu0 0.0
    %244 = vmatpush2.msra.mxu0 0.0
    %245 = vmatprep.subr.mxu0 0.0
    %246 = vmatpush2.msra.mxu0 0.0
    %247 = vmatprep.subr.mxu0 0.0
    %248 = vmatpush2.msra.mxu0 0.0
    %249 = vmatprep.subr.mxu0 0.0
    %250 = vmatpush2.msra.mxu0 0.0
    %251 = vmatprep.mubr.f32.mxu0 0.0
    %252 = vmatmul.mubr.f32.gmra.mxu0 %v185
    %v253 = vpop.f32.mrf.mxu0
    %v254 = vadd.f32 0.0, %v253
    %v255 = vpop.f32.mrf.mxu0
    %256 = vdwg.mxu0
    %v258 = vrot.slane %v254, 1
    %v261 = vadd.f32 %v175, %v254
    %v262 = vadd.f32 %v180, %v258
    %v263 = vxor.u32 %v261, 2147483648
    %v264 = vxor.u32 %v262, 2147483648
    %v265 = vmul.f32 %v263, 1.442695
    %v266 = vpow.pop %v265
    %v267 = vmul.f32 %v264, 1.442695
    %v268 = vpow.pop %v267
    %v269 = vadd.f32 %v266, 1.0
    %v270 = vadd.f32 %v268, 1.0
    %v271 = vrcp.pop %v269
    %v272 = vmul.f32 1.0, %v271
    %v273 = vrcp.pop %v270
    %v274 = vmul.f32 1.0, %v273
    %v275 = vtanh.pop %v261
    %v276 = vtanh.pop %v262
    %v277 = vmul.f32 %v272, 0.0
    %v278 = vmul.f32 %v274, 0.0
    %281 = vrot.lane.b32.xlu0 %v275, 64
    %v282 = vpop.permute.xlu0 %281
    %283 = vrot.lane.b32.xlu0 %v276, 64
    %v284 = vpop.permute.xlu0 %283
    %v287 = vmul.f32 %v272, %v282
    %v288 = vmul.f32 %v274, %v284
    %291 = vrot.lane.b32.xlu0 %v287, 32
    %v292 = vpop.permute.xlu0 %291
    %293 = vrot.lane.b32.xlu0 %v288, 32
    %v294 = vpop.permute.xlu0 %293
    %v297 = vadd.f32 %v277, %v292
    %v298 = vadd.f32 %v278, %v294
    %v299 = vtanh.pop %v297
    %v300 = vtanh.pop %v298
    %303 = vrot.lane.b32.xlu0 %v299, 64
    %v304 = vpop.permute.xlu0 %303
    %305 = vrot.lane.b32.xlu0 %v300, 64
    %v306 = vpop.permute.xlu0 %305
    %v309 = vmul.f32 %v272, %v304
    %v310 = vmul.f32 %v274, %v306
    %v312 = vlaneseq
    %v313 = vshrl.u32 %v312, 7
    %v314 = vsub.s32 0, %v313
    %v315 = vrot.slane %v92, %v314
    %v319 = vrot.slane %v310, 7
    %vm320 = vcmask 1041409
    %v321 = vsel %vm320, %v319, %v309
    %322 = vrot.lane.b32.xlu0 %v321, 32
    %v323 = vpop.permute.xlu0 %322
    %v324 = vsel %vm183, %v323, 0
    %326 = vmatprep.subr.mxu0 0.0
    %327 = vmatpush1.msra.mxu0 0.0
    %328 = vmatprep.subr.mxu0 0.0
    %329 = vmatpush1.msra.mxu0 0.0
    %330 = vmatprep.subr.mxu0 0.0
    %331 = vmatpush1.msra.mxu0 0.0
    %332 = vmatprep.subr.mxu0 0.0
    %333 = vmatpush1.msra.mxu0 0.0
    %334 = vmatprep.subr.mxu0 0.0
    %335 = vmatpush1.msra.mxu0 0.0
    %336 = vmatprep.subr.mxu0 0.0
    %337 = vmatpush1.msra.mxu0 0.0
    %338 = vmatprep.subr.mxu0 0.0
    %339 = vmatpush1.msra.mxu0 0.0
    %340 = vmatprep.subr.mxu0 0.0
    %341 = vmatpush1.msra.mxu0 0.0
    %342 = vmatprep.subr.mxu0 0.0
    %343 = vmatpush1.msra.mxu0 0.0
    %344 = vmatprep.subr.mxu0 0.0
    %345 = vmatpush1.msra.mxu0 0.0
    %346 = vmatprep.subr.mxu0 0.0
    %347 = vmatpush1.msra.mxu0 0.0
    %348 = vmatprep.subr.mxu0 0.0
    %349 = vmatpush1.msra.mxu0 0.0
    %350 = vmatprep.subr.mxu0 0.0
    %351 = vmatpush1.msra.mxu0 %v82
    %352 = vmatprep.subr.mxu0 0.0
    %353 = vmatpush1.msra.mxu0 %v81
    %354 = vmatprep.subr.mxu0 0.0
    %355 = vmatpush1.msra.mxu0 %v80
    %356 = vmatprep.subr.mxu0 0.0
    %357 = vmatpush1.msra.mxu0 %v79
    %358 = vmatprep.subr.mxu0 0.0
    %359 = vmatpush2.msra.mxu0 0.0
    %360 = vmatprep.subr.mxu0 0.0
    %361 = vmatpush2.msra.mxu0 0.0
    %362 = vmatprep.subr.mxu0 0.0
    %363 = vmatpush2.msra.mxu0 0.0
    %364 = vmatprep.subr.mxu0 0.0
    %365 = vmatpush2.msra.mxu0 0.0
    %366 = vmatprep.subr.mxu0 0.0
    %367 = vmatpush2.msra.mxu0 0.0
    %368 = vmatprep.subr.mxu0 0.0
    %369 = vmatpush2.msra.mxu0 0.0
    %370 = vmatprep.subr.mxu0 0.0
    %371 = vmatpush2.msra.mxu0 0.0
    %372 = vmatprep.subr.mxu0 0.0
    %373 = vmatpush2.msra.mxu0 0.0
    %374 = vmatprep.subr.mxu0 0.0
    %375 = vmatpush2.msra.mxu0 0.0
    %376 = vmatprep.subr.mxu0 0.0
    %377 = vmatpush2.msra.mxu0 0.0
    %378 = vmatprep.subr.mxu0 0.0
    %379 = vmatpush2.msra.mxu0 0.0
    %380 = vmatprep.subr.mxu0 0.0
    %381 = vmatpush2.msra.mxu0 0.0
    %382 = vmatprep.subr.mxu0 0.0
    %383 = vmatpush2.msra.mxu0 0.0
    %384 = vmatprep.subr.mxu0 0.0
    %385 = vmatpush2.msra.mxu0 0.0
    %386 = vmatprep.subr.mxu0 0.0
    %387 = vmatpush2.msra.mxu0 0.0
    %388 = vmatprep.subr.mxu0 0.0
    %389 = vmatpush2.msra.mxu0 0.0
    %390 = vmatprep.mubr.f32.mxu0 0.0
    %391 = vmatmul.mubr.f32.gmra.mxu0 %v324
    %v392 = vpop.f32.mrf.mxu0
    %v393 = vadd.f32 %v315, %v392
    %v394 = vpop.f32.mrf.mxu0
    %395 = vdwg.mxu0
    %396 = vmatprep.subr.mxu0 0.0
    %397 = vmatpush1.msra.mxu0 0.0
    %398 = vmatprep.subr.mxu0 0.0
    %399 = vmatpush1.msra.mxu0 0.0
    %400 = vmatprep.subr.mxu0 0.0
    %401 = vmatpush1.msra.mxu0 0.0
    %402 = vmatprep.subr.mxu0 0.0
    %403 = vmatpush1.msra.mxu0 0.0
    %404 = vmatprep.subr.mxu0 0.0
    %405 = vmatpush1.msra.mxu0 0.0
    %406 = vmatprep.subr.mxu0 0.0
    %407 = vmatpush1.msra.mxu0 0.0
    %408 = vmatprep.subr.mxu0 0.0
    %409 = vmatpush1.msra.mxu0 0.0
    %410 = vmatprep.subr.mxu0 0.0
    %411 = vmatpush1.msra.mxu0 0.0
    %412 = vmatprep.subr.mxu0 0.0
    %413 = vmatpush1.msra.mxu0 0.0
    %414 = vmatprep.subr.mxu0 0.0
    %415 = vmatpush1.msra.mxu0 0.0
    %416 = vmatprep.subr.mxu0 0.0
    %417 = vmatpush1.msra.mxu0 0.0
    %418 = vmatprep.subr.mxu0 0.0
    %419 = vmatpush1.msra.mxu0 0.0
    %420 = vmatprep.subr.mxu0 0.0
    %421 = vmatpush1.msra.mxu0 %v90
    %422 = vmatprep.subr.mxu0 0.0
    %423 = vmatpush1.msra.mxu0 %v89
    %424 = vmatprep.subr.mxu0 0.0
    %425 = vmatpush1.msra.mxu0 %v88
    %426 = vmatprep.subr.mxu0 0.0
    %427 = vmatpush1.msra.mxu0 %v87
    %428 = vmatprep.subr.mxu0 0.0
    %429 = vmatpush2.msra.mxu0 0.0
    %430 = vmatprep.subr.mxu0 0.0
    %431 = vmatpush2.msra.mxu0 0.0
    %432 = vmatprep.subr.mxu0 0.0
    %433 = vmatpush2.msra.mxu0 0.0
    %434 = vmatprep.subr.mxu0 0.0
    %435 = vmatpush2.msra.mxu0 0.0
    %436 = vmatprep.subr.mxu0 0.0
    %437 = vmatpush2.msra.mxu0 0.0
    %438 = vmatprep.subr.mxu0 0.0
    %439 = vmatpush2.msra.mxu0 0.0
    %440 = vmatprep.subr.mxu0 0.0
    %441 = vmatpush2.msra.mxu0 0.0
    %442 = vmatprep.subr.mxu0 0.0
    %443 = vmatpush2.msra.mxu0 0.0
    %444 = vmatprep.subr.mxu0 0.0
    %445 = vmatpush2.msra.mxu0 0.0
    %446 = vmatprep.subr.mxu0 0.0
    %447 = vmatpush2.msra.mxu0 0.0
    %448 = vmatprep.subr.mxu0 0.0
    %449 = vmatpush2.msra.mxu0 0.0
    %450 = vmatprep.subr.mxu0 0.0
    %451 = vmatpush2.msra.mxu0 0.0
    %452 = vmatprep.subr.mxu0 0.0
    %453 = vmatpush2.msra.mxu0 0.0
    %454 = vmatprep.subr.mxu0 0.0
    %455 = vmatpush2.msra.mxu0 0.0
    %456 = vmatprep.subr.mxu0 0.0
    %457 = vmatpush2.msra.mxu0 0.0
    %458 = vmatprep.subr.mxu0 0.0
    %459 = vmatpush2.msra.mxu0 0.0
    %460 = vmatprep.mubr.f32.mxu0 0.0
    %461 = vmatmul.mubr.f32.gmra.mxu0 %v185
    %v462 = vpop.f32.mrf.mxu0
    %v463 = vadd.f32 0.0, %v462
    %v464 = vpop.f32.mrf.mxu0
    %465 = vdwg.mxu0
    %v466 = vadd.f32 %v393, %v463
    %v467 = vxor.u32 %v466, 2147483648
    %v468 = vmul.f32 %v467, 1.442695
    %v469 = vpow.pop %v468
    %v470 = vadd.f32 %v469, 1.0
    %v471 = vrcp.pop %v470
    %v472 = vmul.f32 1.0, %v471
    %v473 = vtanh.pop %v466
    %v474 = vmul.f32 %v472, 0.0
    %476 = vrot.lane.b32.xlu0 %v473, 64
    %v477 = vpop.permute.xlu0 %476
    %v479 = vmul.f32 %v472, %v477
    %481 = vrot.lane.b32.xlu0 %v479, 32
    %v482 = vpop.permute.xlu0 %481
    %v484 = vadd.f32 %v474, %v482
    %v485 = vtanh.pop %v484
    %487 = vrot.lane.b32.xlu0 %v485, 64
    %v488 = vpop.permute.xlu0 %487
    %v490 = vmul.f32 %v472, %v488
    %491 = vmatprep.subr.mxu0 0.0
    %492 = vmatpush1.msra.mxu0 0.0
    %493 = vmatprep.subr.mxu0 0.0
    %494 = vmatpush1.msra.mxu0 0.0
    %495 = vmatprep.subr.mxu0 0.0
    %496 = vmatpush1.msra.mxu0 0.0
    %497 = vmatprep.subr.mxu0 0.0
    %498 = vmatpush1.msra.mxu0 0.0
    %499 = vmatprep.subr.mxu0 0.0
    %500 = vmatpush1.msra.mxu0 0.0
    %501 = vmatprep.subr.mxu0 0.0
    %502 = vmatpush1.msra.mxu0 0.0
    %503 = vmatprep.subr.mxu0 0.0
    %504 = vmatpush1.msra.mxu0 0.0
    %505 = vmatprep.subr.mxu0 0.0
    %506 = vmatpush1.msra.mxu0 0.0
    %507 = vmatprep.subr.mxu0 0.0
    %508 = vmatpush1.msra.mxu0 0.0
    %509 = vmatprep.subr.mxu0 0.0
    %510 = vmatpush1.msra.mxu0 0.0
    %511 = vmatprep.subr.mxu0 0.0
    %512 = vmatpush1.msra.mxu0 0.0
    %513 = vmatprep.subr.mxu0 0.0
    %514 = vmatpush1.msra.mxu0 0.0
    %515 = vmatprep.subr.mxu0 0.0
    %516 = vmatpush1.msra.mxu0 %v86
    %517 = vmatprep.subr.mxu0 0.0
    %518 = vmatpush1.msra.mxu0 %v85
    %519 = vmatprep.subr.mxu0 0.0
    %520 = vmatpush1.msra.mxu0 %v84
    %521 = vmatprep.subr.mxu0 0.0
    %522 = vmatpush1.msra.mxu0 %v83
    %523 = vmatprep.subr.mxu0 0.0
    %524 = vmatpush2.msra.mxu0 0.0
    %525 = vmatprep.subr.mxu0 0.0
    %526 = vmatpush2.msra.mxu0 0.0
    %527 = vmatprep.subr.mxu0 0.0
    %528 = vmatpush2.msra.mxu0 0.0
    %529 = vmatprep.subr.mxu0 0.0
    %530 = vmatpush2.msra.mxu0 0.0
    %531 = vmatprep.subr.mxu0 0.0
    %532 = vmatpush2.msra.mxu0 0.0
    %533 = vmatprep.subr.mxu0 0.0
    %534 = vmatpush2.msra.mxu0 0.0
    %535 = vmatprep.subr.mxu0 0.0
    %536 = vmatpush2.msra.mxu0 0.0
    %537 = vmatprep.subr.mxu0 0.0
    %538 = vmatpush2.msra.mxu0 0.0
    %539 = vmatprep.subr.mxu0 0.0
    %540 = vmatpush2.msra.mxu0 0.0
    %541 = vmatprep.subr.mxu0 0.0
    %542 = vmatpush2.msra.mxu0 0.0
    %543 = vmatprep.subr.mxu0 0.0
    %544 = vmatpush2.msra.mxu0 0.0
    %545 = vmatprep.subr.mxu0 0.0
    %546 = vmatpush2.msra.mxu0 0.0
    %547 = vmatprep.subr.mxu0 0.0
    %548 = vmatpush2.msra.mxu0 0.0
    %549 = vmatprep.subr.mxu0 0.0
    %550 = vmatpush2.msra.mxu0 0.0
    %551 = vmatprep.subr.mxu0 0.0
    %552 = vmatpush2.msra.mxu0 0.0
    %553 = vmatprep.subr.mxu0 0.0
    %554 = vmatpush2.msra.mxu0 0.0
    %555 = vmatprep.mubr.f32.mxu0 0.0
    %556 = vmatmul.mubr.f32.gmra.mxu0 %v324
    %v557 = vpop.f32.mrf.mxu0
    %v558 = vadd.f32 0.0, %v557
    %v559 = vpop.f32.mrf.mxu0
    %560 = vdwg.mxu0
    %v562 = vrot.slane %v558, 7
    %v565 = vadd.f32 %v175, %v562
    %v566 = vadd.f32 %v180, %v558
    %v567 = vxor.u32 %v565, 2147483648
    %v568 = vxor.u32 %v566, 2147483648
    %v569 = vmul.f32 %v567, 1.442695
    %v570 = vpow.pop %v569
    %v571 = vmul.f32 %v568, 1.442695
    %v572 = vpow.pop %v571
    %v573 = vadd.f32 %v570, 1.0
    %v574 = vadd.f32 %v572, 1.0
    %v575 = vrcp.pop %v573
    %v576 = vmul.f32 1.0, %v575
    %v577 = vrcp.pop %v574
    %v578 = vmul.f32 1.0, %v577
    %v579 = vtanh.pop %v565
    %v580 = vtanh.pop %v566
    %v583 = vrot.slane %v297, 7
    %v584 = vrot.slane %v298, 7
    %v587 = vmul.f32 %v576, %v583
    %v588 = vmul.f32 %v578, %v584
    %591 = vrot.lane.b32.xlu0 %v579, 64
    %v592 = vpop.permute.xlu0 %591
    %593 = vrot.lane.b32.xlu0 %v580, 64
    %v594 = vpop.permute.xlu0 %593
    %v597 = vmul.f32 %v576, %v592
    %v598 = vmul.f32 %v578, %v594
    %601 = vrot.lane.b32.xlu0 %v597, 32
    %v602 = vpop.permute.xlu0 %601
    %603 = vrot.lane.b32.xlu0 %v598, 32
    %v604 = vpop.permute.xlu0 %603
    %v607 = vadd.f32 %v587, %v602
    %v608 = vadd.f32 %v588, %v604
    %v609 = vtanh.pop %v607
    %v610 = vtanh.pop %v608
    %613 = vrot.lane.b32.xlu0 %v609, 64
    %v614 = vpop.permute.xlu0 %613
    %615 = vrot.lane.b32.xlu0 %v610, 64
    %v616 = vpop.permute.xlu0 %615
    %v619 = vmul.f32 %v576, %v614
    %v620 = vmul.f32 %v578, %v616
    %v623 = vrot.slane %v619, 1
    %v624 = vsel %vm320, %v620, %v623
    %625 = vrot.lane.b32.xlu0 %v624, 32
    %v626 = vpop.permute.xlu0 %625
    %v627 = vsel %vm183, %v626, 0
    %629 = vmatprep.subr.mxu0 0.0
    %630 = vmatpush1.msra.mxu0 0.0
    %631 = vmatprep.subr.mxu0 0.0
    %632 = vmatpush1.msra.mxu0 0.0
    %633 = vmatprep.subr.mxu0 0.0
    %634 = vmatpush1.msra.mxu0 0.0
    %635 = vmatprep.subr.mxu0 0.0
    %636 = vmatpush1.msra.mxu0 0.0
    %637 = vmatprep.subr.mxu0 0.0
    %638 = vmatpush1.msra.mxu0 0.0
    %639 = vmatprep.subr.mxu0 0.0
    %640 = vmatpush1.msra.mxu0 0.0
    %641 = vmatprep.subr.mxu0 0.0
    %642 = vmatpush1.msra.mxu0 0.0
    %643 = vmatprep.subr.mxu0 0.0
    %644 = vmatpush1.msra.mxu0 0.0
    %645 = vmatprep.subr.mxu0 0.0
    %646 = vmatpush1.msra.mxu0 0.0
    %647 = vmatprep.subr.mxu0 0.0
    %648 = vmatpush1.msra.mxu0 0.0
    %649 = vmatprep.subr.mxu0 0.0
    %650 = vmatpush1.msra.mxu0 0.0
    %651 = vmatprep.subr.mxu0 0.0
    %652 = vmatpush1.msra.mxu0 0.0
    %653 = vmatprep.subr.mxu0 0.0
    %654 = vmatpush1.msra.mxu0 %v82
    %655 = vmatprep.subr.mxu0 0.0
    %656 = vmatpush1.msra.mxu0 %v81
    %657 = vmatprep.subr.mxu0 0.0
    %658 = vmatpush1.msra.mxu0 %v80
    %659 = vmatprep.subr.mxu0 0.0
    %660 = vmatpush1.msra.mxu0 %v79
    %661 = vmatprep.subr.mxu0 0.0
    %662 = vmatpush2.msra.mxu0 0.0
    %663 = vmatprep.subr.mxu0 0.0
    %664 = vmatpush2.msra.mxu0 0.0
    %665 = vmatprep.subr.mxu0 0.0
    %666 = vmatpush2.msra.mxu0 0.0
    %667 = vmatprep.subr.mxu0 0.0
    %668 = vmatpush2.msra.mxu0 0.0
    %669 = vmatprep.subr.mxu0 0.0
    %670 = vmatpush2.msra.mxu0 0.0
    %671 = vmatprep.subr.mxu0 0.0
    %672 = vmatpush2.msra.mxu0 0.0
    %673 = vmatprep.subr.mxu0 0.0
    %674 = vmatpush2.msra.mxu0 0.0
    %675 = vmatprep.subr.mxu0 0.0
    %676 = vmatpush2.msra.mxu0 0.0
    %677 = vmatprep.subr.mxu0 0.0
    %678 = vmatpush2.msra.mxu0 0.0
    %679 = vmatprep.subr.mxu0 0.0
    %680 = vmatpush2.msra.mxu0 0.0
    %681 = vmatprep.subr.mxu0 0.0
    %682 = vmatpush2.msra.mxu0 0.0
    %683 = vmatprep.subr.mxu0 0.0
    %684 = vmatpush2.msra.mxu0 0.0
    %685 = vmatprep.subr.mxu0 0.0
    %686 = vmatpush2.msra.mxu0 0.0
    %687 = vmatprep.subr.mxu0 0.0
    %688 = vmatpush2.msra.mxu0 0.0
    %689 = vmatprep.subr.mxu0 0.0
    %690 = vmatpush2.msra.mxu0 0.0
    %691 = vmatprep.subr.mxu0 0.0
    %692 = vmatpush2.msra.mxu0 0.0
    %693 = vmatprep.mubr.f32.mxu0 0.0
    %694 = vmatmul.mubr.f32.gmra.mxu0 %v627
    %v695 = vpop.f32.mrf.mxu0
    %v696 = vadd.f32 %v315, %v695
    %v697 = vpop.f32.mrf.mxu0
    %698 = vdwg.mxu0
    %700 = vrot.lane.b32.xlu0 %v490, 32
    %v701 = vpop.permute.xlu0 %700
    %v702 = vsel %vm183, %v701, 0
    %704 = vmatprep.subr.mxu0 0.0
    %705 = vmatpush1.msra.mxu0 0.0
    %706 = vmatprep.subr.mxu0 0.0
    %707 = vmatpush1.msra.mxu0 0.0
    %708 = vmatprep.subr.mxu0 0.0
    %709 = vmatpush1.msra.mxu0 0.0
    %710 = vmatprep.subr.mxu0 0.0
    %711 = vmatpush1.msra.mxu0 0.0
    %712 = vmatprep.subr.mxu0 0.0
    %713 = vmatpush1.msra.mxu0 0.0
    %714 = vmatprep.subr.mxu0 0.0
    %715 = vmatpush1.msra.mxu0 0.0
    %716 = vmatprep.subr.mxu0 0.0
    %717 = vmatpush1.msra.mxu0 0.0
    %718 = vmatprep.subr.mxu0 0.0
    %719 = vmatpush1.msra.mxu0 0.0
    %720 = vmatprep.subr.mxu0 0.0
    %721 = vmatpush1.msra.mxu0 0.0
    %722 = vmatprep.subr.mxu0 0.0
    %723 = vmatpush1.msra.mxu0 0.0
    %724 = vmatprep.subr.mxu0 0.0
    %725 = vmatpush1.msra.mxu0 0.0
    %726 = vmatprep.subr.mxu0 0.0
    %727 = vmatpush1.msra.mxu0 0.0
    %728 = vmatprep.subr.mxu0 0.0
    %729 = vmatpush1.msra.mxu0 %v90
    %730 = vmatprep.subr.mxu0 0.0
    %731 = vmatpush1.msra.mxu0 %v89
    %732 = vmatprep.subr.mxu0 0.0
    %733 = vmatpush1.msra.mxu0 %v88
    %734 = vmatprep.subr.mxu0 0.0
    %735 = vmatpush1.msra.mxu0 %v87
    %736 = vmatprep.subr.mxu0 0.0
    %737 = vmatpush2.msra.mxu0 0.0
    %738 = vmatprep.subr.mxu0 0.0
    %739 = vmatpush2.msra.mxu0 0.0
    %740 = vmatprep.subr.mxu0 0.0
    %741 = vmatpush2.msra.mxu0 0.0
    %742 = vmatprep.subr.mxu0 0.0
    %743 = vmatpush2.msra.mxu0 0.0
    %744 = vmatprep.subr.mxu0 0.0
    %745 = vmatpush2.msra.mxu0 0.0
    %746 = vmatprep.subr.mxu0 0.0
    %747 = vmatpush2.msra.mxu0 0.0
    %748 = vmatprep.subr.mxu0 0.0
    %749 = vmatpush2.msra.mxu0 0.0
    %750 = vmatprep.subr.mxu0 0.0
    %751 = vmatpush2.msra.mxu0 0.0
    %752 = vmatprep.subr.mxu0 0.0
    %753 = vmatpush2.msra.mxu0 0.0
    %754 = vmatprep.subr.mxu0 0.0
    %755 = vmatpush2.msra.mxu0 0.0
    %756 = vmatprep.subr.mxu0 0.0
    %757 = vmatpush2.msra.mxu0 0.0
    %758 = vmatprep.subr.mxu0 0.0
    %759 = vmatpush2.msra.mxu0 0.0
    %760 = vmatprep.subr.mxu0 0.0
    %761 = vmatpush2.msra.mxu0 0.0
    %762 = vmatprep.subr.mxu0 0.0
    %763 = vmatpush2.msra.mxu0 0.0
    %764 = vmatprep.subr.mxu0 0.0
    %765 = vmatpush2.msra.mxu0 0.0
    %766 = vmatprep.subr.mxu0 0.0
    %767 = vmatpush2.msra.mxu0 0.0
    %768 = vmatprep.mubr.f32.mxu0 0.0
    %769 = vmatmul.mubr.f32.gmra.mxu0 %v702
    %v770 = vpop.f32.mrf.mxu0
    %v771 = vadd.f32 0.0, %v770
    %v772 = vpop.f32.mrf.mxu0
    %773 = vdwg.mxu0
    %v774 = vadd.f32 %v696, %v771
    %v775 = vxor.u32 %v774, 2147483648
    %v776 = vmul.f32 %v775, 1.442695
    %v777 = vpow.pop %v776
    %v778 = vadd.f32 %v777, 1.0
    %v779 = vrcp.pop %v778
    %v780 = vmul.f32 1.0, %v779
    %v781 = vtanh.pop %v774
    %v782 = vmul.f32 %v780, %v484
    %784 = vrot.lane.b32.xlu0 %v781, 64
    %v785 = vpop.permute.xlu0 %784
    %v787 = vmul.f32 %v780, %v785
    %789 = vrot.lane.b32.xlu0 %v787, 32
    %v790 = vpop.permute.xlu0 %789
    %v792 = vadd.f32 %v782, %v790
    %v793 = vtanh.pop %v792
    %795 = vrot.lane.b32.xlu0 %v793, 64
    %v796 = vpop.permute.xlu0 %795
    %v798 = vmul.f32 %v780, %v796
    %799 = vmatprep.subr.mxu0 0.0
    %800 = vmatpush1.msra.mxu0 0.0
    %801 = vmatprep.subr.mxu0 0.0
    %802 = vmatpush1.msra.mxu0 0.0
    %803 = vmatprep.subr.mxu0 0.0
    %804 = vmatpush1.msra.mxu0 0.0
    %805 = vmatprep.subr.mxu0 0.0
    %806 = vmatpush1.msra.mxu0 0.0
    %807 = vmatprep.subr.mxu0 0.0
    %808 = vmatpush1.msra.mxu0 0.0
    %809 = vmatprep.subr.mxu0 0.0
    %810 = vmatpush1.msra.mxu0 0.0
    %811 = vmatprep.subr.mxu0 0.0
    %812 = vmatpush1.msra.mxu0 0.0
    %813 = vmatprep.subr.mxu0 0.0
    %814 = vmatpush1.msra.mxu0 0.0
    %815 = vmatprep.subr.mxu0 0.0
    %816 = vmatpush1.msra.mxu0 0.0
    %817 = vmatprep.subr.mxu0 0.0
    %818 = vmatpush1.msra.mxu0 0.0
    %819 = vmatprep.subr.mxu0 0.0
    %820 = vmatpush1.msra.mxu0 0.0
    %821 = vmatprep.subr.mxu0 0.0
    %822 = vmatpush1.msra.mxu0 0.0
    %823 = vmatprep.subr.mxu0 0.0
    %824 = vmatpush1.msra.mxu0 %v86
    %825 = vmatprep.subr.mxu0 0.0
    %826 = vmatpush1.msra.mxu0 %v85
    %827 = vmatprep.subr.mxu0 0.0
    %828 = vmatpush1.msra.mxu0 %v84
    %829 = vmatprep.subr.mxu0 0.0
    %830 = vmatpush1.msra.mxu0 %v83
    %831 = vmatprep.subr.mxu0 0.0
    %832 = vmatpush2.msra.mxu0 0.0
    %833 = vmatprep.subr.mxu0 0.0
    %834 = vmatpush2.msra.mxu0 0.0
    %835 = vmatprep.subr.mxu0 0.0
    %836 = vmatpush2.msra.mxu0 0.0
    %837 = vmatprep.subr.mxu0 0.0
    %838 = vmatpush2.msra.mxu0 0.0
    %839 = vmatprep.subr.mxu0 0.0
    %840 = vmatpush2.msra.mxu0 0.0
    %841 = vmatprep.subr.mxu0 0.0
    %842 = vmatpush2.msra.mxu0 0.0
    %843 = vmatprep.subr.mxu0 0.0
    %844 = vmatpush2.msra.mxu0 0.0
    %845 = vmatprep.subr.mxu0 0.0
    %846 = vmatpush2.msra.mxu0 0.0
    %847 = vmatprep.subr.mxu0 0.0
    %848 = vmatpush2.msra.mxu0 0.0
    %849 = vmatprep.subr.mxu0 0.0
    %850 = vmatpush2.msra.mxu0 0.0
    %851 = vmatprep.subr.mxu0 0.0
    %852 = vmatpush2.msra.mxu0 0.0
    %853 = vmatprep.subr.mxu0 0.0
    %854 = vmatpush2.msra.mxu0 0.0
    %855 = vmatprep.subr.mxu0 0.0
    %856 = vmatpush2.msra.mxu0 0.0
    %857 = vmatprep.subr.mxu0 0.0
    %858 = vmatpush2.msra.mxu0 0.0
    %859 = vmatprep.subr.mxu0 0.0
    %860 = vmatpush2.msra.mxu0 0.0
    %861 = vmatprep.subr.mxu0 0.0
    %862 = vmatpush2.msra.mxu0 0.0
    %863 = vmatprep.mubr.f32.mxu0 0.0
    %864 = vmatmul.mubr.f32.gmra.mxu0 %v627
    %v865 = vpop.f32.mrf.mxu0
    %v866 = vadd.f32 0.0, %v865
    %v867 = vpop.f32.mrf.mxu0
    %868 = vdwg.mxu0
    %v870 = vrot.slane %v866, 6
    %v871 = vrot.slane %v866, 7
    %v874 = vadd.f32 %v175, %v870
    %v875 = vadd.f32 %v180, %v871
    %v876 = vxor.u32 %v874, 2147483648
    %v877 = vxor.u32 %v875, 2147483648
    %v878 = vmul.f32 %v876, 1.442695
    %v879 = vpow.pop %v878
    %v880 = vmul.f32 %v877, 1.442695
    %v881 = vpow.pop %v880
    %v882 = vadd.f32 %v879, 1.0
    %v883 = vadd.f32 %v881, 1.0
    %v884 = vrcp.pop %v882
    %v885 = vmul.f32 1.0, %v884
    %v886 = vrcp.pop %v883
    %v887 = vmul.f32 1.0, %v886
    %v888 = vtanh.pop %v874
    %v889 = vtanh.pop %v875
    %v892 = vrot.slane %v607, 7
    %v893 = vrot.slane %v608, 7
    %v896 = vmul.f32 %v885, %v892
    %v897 = vmul.f32 %v887, %v893
    %900 = vrot.lane.b32.xlu0 %v888, 64
    %v901 = vpop.permute.xlu0 %900
    %902 = vrot.lane.b32.xlu0 %v889, 64
    %v903 = vpop.permute.xlu0 %902
    %v906 = vmul.f32 %v885, %v901
    %v907 = vmul.f32 %v887, %v903
    %910 = vrot.lane.b32.xlu0 %v906, 32
    %v911 = vpop.permute.xlu0 %910
    %912 = vrot.lane.b32.xlu0 %v907, 32
    %v913 = vpop.permute.xlu0 %912
    %v916 = vadd.f32 %v896, %v911
    %v917 = vadd.f32 %v897, %v913
    %v918 = vtanh.pop %v916
    %v919 = vtanh.pop %v917
    %922 = vrot.lane.b32.xlu0 %v918, 64
    %v923 = vpop.permute.xlu0 %922
    %924 = vrot.lane.b32.xlu0 %v919, 64
    %v925 = vpop.permute.xlu0 %924
    %v928 = vmul.f32 %v885, %v923
    %v929 = vmul.f32 %v887, %v925
    %v932 = vrot.slane %v928, 2
    %v933 = vrot.slane %v929, 1
    %v934 = vsel %vm320, %v933, %v932
    %935 = vrot.lane.b32.xlu0 %v934, 32
    %v936 = vpop.permute.xlu0 %935
    %v937 = vsel %vm183, %v936, 0
    %939 = vmatprep.subr.mxu0 0.0
    %940 = vmatpush1.msra.mxu0 0.0
    %941 = vmatprep.subr.mxu0 0.0
    %942 = vmatpush1.msra.mxu0 0.0
    %943 = vmatprep.subr.mxu0 0.0
    %944 = vmatpush1.msra.mxu0 0.0
    %945 = vmatprep.subr.mxu0 0.0
    %946 = vmatpush1.msra.mxu0 0.0
    %947 = vmatprep.subr.mxu0 0.0
    %948 = vmatpush1.msra.mxu0 0.0
    %949 = vmatprep.subr.mxu0 0.0
    %950 = vmatpush1.msra.mxu0 0.0
    %951 = vmatprep.subr.mxu0 0.0
    %952 = vmatpush1.msra.mxu0 0.0
    %953 = vmatprep.subr.mxu0 0.0
    %954 = vmatpush1.msra.mxu0 0.0
    %955 = vmatprep.subr.mxu0 0.0
    %956 = vmatpush1.msra.mxu0 0.0
    %957 = vmatprep.subr.mxu0 0.0
    %958 = vmatpush1.msra.mxu0 0.0
    %959 = vmatprep.subr.mxu0 0.0
    %960 = vmatpush1.msra.mxu0 0.0
    %961 = vmatprep.subr.mxu0 0.0
    %962 = vmatpush1.msra.mxu0 0.0
    %963 = vmatprep.subr.mxu0 0.0
    %964 = vmatpush1.msra.mxu0 %v82
    %965 = vmatprep.subr.mxu0 0.0
    %966 = vmatpush1.msra.mxu0 %v81
    %967 = vmatprep.subr.mxu0 0.0
    %968 = vmatpush1.msra.mxu0 %v80
    %969 = vmatprep.subr.mxu0 0.0
    %970 = vmatpush1.msra.mxu0 %v79
    %971 = vmatprep.subr.mxu0 0.0
    %972 = vmatpush2.msra.mxu0 0.0
    %973 = vmatprep.subr.mxu0 0.0
    %974 = vmatpush2.msra.mxu0 0.0
    %975 = vmatprep.subr.mxu0 0.0
    %976 = vmatpush2.msra.mxu0 0.0
    %977 = vmatprep.subr.mxu0 0.0
    %978 = vmatpush2.msra.mxu0 0.0
    %979 = vmatprep.subr.mxu0 0.0
    %980 = vmatpush2.msra.mxu0 0.0
    %981 = vmatprep.subr.mxu0 0.0
    %982 = vmatpush2.msra.mxu0 0.0
    %983 = vmatprep.subr.mxu0 0.0
    %984 = vmatpush2.msra.mxu0 0.0
    %985 = vmatprep.subr.mxu0 0.0
    %986 = vmatpush2.msra.mxu0 0.0
    %987 = vmatprep.subr.mxu0 0.0
    %988 = vmatpush2.msra.mxu0 0.0
    %989 = vmatprep.subr.mxu0 0.0
    %990 = vmatpush2.msra.mxu0 0.0
    %991 = vmatprep.subr.mxu0 0.0
    %992 = vmatpush2.msra.mxu0 0.0
    %993 = vmatprep.subr.mxu0 0.0
    %994 = vmatpush2.msra.mxu0 0.0
    %995 = vmatprep.subr.mxu0 0.0
    %996 = vmatpush2.msra.mxu0 0.0
    %997 = vmatprep.subr.mxu0 0.0
    %998 = vmatpush2.msra.mxu0 0.0
    %999 = vmatprep.subr.mxu0 0.0
    %1000 = vmatpush2.msra.mxu0 0.0
    %1001 = vmatprep.subr.mxu0 0.0
    %1002 = vmatpush2.msra.mxu0 0.0
    %1003 = vmatprep.mubr.f32.mxu0 0.0
    %1004 = vmatmul.mubr.f32.gmra.mxu0 %v937
    %v1005 = vpop.f32.mrf.mxu0
    %v1006 = vadd.f32 %v315, %v1005
    %v1007 = vpop.f32.mrf.mxu0
    %1008 = vdwg.mxu0
    %1010 = vrot.lane.b32.xlu0 %v798, 32
    %v1011 = vpop.permute.xlu0 %1010
    %v1012 = vsel %vm183, %v1011, 0
    %1014 = vmatprep.subr.mxu0 0.0
    %1015 = vmatpush1.msra.mxu0 0.0
    %1016 = vmatprep.subr.mxu0 0.0
    %1017 = vmatpush1.msra.mxu0 0.0
    %1018 = vmatprep.subr.mxu0 0.0
    %1019 = vmatpush1.msra.mxu0 0.0
    %1020 = vmatprep.subr.mxu0 0.0
    %1021 = vmatpush1.msra.mxu0 0.0
    %1022 = vmatprep.subr.mxu0 0.0
    %1023 = vmatpush1.msra.mxu0 0.0
    %1024 = vmatprep.subr.mxu0 0.0
    %1025 = vmatpush1.msra.mxu0 0.0
    %1026 = vmatprep.subr.mxu0 0.0
    %1027 = vmatpush1.msra.mxu0 0.0
    %1028 = vmatprep.subr.mxu0 0.0
    %1029 = vmatpush1.msra.mxu0 0.0
    %1030 = vmatprep.subr.mxu0 0.0
    %1031 = vmatpush1.msra.mxu0 0.0
    %1032 = vmatprep.subr.mxu0 0.0
    %1033 = vmatpush1.msra.mxu0 0.0
    %1034 = vmatprep.subr.mxu0 0.0
    %1035 = vmatpush1.msra.mxu0 0.0
    %1036 = vmatprep.subr.mxu0 0.0
    %1037 = vmatpush1.msra.mxu0 0.0
    %1038 = vmatprep.subr.mxu0 0.0
    %1039 = vmatpush1.msra.mxu0 %v90
    %1040 = vmatprep.subr.mxu0 0.0
    %1041 = vmatpush1.msra.mxu0 %v89
    %1042 = vmatprep.subr.mxu0 0.0
    %1043 = vmatpush1.msra.mxu0 %v88
    %1044 = vmatprep.subr.mxu0 0.0
    %1045 = vmatpush1.msra.mxu0 %v87
    %1046 = vmatprep.subr.mxu0 0.0
    %1047 = vmatpush2.msra.mxu0 0.0
    %1048 = vmatprep.subr.mxu0 0.0
    %1049 = vmatpush2.msra.mxu0 0.0
    %1050 = vmatprep.subr.mxu0 0.0
    %1051 = vmatpush2.msra.mxu0 0.0
    %1052 = vmatprep.subr.mxu0 0.0
    %1053 = vmatpush2.msra.mxu0 0.0
    %1054 = vmatprep.subr.mxu0 0.0
    %1055 = vmatpush2.msra.mxu0 0.0
    %1056 = vmatprep.subr.mxu0 0.0
    %1057 = vmatpush2.msra.mxu0 0.0
    %1058 = vmatprep.subr.mxu0 0.0
    %1059 = vmatpush2.msra.mxu0 0.0
    %1060 = vmatprep.subr.mxu0 0.0
    %1061 = vmatpush2.msra.mxu0 0.0
    %1062 = vmatprep.subr.mxu0 0.0
    %1063 = vmatpush2.msra.mxu0 0.0
    %1064 = vmatprep.subr.mxu0 0.0
    %1065 = vmatpush2.msra.mxu0 0.0
    %1066 = vmatprep.subr.mxu0 0.0
    %1067 = vmatpush2.msra.mxu0 0.0
    %1068 = vmatprep.subr.mxu0 0.0
    %1069 = vmatpush2.msra.mxu0 0.0
    %1070 = vmatprep.subr.mxu0 0.0
    %1071 = vmatpush2.msra.mxu0 0.0
    %1072 = vmatprep.subr.mxu0 0.0
    %1073 = vmatpush2.msra.mxu0 0.0
    %1074 = vmatprep.subr.mxu0 0.0
    %1075 = vmatpush2.msra.mxu0 0.0
    %1076 = vmatprep.subr.mxu0 0.0
    %1077 = vmatpush2.msra.mxu0 0.0
    %1078 = vmatprep.mubr.f32.mxu0 0.0
    %1079 = vmatmul.mubr.f32.gmra.mxu0 %v1012
    %v1080 = vpop.f32.mrf.mxu0
    %v1081 = vadd.f32 0.0, %v1080
    %v1082 = vpop.f32.mrf.mxu0
    %1083 = vdwg.mxu0
    %v1084 = vadd.f32 %v1006, %v1081
    %v1085 = vxor.u32 %v1084, 2147483648
    %v1086 = vmul.f32 %v1085, 1.442695
    %v1087 = vpow.pop %v1086
    %v1088 = vadd.f32 %v1087, 1.0
    %v1089 = vrcp.pop %v1088
    %v1090 = vmul.f32 1.0, %v1089
    %v1091 = vtanh.pop %v1084
    %v1092 = vmul.f32 %v1090, %v792
    %1094 = vrot.lane.b32.xlu0 %v1091, 64
    %v1095 = vpop.permute.xlu0 %1094
    %v1097 = vmul.f32 %v1090, %v1095
    %1099 = vrot.lane.b32.xlu0 %v1097, 32
    %v1100 = vpop.permute.xlu0 %1099
    %v1102 = vadd.f32 %v1092, %v1100
    %v1103 = vtanh.pop %v1102
    %1105 = vrot.lane.b32.xlu0 %v1103, 64
    %v1106 = vpop.permute.xlu0 %1105
    %v1108 = vmul.f32 %v1090, %v1106
    %1109 = vmatprep.subr.mxu0 0.0
    %1110 = vmatpush1.msra.mxu0 0.0
    %1111 = vmatprep.subr.mxu0 0.0
    %1112 = vmatpush1.msra.mxu0 0.0
    %1113 = vmatprep.subr.mxu0 0.0
    %1114 = vmatpush1.msra.mxu0 0.0
    %1115 = vmatprep.subr.mxu0 0.0
    %1116 = vmatpush1.msra.mxu0 0.0
    %1117 = vmatprep.subr.mxu0 0.0
    %1118 = vmatpush1.msra.mxu0 0.0
    %1119 = vmatprep.subr.mxu0 0.0
    %1120 = vmatpush1.msra.mxu0 0.0
    %1121 = vmatprep.subr.mxu0 0.0
    %1122 = vmatpush1.msra.mxu0 0.0
    %1123 = vmatprep.subr.mxu0 0.0
    %1124 = vmatpush1.msra.mxu0 0.0
    %1125 = vmatprep.subr.mxu0 0.0
    %1126 = vmatpush1.msra.mxu0 0.0
    %1127 = vmatprep.subr.mxu0 0.0
    %1128 = vmatpush1.msra.mxu0 0.0
    %1129 = vmatprep.subr.mxu0 0.0
    %1130 = vmatpush1.msra.mxu0 0.0
    %1131 = vmatprep.subr.mxu0 0.0
    %1132 = vmatpush1.msra.mxu0 0.0
    %1133 = vmatprep.subr.mxu0 0.0
    %1134 = vmatpush1.msra.mxu0 %v86
    %1135 = vmatprep.subr.mxu0 0.0
    %1136 = vmatpush1.msra.mxu0 %v85
    %1137 = vmatprep.subr.mxu0 0.0
    %1138 = vmatpush1.msra.mxu0 %v84
    %1139 = vmatprep.subr.mxu0 0.0
    %1140 = vmatpush1.msra.mxu0 %v83
    %1141 = vmatprep.subr.mxu0 0.0
    %1142 = vmatpush2.msra.mxu0 0.0
    %1143 = vmatprep.subr.mxu0 0.0
    %1144 = vmatpush2.msra.mxu0 0.0
    %1145 = vmatprep.subr.mxu0 0.0
    %1146 = vmatpush2.msra.mxu0 0.0
    %1147 = vmatprep.subr.mxu0 0.0
    %1148 = vmatpush2.msra.mxu0 0.0
    %1149 = vmatprep.subr.mxu0 0.0
    %1150 = vmatpush2.msra.mxu0 0.0
    %1151 = vmatprep.subr.mxu0 0.0
    %1152 = vmatpush2.msra.mxu0 0.0
    %1153 = vmatprep.subr.mxu0 0.0
    %1154 = vmatpush2.msra.mxu0 0.0
    %1155 = vmatprep.subr.mxu0 0.0
    %1156 = vmatpush2.msra.mxu0 0.0
    %1157 = vmatprep.subr.mxu0 0.0
    %1158 = vmatpush2.msra.mxu0 0.0
    %1159 = vmatprep.subr.mxu0 0.0
    %1160 = vmatpush2.msra.mxu0 0.0
    %1161 = vmatprep.subr.mxu0 0.0
    %1162 = vmatpush2.msra.mxu0 0.0
    %1163 = vmatprep.subr.mxu0 0.0
    %1164 = vmatpush2.msra.mxu0 0.0
    %1165 = vmatprep.subr.mxu0 0.0
    %1166 = vmatpush2.msra.mxu0 0.0
    %1167 = vmatprep.subr.mxu0 0.0
    %1168 = vmatpush2.msra.mxu0 0.0
    %1169 = vmatprep.subr.mxu0 0.0
    %1170 = vmatpush2.msra.mxu0 0.0
    %1171 = vmatprep.subr.mxu0 0.0
    %1172 = vmatpush2.msra.mxu0 0.0
    %1173 = vmatprep.mubr.f32.mxu0 0.0
    %1174 = vmatmul.mubr.f32.gmra.mxu0 %v937
    %v1175 = vpop.f32.mrf.mxu0
    %v1176 = vadd.f32 0.0, %v1175
    %v1177 = vpop.f32.mrf.mxu0
    %1178 = vdwg.mxu0
    %v1180 = vrot.slane %v1176, 5
    %v1181 = vrot.slane %v1176, 6
    %v1184 = vadd.f32 %v175, %v1180
    %v1185 = vadd.f32 %v180, %v1181
    %v1186 = vxor.u32 %v1184, 2147483648
    %v1187 = vxor.u32 %v1185, 2147483648
    %v1188 = vmul.f32 %v1186, 1.442695
    %v1189 = vpow.pop %v1188
    %v1190 = vmul.f32 %v1187, 1.442695
    %v1191 = vpow.pop %v1190
    %v1192 = vadd.f32 %v1189, 1.0
    %v1193 = vadd.f32 %v1191, 1.0
    %v1194 = vrcp.pop %v1192
    %v1195 = vmul.f32 1.0, %v1194
    %v1196 = vrcp.pop %v1193
    %v1197 = vmul.f32 1.0, %v1196
    %v1198 = vtanh.pop %v1184
    %v1199 = vtanh.pop %v1185
    %v1202 = vrot.slane %v916, 7
    %v1203 = vrot.slane %v917, 7
    %v1206 = vmul.f32 %v1195, %v1202
    %v1207 = vmul.f32 %v1197, %v1203
    %1210 = vrot.lane.b32.xlu0 %v1198, 64
    %v1211 = vpop.permute.xlu0 %1210
    %1212 = vrot.lane.b32.xlu0 %v1199, 64
    %v1213 = vpop.permute.xlu0 %1212
    %v1216 = vmul.f32 %v1195, %v1211
    %v1217 = vmul.f32 %v1197, %v1213
    %1220 = vrot.lane.b32.xlu0 %v1216, 32
    %v1221 = vpop.permute.xlu0 %1220
    %1222 = vrot.lane.b32.xlu0 %v1217, 32
    %v1223 = vpop.permute.xlu0 %1222
    %v1226 = vadd.f32 %v1206, %v1221
    %v1227 = vadd.f32 %v1207, %v1223
    %v1228 = vtanh.pop %v1226
    %v1229 = vtanh.pop %v1227
    %1232 = vrot.lane.b32.xlu0 %v1228, 64
    %v1233 = vpop.permute.xlu0 %1232
    %1234 = vrot.lane.b32.xlu0 %v1229, 64
    %v1235 = vpop.permute.xlu0 %1234
    %v1238 = vmul.f32 %v1195, %v1233
    %v1239 = vmul.f32 %v1197, %v1235
    %v1242 = vrot.slane %v1238, 3
    %v1243 = vrot.slane %v1239, 2
    %v1244 = vsel %vm320, %v1243, %v1242
    %1245 = vrot.lane.b32.xlu0 %v1244, 32
    %v1246 = vpop.permute.xlu0 %1245
    %v1247 = vsel %vm183, %v1246, 0
    %1249 = vmatprep.subr.mxu0 0.0
    %1250 = vmatpush1.msra.mxu0 0.0
    %1251 = vmatprep.subr.mxu0 0.0
    %1252 = vmatpush1.msra.mxu0 0.0
    %1253 = vmatprep.subr.mxu0 0.0
    %1254 = vmatpush1.msra.mxu0 0.0
    %1255 = vmatprep.subr.mxu0 0.0
    %1256 = vmatpush1.msra.mxu0 0.0
    %1257 = vmatprep.subr.mxu0 0.0
    %1258 = vmatpush1.msra.mxu0 0.0
    %1259 = vmatprep.subr.mxu0 0.0
    %1260 = vmatpush1.msra.mxu0 0.0
    %1261 = vmatprep.subr.mxu0 0.0
    %1262 = vmatpush1.msra.mxu0 0.0
    %1263 = vmatprep.subr.mxu0 0.0
    %1264 = vmatpush1.msra.mxu0 0.0
    %1265 = vmatprep.subr.mxu0 0.0
    %1266 = vmatpush1.msra.mxu0 0.0
    %1267 = vmatprep.subr.mxu0 0.0
    %1268 = vmatpush1.msra.mxu0 0.0
    %1269 = vmatprep.subr.mxu0 0.0
    %1270 = vmatpush1.msra.mxu0 0.0
    %1271 = vmatprep.subr.mxu0 0.0
    %1272 = vmatpush1.msra.mxu0 0.0
    %1273 = vmatprep.subr.mxu0 0.0
    %1274 = vmatpush1.msra.mxu0 %v82
    %1275 = vmatprep.subr.mxu0 0.0
    %1276 = vmatpush1.msra.mxu0 %v81
    %1277 = vmatprep.subr.mxu0 0.0
    %1278 = vmatpush1.msra.mxu0 %v80
    %1279 = vmatprep.subr.mxu0 0.0
    %1280 = vmatpush1.msra.mxu0 %v79
    %1281 = vmatprep.subr.mxu0 0.0
    %1282 = vmatpush2.msra.mxu0 0.0
    %1283 = vmatprep.subr.mxu0 0.0
    %1284 = vmatpush2.msra.mxu0 0.0
    %1285 = vmatprep.subr.mxu0 0.0
    %1286 = vmatpush2.msra.mxu0 0.0
    %1287 = vmatprep.subr.mxu0 0.0
    %1288 = vmatpush2.msra.mxu0 0.0
    %1289 = vmatprep.subr.mxu0 0.0
    %1290 = vmatpush2.msra.mxu0 0.0
    %1291 = vmatprep.subr.mxu0 0.0
    %1292 = vmatpush2.msra.mxu0 0.0
    %1293 = vmatprep.subr.mxu0 0.0
    %1294 = vmatpush2.msra.mxu0 0.0
    %1295 = vmatprep.subr.mxu0 0.0
    %1296 = vmatpush2.msra.mxu0 0.0
    %1297 = vmatprep.subr.mxu0 0.0
    %1298 = vmatpush2.msra.mxu0 0.0
    %1299 = vmatprep.subr.mxu0 0.0
    %1300 = vmatpush2.msra.mxu0 0.0
    %1301 = vmatprep.subr.mxu0 0.0
    %1302 = vmatpush2.msra.mxu0 0.0
    %1303 = vmatprep.subr.mxu0 0.0
    %1304 = vmatpush2.msra.mxu0 0.0
    %1305 = vmatprep.subr.mxu0 0.0
    %1306 = vmatpush2.msra.mxu0 0.0
    %1307 = vmatprep.subr.mxu0 0.0
    %1308 = vmatpush2.msra.mxu0 0.0
    %1309 = vmatprep.subr.mxu0 0.0
    %1310 = vmatpush2.msra.mxu0 0.0
    %1311 = vmatprep.subr.mxu0 0.0
    %1312 = vmatpush2.msra.mxu0 0.0
    %1313 = vmatprep.mubr.f32.mxu0 0.0
    %1314 = vmatmul.mubr.f32.gmra.mxu0 %v1247
    %v1315 = vpop.f32.mrf.mxu0
    %v1316 = vadd.f32 %v315, %v1315
    %v1317 = vpop.f32.mrf.mxu0
    %1318 = vdwg.mxu0
    %1320 = vrot.lane.b32.xlu0 %v1108, 32
    %v1321 = vpop.permute.xlu0 %1320
    %v1322 = vsel %vm183, %v1321, 0
    %1324 = vmatprep.subr.mxu0 0.0
    %1325 = vmatpush1.msra.mxu0 0.0
    %1326 = vmatprep.subr.mxu0 0.0
    %1327 = vmatpush1.msra.mxu0 0.0
    %1328 = vmatprep.subr.mxu0 0.0
    %1329 = vmatpush1.msra.mxu0 0.0
    %1330 = vmatprep.subr.mxu0 0.0
    %1331 = vmatpush1.msra.mxu0 0.0
    %1332 = vmatprep.subr.mxu0 0.0
    %1333 = vmatpush1.msra.mxu0 0.0
    %1334 = vmatprep.subr.mxu0 0.0
    %1335 = vmatpush1.msra.mxu0 0.0
    %1336 = vmatprep.subr.mxu0 0.0
    %1337 = vmatpush1.msra.mxu0 0.0
    %1338 = vmatprep.subr.mxu0 0.0
    %1339 = vmatpush1.msra.mxu0 0.0
    %1340 = vmatprep.subr.mxu0 0.0
    %1341 = vmatpush1.msra.mxu0 0.0
    %1342 = vmatprep.subr.mxu0 0.0
    %1343 = vmatpush1.msra.mxu0 0.0
    %1344 = vmatprep.subr.mxu0 0.0
    %1345 = vmatpush1.msra.mxu0 0.0
    %1346 = vmatprep.subr.mxu0 0.0
    %1347 = vmatpush1.msra.mxu0 0.0
    %1348 = vmatprep.subr.mxu0 0.0
    %1349 = vmatpush1.msra.mxu0 %v90
    %1350 = vmatprep.subr.mxu0 0.0
    %1351 = vmatpush1.msra.mxu0 %v89
    %1352 = vmatprep.subr.mxu0 0.0
    %1353 = vmatpush1.msra.mxu0 %v88
    %1354 = vmatprep.subr.mxu0 0.0
    %1355 = vmatpush1.msra.mxu0 %v87
    %1356 = vmatprep.subr.mxu0 0.0
    %1357 = vmatpush2.msra.mxu0 0.0
    %1358 = vmatprep.subr.mxu0 0.0
    %1359 = vmatpush2.msra.mxu0 0.0
    %1360 = vmatprep.subr.mxu0 0.0
    %1361 = vmatpush2.msra.mxu0 0.0
    %1362 = vmatprep.subr.mxu0 0.0
    %1363 = vmatpush2.msra.mxu0 0.0
    %1364 = vmatprep.subr.mxu0 0.0
    %1365 = vmatpush2.msra.mxu0 0.0
    %1366 = vmatprep.subr.mxu0 0.0
    %1367 = vmatpush2.msra.mxu0 0.0
    %1368 = vmatprep.subr.mxu0 0.0
    %1369 = vmatpush2.msra.mxu0 0.0
    %1370 = vmatprep.subr.mxu0 0.0
    %1371 = vmatpush2.msra.mxu0 0.0
    %1372 = vmatprep.subr.mxu0 0.0
    %1373 = vmatpush2.msra.mxu0 0.0
    %1374 = vmatprep.subr.mxu0 0.0
    %1375 = vmatpush2.msra.mxu0 0.0
    %1376 = vmatprep.subr.mxu0 0.0
    %1377 = vmatpush2.msra.mxu0 0.0
    %1378 = vmatprep.subr.mxu0 0.0
    %1379 = vmatpush2.msra.mxu0 0.0
    %1380 = vmatprep.subr.mxu0 0.0
    %1381 = vmatpush2.msra.mxu0 0.0
    %1382 = vmatprep.subr.mxu0 0.0
    %1383 = vmatpush2.msra.mxu0 0.0
    %1384 = vmatprep.subr.mxu0 0.0
    %1385 = vmatpush2.msra.mxu0 0.0
    %1386 = vmatprep.subr.mxu0 0.0
    %1387 = vmatpush2.msra.mxu0 0.0
    %1388 = vmatprep.mubr.f32.mxu0 0.0
    %1389 = vmatmul.mubr.f32.gmra.mxu0 %v1322
    %v1390 = vpop.f32.mrf.mxu0
    %v1391 = vadd.f32 0.0, %v1390
    %v1392 = vpop.f32.mrf.mxu0
    %1393 = vdwg.mxu0
    %v1394 = vadd.f32 %v1316, %v1391
    %v1395 = vxor.u32 %v1394, 2147483648
    %v1396 = vmul.f32 %v1395, 1.442695
    %v1397 = vpow.pop %v1396
    %v1398 = vadd.f32 %v1397, 1.0
    %v1399 = vrcp.pop %v1398
    %v1400 = vmul.f32 1.0, %v1399
    %v1401 = vtanh.pop %v1394
    %v1402 = vmul.f32 %v1400, %v1102
    %1404 = vrot.lane.b32.xlu0 %v1401, 64
    %v1405 = vpop.permute.xlu0 %1404
    %v1407 = vmul.f32 %v1400, %v1405
    %1409 = vrot.lane.b32.xlu0 %v1407, 32
    %v1410 = vpop.permute.xlu0 %1409
    %v1412 = vadd.f32 %v1402, %v1410
    %v1413 = vtanh.pop %v1412
    %1415 = vrot.lane.b32.xlu0 %v1413, 64
    %v1416 = vpop.permute.xlu0 %1415
    %v1418 = vmul.f32 %v1400, %v1416
    %1419 = vmatprep.subr.mxu0 0.0
    %1420 = vmatpush1.msra.mxu0 0.0
    %1421 = vmatprep.subr.mxu0 0.0
    %1422 = vmatpush1.msra.mxu0 0.0
    %1423 = vmatprep.subr.mxu0 0.0
    %1424 = vmatpush1.msra.mxu0 0.0
    %1425 = vmatprep.subr.mxu0 0.0
    %1426 = vmatpush1.msra.mxu0 0.0
    %1427 = vmatprep.subr.mxu0 0.0
    %1428 = vmatpush1.msra.mxu0 0.0
    %1429 = vmatprep.subr.mxu0 0.0
    %1430 = vmatpush1.msra.mxu0 0.0
    %1431 = vmatprep.subr.mxu0 0.0
    %1432 = vmatpush1.msra.mxu0 0.0
    %1433 = vmatprep.subr.mxu0 0.0
    %1434 = vmatpush1.msra.mxu0 0.0
    %1435 = vmatprep.subr.mxu0 0.0
    %1436 = vmatpush1.msra.mxu0 0.0
    %1437 = vmatprep.subr.mxu0 0.0
    %1438 = vmatpush1.msra.mxu0 0.0
    %1439 = vmatprep.subr.mxu0 0.0
    %1440 = vmatpush1.msra.mxu0 0.0
    %1441 = vmatprep.subr.mxu0 0.0
    %1442 = vmatpush1.msra.mxu0 0.0
    %1443 = vmatprep.subr.mxu0 0.0
    %1444 = vmatpush1.msra.mxu0 %v86
    %1445 = vmatprep.subr.mxu0 0.0
    %1446 = vmatpush1.msra.mxu0 %v85
    %1447 = vmatprep.subr.mxu0 0.0
    %1448 = vmatpush1.msra.mxu0 %v84
    %1449 = vmatprep.subr.mxu0 0.0
    %1450 = vmatpush1.msra.mxu0 %v83
    %1451 = vmatprep.subr.mxu0 0.0
    %1452 = vmatpush2.msra.mxu0 0.0
    %1453 = vmatprep.subr.mxu0 0.0
    %1454 = vmatpush2.msra.mxu0 0.0
    %1455 = vmatprep.subr.mxu0 0.0
    %1456 = vmatpush2.msra.mxu0 0.0
    %1457 = vmatprep.subr.mxu0 0.0
    %1458 = vmatpush2.msra.mxu0 0.0
    %1459 = vmatprep.subr.mxu0 0.0
    %1460 = vmatpush2.msra.mxu0 0.0
    %1461 = vmatprep.subr.mxu0 0.0
    %1462 = vmatpush2.msra.mxu0 0.0
    %1463 = vmatprep.subr.mxu0 0.0
    %1464 = vmatpush2.msra.mxu0 0.0
    %1465 = vmatprep.subr.mxu0 0.0
    %1466 = vmatpush2.msra.mxu0 0.0
    %1467 = vmatprep.subr.mxu0 0.0
    %1468 = vmatpush2.msra.mxu0 0.0
    %1469 = vmatprep.subr.mxu0 0.0
    %1470 = vmatpush2.msra.mxu0 0.0
    %1471 = vmatprep.subr.mxu0 0.0
    %1472 = vmatpush2.msra.mxu0 0.0
    %1473 = vmatprep.subr.mxu0 0.0
    %1474 = vmatpush2.msra.mxu0 0.0
    %1475 = vmatprep.subr.mxu0 0.0
    %1476 = vmatpush2.msra.mxu0 0.0
    %1477 = vmatprep.subr.mxu0 0.0
    %1478 = vmatpush2.msra.mxu0 0.0
    %1479 = vmatprep.subr.mxu0 0.0
    %1480 = vmatpush2.msra.mxu0 0.0
    %1481 = vmatprep.subr.mxu0 0.0
    %1482 = vmatpush2.msra.mxu0 0.0
    %1483 = vmatprep.mubr.f32.mxu0 0.0
    %1484 = vmatmul.mubr.f32.gmra.mxu0 %v1247
    %v1485 = vpop.f32.mrf.mxu0
    %v1486 = vadd.f32 0.0, %v1485
    %v1487 = vpop.f32.mrf.mxu0
    %1488 = vdwg.mxu0
    %v1490 = vrot.slane %v1486, 4
    %v1491 = vrot.slane %v1486, 5
    %v1494 = vadd.f32 %v175, %v1490
    %v1495 = vadd.f32 %v180, %v1491
    %v1496 = vxor.u32 %v1494, 2147483648
    %v1497 = vxor.u32 %v1495, 2147483648
    %v1498 = vmul.f32 %v1496, 1.442695
    %v1499 = vpow.pop %v1498
    %v1500 = vmul.f32 %v1497, 1.442695
    %v1501 = vpow.pop %v1500
    %v1502 = vadd.f32 %v1499, 1.0
    %v1503 = vadd.f32 %v1501, 1.0
    %v1504 = vrcp.pop %v1502
    %v1505 = vmul.f32 1.0, %v1504
    %v1506 = vrcp.pop %v1503
    %v1507 = vmul.f32 1.0, %v1506
    %v1508 = vtanh.pop %v1494
    %v1509 = vtanh.pop %v1495
    %v1512 = vrot.slane %v1226, 7
    %v1513 = vrot.slane %v1227, 7
    %v1516 = vmul.f32 %v1505, %v1512
    %v1517 = vmul.f32 %v1507, %v1513
    %1520 = vrot.lane.b32.xlu0 %v1508, 64
    %v1521 = vpop.permute.xlu0 %1520
    %1522 = vrot.lane.b32.xlu0 %v1509, 64
    %v1523 = vpop.permute.xlu0 %1522
    %v1526 = vmul.f32 %v1505, %v1521
    %v1527 = vmul.f32 %v1507, %v1523
    %1530 = vrot.lane.b32.xlu0 %v1526, 32
    %v1531 = vpop.permute.xlu0 %1530
    %1532 = vrot.lane.b32.xlu0 %v1527, 32
    %v1533 = vpop.permute.xlu0 %1532
    %v1536 = vadd.f32 %v1516, %v1531
    %v1537 = vadd.f32 %v1517, %v1533
    %v1538 = vtanh.pop %v1536
    %v1539 = vtanh.pop %v1537
    %1542 = vrot.lane.b32.xlu0 %v1538, 64
    %v1543 = vpop.permute.xlu0 %1542
    %1544 = vrot.lane.b32.xlu0 %v1539, 64
    %v1545 = vpop.permute.xlu0 %1544
    %v1548 = vmul.f32 %v1505, %v1543
    %v1549 = vmul.f32 %v1507, %v1545
    %v1552 = vrot.slane %v1548, 4
    %v1553 = vrot.slane %v1549, 3
    %v1554 = vsel %vm320, %v1553, %v1552
    %1555 = vrot.lane.b32.xlu0 %v1554, 32
    %v1556 = vpop.permute.xlu0 %1555
    %v1557 = vsel %vm183, %v1556, 0
    %1559 = vmatprep.subr.mxu0 0.0
    %1560 = vmatpush1.msra.mxu0 0.0
    %1561 = vmatprep.subr.mxu0 0.0
    %1562 = vmatpush1.msra.mxu0 0.0
    %1563 = vmatprep.subr.mxu0 0.0
    %1564 = vmatpush1.msra.mxu0 0.0
    %1565 = vmatprep.subr.mxu0 0.0
    %1566 = vmatpush1.msra.mxu0 0.0
    %1567 = vmatprep.subr.mxu0 0.0
    %1568 = vmatpush1.msra.mxu0 0.0
    %1569 = vmatprep.subr.mxu0 0.0
    %1570 = vmatpush1.msra.mxu0 0.0
    %1571 = vmatprep.subr.mxu0 0.0
    %1572 = vmatpush1.msra.mxu0 0.0
    %1573 = vmatprep.subr.mxu0 0.0
    %1574 = vmatpush1.msra.mxu0 0.0
    %1575 = vmatprep.subr.mxu0 0.0
    %1576 = vmatpush1.msra.mxu0 0.0
    %1577 = vmatprep.subr.mxu0 0.0
    %1578 = vmatpush1.msra.mxu0 0.0
    %1579 = vmatprep.subr.mxu0 0.0
    %1580 = vmatpush1.msra.mxu0 0.0
    %1581 = vmatprep.subr.mxu0 0.0
    %1582 = vmatpush1.msra.mxu0 0.0
    %1583 = vmatprep.subr.mxu0 0.0
    %1584 = vmatpush1.msra.mxu0 %v82
    %1585 = vmatprep.subr.mxu0 0.0
    %1586 = vmatpush1.msra.mxu0 %v81
    %1587 = vmatprep.subr.mxu0 0.0
    %1588 = vmatpush1.msra.mxu0 %v80
    %1589 = vmatprep.subr.mxu0 0.0
    %1590 = vmatpush1.msra.mxu0 %v79
    %1591 = vmatprep.subr.mxu0 0.0
    %1592 = vmatpush2.msra.mxu0 0.0
    %1593 = vmatprep.subr.mxu0 0.0
    %1594 = vmatpush2.msra.mxu0 0.0
    %1595 = vmatprep.subr.mxu0 0.0
    %1596 = vmatpush2.msra.mxu0 0.0
    %1597 = vmatprep.subr.mxu0 0.0
    %1598 = vmatpush2.msra.mxu0 0.0
    %1599 = vmatprep.subr.mxu0 0.0
    %1600 = vmatpush2.msra.mxu0 0.0
    %1601 = vmatprep.subr.mxu0 0.0
    %1602 = vmatpush2.msra.mxu0 0.0
    %1603 = vmatprep.subr.mxu0 0.0
    %1604 = vmatpush2.msra.mxu0 0.0
    %1605 = vmatprep.subr.mxu0 0.0
    %1606 = vmatpush2.msra.mxu0 0.0
    %1607 = vmatprep.subr.mxu0 0.0
    %1608 = vmatpush2.msra.mxu0 0.0
    %1609 = vmatprep.subr.mxu0 0.0
    %1610 = vmatpush2.msra.mxu0 0.0
    %1611 = vmatprep.subr.mxu0 0.0
    %1612 = vmatpush2.msra.mxu0 0.0
    %1613 = vmatprep.subr.mxu0 0.0
    %1614 = vmatpush2.msra.mxu0 0.0
    %1615 = vmatprep.subr.mxu0 0.0
    %1616 = vmatpush2.msra.mxu0 0.0
    %1617 = vmatprep.subr.mxu0 0.0
    %1618 = vmatpush2.msra.mxu0 0.0
    %1619 = vmatprep.subr.mxu0 0.0
    %1620 = vmatpush2.msra.mxu0 0.0
    %1621 = vmatprep.subr.mxu0 0.0
    %1622 = vmatpush2.msra.mxu0 0.0
    %1623 = vmatprep.mubr.f32.mxu0 0.0
    %1624 = vmatmul.mubr.f32.gmra.mxu0 %v1557
    %v1625 = vpop.f32.mrf.mxu0
    %v1626 = vadd.f32 %v315, %v1625
    %v1627 = vpop.f32.mrf.mxu0
    %1628 = vdwg.mxu0
    %1630 = vrot.lane.b32.xlu0 %v1418, 32
    %v1631 = vpop.permute.xlu0 %1630
    %v1632 = vsel %vm183, %v1631, 0
    %1634 = vmatprep.subr.mxu0 0.0
    %1635 = vmatpush1.msra.mxu0 0.0
    %1636 = vmatprep.subr.mxu0 0.0
    %1637 = vmatpush1.msra.mxu0 0.0
    %1638 = vmatprep.subr.mxu0 0.0
    %1639 = vmatpush1.msra.mxu0 0.0
    %1640 = vmatprep.subr.mxu0 0.0
    %1641 = vmatpush1.msra.mxu0 0.0
    %1642 = vmatprep.subr.mxu0 0.0
    %1643 = vmatpush1.msra.mxu0 0.0
    %1644 = vmatprep.subr.mxu0 0.0
    %1645 = vmatpush1.msra.mxu0 0.0
    %1646 = vmatprep.subr.mxu0 0.0
    %1647 = vmatpush1.msra.mxu0 0.0
    %1648 = vmatprep.subr.mxu0 0.0
    %1649 = vmatpush1.msra.mxu0 0.0
    %1650 = vmatprep.subr.mxu0 0.0
    %1651 = vmatpush1.msra.mxu0 0.0
    %1652 = vmatprep.subr.mxu0 0.0
    %1653 = vmatpush1.msra.mxu0 0.0
    %1654 = vmatprep.subr.mxu0 0.0
    %1655 = vmatpush1.msra.mxu0 0.0
    %1656 = vmatprep.subr.mxu0 0.0
    %1657 = vmatpush1.msra.mxu0 0.0
    %1658 = vmatprep.subr.mxu0 0.0
    %1659 = vmatpush1.msra.mxu0 %v90
    %1660 = vmatprep.subr.mxu0 0.0
    %1661 = vmatpush1.msra.mxu0 %v89
    %1662 = vmatprep.subr.mxu0 0.0
    %1663 = vmatpush1.msra.mxu0 %v88
    %1664 = vmatprep.subr.mxu0 0.0
    %1665 = vmatpush1.msra.mxu0 %v87
    %1666 = vmatprep.subr.mxu0 0.0
    %1667 = vmatpush2.msra.mxu0 0.0
    %1668 = vmatprep.subr.mxu0 0.0
    %1669 = vmatpush2.msra.mxu0 0.0
    %1670 = vmatprep.subr.mxu0 0.0
    %1671 = vmatpush2.msra.mxu0 0.0
    %1672 = vmatprep.subr.mxu0 0.0
    %1673 = vmatpush2.msra.mxu0 0.0
    %1674 = vmatprep.subr.mxu0 0.0
    %1675 = vmatpush2.msra.mxu0 0.0
    %1676 = vmatprep.subr.mxu0 0.0
    %1677 = vmatpush2.msra.mxu0 0.0
    %1678 = vmatprep.subr.mxu0 0.0
    %1679 = vmatpush2.msra.mxu0 0.0
    %1680 = vmatprep.subr.mxu0 0.0
    %1681 = vmatpush2.msra.mxu0 0.0
    %1682 = vmatprep.subr.mxu0 0.0
    %1683 = vmatpush2.msra.mxu0 0.0
    %1684 = vmatprep.subr.mxu0 0.0
    %1685 = vmatpush2.msra.mxu0 0.0
    %1686 = vmatprep.subr.mxu0 0.0
    %1687 = vmatpush2.msra.mxu0 0.0
    %1688 = vmatprep.subr.mxu0 0.0
    %1689 = vmatpush2.msra.mxu0 0.0
    %1690 = vmatprep.subr.mxu0 0.0
    %1691 = vmatpush2.msra.mxu0 0.0
    %1692 = vmatprep.subr.mxu0 0.0
    %1693 = vmatpush2.msra.mxu0 0.0
    %1694 = vmatprep.subr.mxu0 0.0
    %1695 = vmatpush2.msra.mxu0 0.0
    %1696 = vmatprep.subr.mxu0 0.0
    %1697 = vmatpush2.msra.mxu0 0.0
    %1698 = vmatprep.mubr.f32.mxu0 0.0
    %1699 = vmatmul.mubr.f32.gmra.mxu0 %v1632
    %v1700 = vpop.f32.mrf.mxu0
    %v1701 = vadd.f32 0.0, %v1700
    %v1702 = vpop.f32.mrf.mxu0
    %1703 = vdwg.mxu0
    %v1704 = vadd.f32 %v1626, %v1701
    %v1705 = vxor.u32 %v1704, 2147483648
    %v1706 = vmul.f32 %v1705, 1.442695
    %v1707 = vpow.pop %v1706
    %v1708 = vadd.f32 %v1707, 1.0
    %v1709 = vrcp.pop %v1708
    %v1710 = vmul.f32 1.0, %v1709
    %v1711 = vtanh.pop %v1704
    %v1712 = vmul.f32 %v1710, %v1412
    %1714 = vrot.lane.b32.xlu0 %v1711, 64
    %v1715 = vpop.permute.xlu0 %1714
    %v1717 = vmul.f32 %v1710, %v1715
    %1719 = vrot.lane.b32.xlu0 %v1717, 32
    %v1720 = vpop.permute.xlu0 %1719
    %v1722 = vadd.f32 %v1712, %v1720
    %v1723 = vtanh.pop %v1722
    %1725 = vrot.lane.b32.xlu0 %v1723, 64
    %v1726 = vpop.permute.xlu0 %1725
    %v1728 = vmul.f32 %v1710, %v1726
    %1729 = vmatprep.subr.mxu0 0.0
    %1730 = vmatpush1.msra.mxu0 0.0
    %1731 = vmatprep.subr.mxu0 0.0
    %1732 = vmatpush1.msra.mxu0 0.0
    %1733 = vmatprep.subr.mxu0 0.0
    %1734 = vmatpush1.msra.mxu0 0.0
    %1735 = vmatprep.subr.mxu0 0.0
    %1736 = vmatpush1.msra.mxu0 0.0
    %1737 = vmatprep.subr.mxu0 0.0
    %1738 = vmatpush1.msra.mxu0 0.0
    %1739 = vmatprep.subr.mxu0 0.0
    %1740 = vmatpush1.msra.mxu0 0.0
    %1741 = vmatprep.subr.mxu0 0.0
    %1742 = vmatpush1.msra.mxu0 0.0
    %1743 = vmatprep.subr.mxu0 0.0
    %1744 = vmatpush1.msra.mxu0 0.0
    %1745 = vmatprep.subr.mxu0 0.0
    %1746 = vmatpush1.msra.mxu0 0.0
    %1747 = vmatprep.subr.mxu0 0.0
    %1748 = vmatpush1.msra.mxu0 0.0
    %1749 = vmatprep.subr.mxu0 0.0
    %1750 = vmatpush1.msra.mxu0 0.0
    %1751 = vmatprep.subr.mxu0 0.0
    %1752 = vmatpush1.msra.mxu0 0.0
    %1753 = vmatprep.subr.mxu0 0.0
    %1754 = vmatpush1.msra.mxu0 %v86
    %1755 = vmatprep.subr.mxu0 0.0
    %1756 = vmatpush1.msra.mxu0 %v85
    %1757 = vmatprep.subr.mxu0 0.0
    %1758 = vmatpush1.msra.mxu0 %v84
    %1759 = vmatprep.subr.mxu0 0.0
    %1760 = vmatpush1.msra.mxu0 %v83
    %1761 = vmatprep.subr.mxu0 0.0
    %1762 = vmatpush2.msra.mxu0 0.0
    %1763 = vmatprep.subr.mxu0 0.0
    %1764 = vmatpush2.msra.mxu0 0.0
    %1765 = vmatprep.subr.mxu0 0.0
    %1766 = vmatpush2.msra.mxu0 0.0
    %1767 = vmatprep.subr.mxu0 0.0
    %1768 = vmatpush2.msra.mxu0 0.0
    %1769 = vmatprep.subr.mxu0 0.0
    %1770 = vmatpush2.msra.mxu0 0.0
    %1771 = vmatprep.subr.mxu0 0.0
    %1772 = vmatpush2.msra.mxu0 0.0
    %1773 = vmatprep.subr.mxu0 0.0
    %1774 = vmatpush2.msra.mxu0 0.0
    %1775 = vmatprep.subr.mxu0 0.0
    %1776 = vmatpush2.msra.mxu0 0.0
    %1777 = vmatprep.subr.mxu0 0.0
    %1778 = vmatpush2.msra.mxu0 0.0
    %1779 = vmatprep.subr.mxu0 0.0
    %1780 = vmatpush2.msra.mxu0 0.0
    %1781 = vmatprep.subr.mxu0 0.0
    %1782 = vmatpush2.msra.mxu0 0.0
    %1783 = vmatprep.subr.mxu0 0.0
    %1784 = vmatpush2.msra.mxu0 0.0
    %1785 = vmatprep.subr.mxu0 0.0
    %1786 = vmatpush2.msra.mxu0 0.0
    %1787 = vmatprep.subr.mxu0 0.0
    %1788 = vmatpush2.msra.mxu0 0.0
    %1789 = vmatprep.subr.mxu0 0.0
    %1790 = vmatpush2.msra.mxu0 0.0
    %1791 = vmatprep.subr.mxu0 0.0
    %1792 = vmatpush2.msra.mxu0 0.0
    %1793 = vmatprep.mubr.f32.mxu0 0.0
    %1794 = vmatmul.mubr.f32.gmra.mxu0 %v1557
    %v1795 = vpop.f32.mrf.mxu0
    %v1796 = vadd.f32 0.0, %v1795
    %v1797 = vpop.f32.mrf.mxu0
    %1798 = vdwg.mxu0
    %v1800 = vrot.slane %v1796, 3
    %v1801 = vrot.slane %v1796, 4
    %v1804 = vadd.f32 %v175, %v1800
    %v1805 = vadd.f32 %v180, %v1801
    %v1806 = vxor.u32 %v1804, 2147483648
    %v1807 = vxor.u32 %v1805, 2147483648
    %v1808 = vmul.f32 %v1806, 1.442695
    %v1809 = vpow.pop %v1808
    %v1810 = vmul.f32 %v1807, 1.442695
    %v1811 = vpow.pop %v1810
    %v1812 = vadd.f32 %v1809, 1.0
    %v1813 = vadd.f32 %v1811, 1.0
    %v1814 = vrcp.pop %v1812
    %v1815 = vmul.f32 1.0, %v1814
    %v1816 = vrcp.pop %v1813
    %v1817 = vmul.f32 1.0, %v1816
    %v1818 = vtanh.pop %v1804
    %v1819 = vtanh.pop %v1805
    %v1822 = vrot.slane %v1536, 7
    %v1823 = vrot.slane %v1537, 7
    %v1826 = vmul.f32 %v1815, %v1822
    %v1827 = vmul.f32 %v1817, %v1823
    %1830 = vrot.lane.b32.xlu0 %v1818, 64
    %v1831 = vpop.permute.xlu0 %1830
    %1832 = vrot.lane.b32.xlu0 %v1819, 64
    %v1833 = vpop.permute.xlu0 %1832
    %v1836 = vmul.f32 %v1815, %v1831
    %v1837 = vmul.f32 %v1817, %v1833
    %1840 = vrot.lane.b32.xlu0 %v1836, 32
    %v1841 = vpop.permute.xlu0 %1840
    %1842 = vrot.lane.b32.xlu0 %v1837, 32
    %v1843 = vpop.permute.xlu0 %1842
    %v1846 = vadd.f32 %v1826, %v1841
    %v1847 = vadd.f32 %v1827, %v1843
    %v1848 = vtanh.pop %v1846
    %v1849 = vtanh.pop %v1847
    %1852 = vrot.lane.b32.xlu0 %v1848, 64
    %v1853 = vpop.permute.xlu0 %1852
    %1854 = vrot.lane.b32.xlu0 %v1849, 64
    %v1855 = vpop.permute.xlu0 %1854
    %v1858 = vmul.f32 %v1815, %v1853
    %v1859 = vmul.f32 %v1817, %v1855
    %v1862 = vrot.slane %v1858, 5
    %v1863 = vrot.slane %v1859, 4
    %v1864 = vsel %vm320, %v1863, %v1862
    %1865 = vrot.lane.b32.xlu0 %v1864, 32
    %v1866 = vpop.permute.xlu0 %1865
    %v1867 = vsel %vm183, %v1866, 0
    %1869 = vmatprep.subr.mxu0 0.0
    %1870 = vmatpush1.msra.mxu0 0.0
    %1871 = vmatprep.subr.mxu0 0.0
    %1872 = vmatpush1.msra.mxu0 0.0
    %1873 = vmatprep.subr.mxu0 0.0
    %1874 = vmatpush1.msra.mxu0 0.0
    %1875 = vmatprep.subr.mxu0 0.0
    %1876 = vmatpush1.msra.mxu0 0.0
    %1877 = vmatprep.subr.mxu0 0.0
    %1878 = vmatpush1.msra.mxu0 0.0
    %1879 = vmatprep.subr.mxu0 0.0
    %1880 = vmatpush1.msra.mxu0 0.0
    %1881 = vmatprep.subr.mxu0 0.0
    %1882 = vmatpush1.msra.mxu0 0.0
    %1883 = vmatprep.subr.mxu0 0.0
    %1884 = vmatpush1.msra.mxu0 0.0
    %1885 = vmatprep.subr.mxu0 0.0
    %1886 = vmatpush1.msra.mxu0 0.0
    %1887 = vmatprep.subr.mxu0 0.0
    %1888 = vmatpush1.msra.mxu0 0.0
    %1889 = vmatprep.subr.mxu0 0.0
    %1890 = vmatpush1.msra.mxu0 0.0
    %1891 = vmatprep.subr.mxu0 0.0
    %1892 = vmatpush1.msra.mxu0 0.0
    %1893 = vmatprep.subr.mxu0 0.0
    %1894 = vmatpush1.msra.mxu0 %v82
    %1895 = vmatprep.subr.mxu0 0.0
    %1896 = vmatpush1.msra.mxu0 %v81
    %1897 = vmatprep.subr.mxu0 0.0
    %1898 = vmatpush1.msra.mxu0 %v80
    %1899 = vmatprep.subr.mxu0 0.0
    %1900 = vmatpush1.msra.mxu0 %v79
    %1901 = vmatprep.subr.mxu0 0.0
    %1902 = vmatpush2.msra.mxu0 0.0
    %1903 = vmatprep.subr.mxu0 0.0
    %1904 = vmatpush2.msra.mxu0 0.0
    %1905 = vmatprep.subr.mxu0 0.0
    %1906 = vmatpush2.msra.mxu0 0.0
    %1907 = vmatprep.subr.mxu0 0.0
    %1908 = vmatpush2.msra.mxu0 0.0
    %1909 = vmatprep.subr.mxu0 0.0
    %1910 = vmatpush2.msra.mxu0 0.0
    %1911 = vmatprep.subr.mxu0 0.0
    %1912 = vmatpush2.msra.mxu0 0.0
    %1913 = vmatprep.subr.mxu0 0.0
    %1914 = vmatpush2.msra.mxu0 0.0
    %1915 = vmatprep.subr.mxu0 0.0
    %1916 = vmatpush2.msra.mxu0 0.0
    %1917 = vmatprep.subr.mxu0 0.0
    %1918 = vmatpush2.msra.mxu0 0.0
    %1919 = vmatprep.subr.mxu0 0.0
    %1920 = vmatpush2.msra.mxu0 0.0
    %1921 = vmatprep.subr.mxu0 0.0
    %1922 = vmatpush2.msra.mxu0 0.0
    %1923 = vmatprep.subr.mxu0 0.0
    %1924 = vmatpush2.msra.mxu0 0.0
    %1925 = vmatprep.subr.mxu0 0.0
    %1926 = vmatpush2.msra.mxu0 0.0
    %1927 = vmatprep.subr.mxu0 0.0
    %1928 = vmatpush2.msra.mxu0 0.0
    %1929 = vmatprep.subr.mxu0 0.0
    %1930 = vmatpush2.msra.mxu0 0.0
    %1931 = vmatprep.subr.mxu0 0.0
    %1932 = vmatpush2.msra.mxu0 0.0
    %1933 = vmatprep.mubr.f32.mxu0 0.0
    %1934 = vmatmul.mubr.f32.gmra.mxu0 %v1867
    %v1935 = vpop.f32.mrf.mxu0
    %v1936 = vadd.f32 %v315, %v1935
    %v1937 = vpop.f32.mrf.mxu0
    %1938 = vdwg.mxu0
    %1940 = vrot.lane.b32.xlu0 %v1728, 32
    %v1941 = vpop.permute.xlu0 %1940
    %v1942 = vsel %vm183, %v1941, 0
    %1944 = vmatprep.subr.mxu0 0.0
    %1945 = vmatpush1.msra.mxu0 0.0
    %1946 = vmatprep.subr.mxu0 0.0
    %1947 = vmatpush1.msra.mxu0 0.0
    %1948 = vmatprep.subr.mxu0 0.0
    %1949 = vmatpush1.msra.mxu0 0.0
    %1950 = vmatprep.subr.mxu0 0.0
    %1951 = vmatpush1.msra.mxu0 0.0
    %1952 = vmatprep.subr.mxu0 0.0
    %1953 = vmatpush1.msra.mxu0 0.0
    %1954 = vmatprep.subr.mxu0 0.0
    %1955 = vmatpush1.msra.mxu0 0.0
    %1956 = vmatprep.subr.mxu0 0.0
    %1957 = vmatpush1.msra.mxu0 0.0
    %1958 = vmatprep.subr.mxu0 0.0
    %1959 = vmatpush1.msra.mxu0 0.0
    %1960 = vmatprep.subr.mxu0 0.0
    %1961 = vmatpush1.msra.mxu0 0.0
    %1962 = vmatprep.subr.mxu0 0.0
    %1963 = vmatpush1.msra.mxu0 0.0
    %1964 = vmatprep.subr.mxu0 0.0
    %1965 = vmatpush1.msra.mxu0 0.0
    %1966 = vmatprep.subr.mxu0 0.0
    %1967 = vmatpush1.msra.mxu0 0.0
    %1968 = vmatprep.subr.mxu0 0.0
    %1969 = vmatpush1.msra.mxu0 %v90
    %1970 = vmatprep.subr.mxu0 0.0
    %1971 = vmatpush1.msra.mxu0 %v89
    %1972 = vmatprep.subr.mxu0 0.0
    %1973 = vmatpush1.msra.mxu0 %v88
    %1974 = vmatprep.subr.mxu0 0.0
    %1975 = vmatpush1.msra.mxu0 %v87
    %1976 = vmatprep.subr.mxu0 0.0
    %1977 = vmatpush2.msra.mxu0 0.0
    %1978 = vmatprep.subr.mxu0 0.0
    %1979 = vmatpush2.msra.mxu0 0.0
    %1980 = vmatprep.subr.mxu0 0.0
    %1981 = vmatpush2.msra.mxu0 0.0
    %1982 = vmatprep.subr.mxu0 0.0
    %1983 = vmatpush2.msra.mxu0 0.0
    %1984 = vmatprep.subr.mxu0 0.0
    %1985 = vmatpush2.msra.mxu0 0.0
    %1986 = vmatprep.subr.mxu0 0.0
    %1987 = vmatpush2.msra.mxu0 0.0
    %1988 = vmatprep.subr.mxu0 0.0
    %1989 = vmatpush2.msra.mxu0 0.0
    %1990 = vmatprep.subr.mxu0 0.0
    %1991 = vmatpush2.msra.mxu0 0.0
    %1992 = vmatprep.subr.mxu0 0.0
    %1993 = vmatpush2.msra.mxu0 0.0
    %1994 = vmatprep.subr.mxu0 0.0
    %1995 = vmatpush2.msra.mxu0 0.0
    %1996 = vmatprep.subr.mxu0 0.0
    %1997 = vmatpush2.msra.mxu0 0.0
    %1998 = vmatprep.subr.mxu0 0.0
    %1999 = vmatpush2.msra.mxu0 0.0
    %2000 = vmatprep.subr.mxu0 0.0
    %2001 = vmatpush2.msra.mxu0 0.0
    %2002 = vmatprep.subr.mxu0 0.0
    %2003 = vmatpush2.msra.mxu0 0.0
    %2004 = vmatprep.subr.mxu0 0.0
    %2005 = vmatpush2.msra.mxu0 0.0
    %2006 = vmatprep.subr.mxu0 0.0
    %2007 = vmatpush2.msra.mxu0 0.0
    %2008 = vmatprep.mubr.f32.mxu0 0.0
    %2009 = vmatmul.mubr.f32.gmra.mxu0 %v1942
    %v2010 = vpop.f32.mrf.mxu0
    %v2011 = vadd.f32 0.0, %v2010
    %v2012 = vpop.f32.mrf.mxu0
    %2013 = vdwg.mxu0
    %v2014 = vadd.f32 %v1936, %v2011
    %v2015 = vxor.u32 %v2014, 2147483648
    %v2016 = vmul.f32 %v2015, 1.442695
    %v2017 = vpow.pop %v2016
    %v2018 = vadd.f32 %v2017, 1.0
    %v2019 = vrcp.pop %v2018
    %v2020 = vmul.f32 1.0, %v2019
    %v2021 = vtanh.pop %v2014
    %v2022 = vmul.f32 %v2020, %v1722
    %2024 = vrot.lane.b32.xlu0 %v2021, 64
    %v2025 = vpop.permute.xlu0 %2024
    %v2027 = vmul.f32 %v2020, %v2025
    %2029 = vrot.lane.b32.xlu0 %v2027, 32
    %v2030 = vpop.permute.xlu0 %2029
    %v2032 = vadd.f32 %v2022, %v2030
    %v2033 = vtanh.pop %v2032
    %2035 = vrot.lane.b32.xlu0 %v2033, 64
    %v2036 = vpop.permute.xlu0 %2035
    %v2038 = vmul.f32 %v2020, %v2036
    %2039 = vmatprep.subr.mxu0 0.0
    %2040 = vmatpush1.msra.mxu0 0.0
    %2041 = vmatprep.subr.mxu0 0.0
    %2042 = vmatpush1.msra.mxu0 0.0
    %2043 = vmatprep.subr.mxu0 0.0
    %2044 = vmatpush1.msra.mxu0 0.0
    %2045 = vmatprep.subr.mxu0 0.0
    %2046 = vmatpush1.msra.mxu0 0.0
    %2047 = vmatprep.subr.mxu0 0.0
    %2048 = vmatpush1.msra.mxu0 0.0
    %2049 = vmatprep.subr.mxu0 0.0
    %2050 = vmatpush1.msra.mxu0 0.0
    %2051 = vmatprep.subr.mxu0 0.0
    %2052 = vmatpush1.msra.mxu0 0.0
    %2053 = vmatprep.subr.mxu0 0.0
    %2054 = vmatpush1.msra.mxu0 0.0
    %2055 = vmatprep.subr.mxu0 0.0
    %2056 = vmatpush1.msra.mxu0 0.0
    %2057 = vmatprep.subr.mxu0 0.0
    %2058 = vmatpush1.msra.mxu0 0.0
    %2059 = vmatprep.subr.mxu0 0.0
    %2060 = vmatpush1.msra.mxu0 0.0
    %2061 = vmatprep.subr.mxu0 0.0
    %2062 = vmatpush1.msra.mxu0 0.0
    %2063 = vmatprep.subr.mxu0 0.0
    %2064 = vmatpush1.msra.mxu0 %v86
    %2065 = vmatprep.subr.mxu0 0.0
    %2066 = vmatpush1.msra.mxu0 %v85
    %2067 = vmatprep.subr.mxu0 0.0
    %2068 = vmatpush1.msra.mxu0 %v84
    %2069 = vmatprep.subr.mxu0 0.0
    %2070 = vmatpush1.msra.mxu0 %v83
    %2071 = vmatprep.subr.mxu0 0.0
    %2072 = vmatpush2.msra.mxu0 0.0
    %2073 = vmatprep.subr.mxu0 0.0
    %2074 = vmatpush2.msra.mxu0 0.0
    %2075 = vmatprep.subr.mxu0 0.0
    %2076 = vmatpush2.msra.mxu0 0.0
    %2077 = vmatprep.subr.mxu0 0.0
    %2078 = vmatpush2.msra.mxu0 0.0
    %2079 = vmatprep.subr.mxu0 0.0
    %2080 = vmatpush2.msra.mxu0 0.0
    %2081 = vmatprep.subr.mxu0 0.0
    %2082 = vmatpush2.msra.mxu0 0.0
    %2083 = vmatprep.subr.mxu0 0.0
    %2084 = vmatpush2.msra.mxu0 0.0
    %2085 = vmatprep.subr.mxu0 0.0
    %2086 = vmatpush2.msra.mxu0 0.0
    %2087 = vmatprep.subr.mxu0 0.0
    %2088 = vmatpush2.msra.mxu0 0.0
    %2089 = vmatprep.subr.mxu0 0.0
    %2090 = vmatpush2.msra.mxu0 0.0
    %2091 = vmatprep.subr.mxu0 0.0
    %2092 = vmatpush2.msra.mxu0 0.0
    %2093 = vmatprep.subr.mxu0 0.0
    %2094 = vmatpush2.msra.mxu0 0.0
    %2095 = vmatprep.subr.mxu0 0.0
    %2096 = vmatpush2.msra.mxu0 0.0
    %2097 = vmatprep.subr.mxu0 0.0
    %2098 = vmatpush2.msra.mxu0 0.0
    %2099 = vmatprep.subr.mxu0 0.0
    %2100 = vmatpush2.msra.mxu0 0.0
    %2101 = vmatprep.subr.mxu0 0.0
    %2102 = vmatpush2.msra.mxu0 0.0
    %2103 = vmatprep.mubr.f32.mxu0 0.0
    %2104 = vmatmul.mubr.f32.gmra.mxu0 %v1867
    %v2105 = vpop.f32.mrf.mxu0
    %v2106 = vadd.f32 0.0, %v2105
    %v2107 = vpop.f32.mrf.mxu0
    %2108 = vdwg.mxu0
    %v2110 = vrot.slane %v2106, 2
    %v2111 = vrot.slane %v2106, 3
    %v2114 = vadd.f32 %v175, %v2110
    %v2115 = vadd.f32 %v180, %v2111
    %v2116 = vxor.u32 %v2114, 2147483648
    %v2117 = vxor.u32 %v2115, 2147483648
    %v2118 = vmul.f32 %v2116, 1.442695
    %v2119 = vpow.pop %v2118
    %v2120 = vmul.f32 %v2117, 1.442695
    %v2121 = vpow.pop %v2120
    %v2122 = vadd.f32 %v2119, 1.0
    %v2123 = vadd.f32 %v2121, 1.0
    %v2124 = vrcp.pop %v2122
    %v2125 = vmul.f32 1.0, %v2124
    %v2126 = vrcp.pop %v2123
    %v2127 = vmul.f32 1.0, %v2126
    %v2128 = vtanh.pop %v2114
    %v2129 = vtanh.pop %v2115
    %v2132 = vrot.slane %v1846, 7
    %v2133 = vrot.slane %v1847, 7
    %v2136 = vmul.f32 %v2125, %v2132
    %v2137 = vmul.f32 %v2127, %v2133
    %2140 = vrot.lane.b32.xlu0 %v2128, 64
    %v2141 = vpop.permute.xlu0 %2140
    %2142 = vrot.lane.b32.xlu0 %v2129, 64
    %v2143 = vpop.permute.xlu0 %2142
    %v2146 = vmul.f32 %v2125, %v2141
    %v2147 = vmul.f32 %v2127, %v2143
    %2150 = vrot.lane.b32.xlu0 %v2146, 32
    %v2151 = vpop.permute.xlu0 %2150
    %2152 = vrot.lane.b32.xlu0 %v2147, 32
    %v2153 = vpop.permute.xlu0 %2152
    %v2156 = vadd.f32 %v2136, %v2151
    %v2157 = vadd.f32 %v2137, %v2153
    %v2158 = vtanh.pop %v2156
    %v2159 = vtanh.pop %v2157
    %2162 = vrot.lane.b32.xlu0 %v2158, 64
    %v2163 = vpop.permute.xlu0 %2162
    %2164 = vrot.lane.b32.xlu0 %v2159, 64
    %v2165 = vpop.permute.xlu0 %2164
    %v2168 = vmul.f32 %v2125, %v2163
    %v2169 = vmul.f32 %v2127, %v2165
    %v2172 = vrot.slane %v2168, 6
    %v2173 = vrot.slane %v2169, 5
    %v2174 = vsel %vm320, %v2173, %v2172
    %2175 = vrot.lane.b32.xlu0 %v2174, 32
    %v2176 = vpop.permute.xlu0 %2175
    %v2177 = vsel %vm183, %v2176, 0
    %2179 = vmatprep.subr.mxu0 0.0
    %2180 = vmatpush1.msra.mxu0 0.0
    %2181 = vmatprep.subr.mxu0 0.0
    %2182 = vmatpush1.msra.mxu0 0.0
    %2183 = vmatprep.subr.mxu0 0.0
    %2184 = vmatpush1.msra.mxu0 0.0
    %2185 = vmatprep.subr.mxu0 0.0
    %2186 = vmatpush1.msra.mxu0 0.0
    %2187 = vmatprep.subr.mxu0 0.0
    %2188 = vmatpush1.msra.mxu0 0.0
    %2189 = vmatprep.subr.mxu0 0.0
    %2190 = vmatpush1.msra.mxu0 0.0
    %2191 = vmatprep.subr.mxu0 0.0
    %2192 = vmatpush1.msra.mxu0 0.0
    %2193 = vmatprep.subr.mxu0 0.0
    %2194 = vmatpush1.msra.mxu0 0.0
    %2195 = vmatprep.subr.mxu0 0.0
    %2196 = vmatpush1.msra.mxu0 0.0
    %2197 = vmatprep.subr.mxu0 0.0
    %2198 = vmatpush1.msra.mxu0 0.0
    %2199 = vmatprep.subr.mxu0 0.0
    %2200 = vmatpush1.msra.mxu0 0.0
    %2201 = vmatprep.subr.mxu0 0.0
    %2202 = vmatpush1.msra.mxu0 0.0
    %2203 = vmatprep.subr.mxu0 0.0
    %2204 = vmatpush1.msra.mxu0 %v82
    %2205 = vmatprep.subr.mxu0 0.0
    %2206 = vmatpush1.msra.mxu0 %v81
    %2207 = vmatprep.subr.mxu0 0.0
    %2208 = vmatpush1.msra.mxu0 %v80
    %2209 = vmatprep.subr.mxu0 0.0
    %2210 = vmatpush1.msra.mxu0 %v79
    %2211 = vmatprep.subr.mxu0 0.0
    %2212 = vmatpush2.msra.mxu0 0.0
    %2213 = vmatprep.subr.mxu0 0.0
    %2214 = vmatpush2.msra.mxu0 0.0
    %2215 = vmatprep.subr.mxu0 0.0
    %2216 = vmatpush2.msra.mxu0 0.0
    %2217 = vmatprep.subr.mxu0 0.0
    %2218 = vmatpush2.msra.mxu0 0.0
    %2219 = vmatprep.subr.mxu0 0.0
    %2220 = vmatpush2.msra.mxu0 0.0
    %2221 = vmatprep.subr.mxu0 0.0
    %2222 = vmatpush2.msra.mxu0 0.0
    %2223 = vmatprep.subr.mxu0 0.0
    %2224 = vmatpush2.msra.mxu0 0.0
    %2225 = vmatprep.subr.mxu0 0.0
    %2226 = vmatpush2.msra.mxu0 0.0
    %2227 = vmatprep.subr.mxu0 0.0
    %2228 = vmatpush2.msra.mxu0 0.0
    %2229 = vmatprep.subr.mxu0 0.0
    %2230 = vmatpush2.msra.mxu0 0.0
    %2231 = vmatprep.subr.mxu0 0.0
    %2232 = vmatpush2.msra.mxu0 0.0
    %2233 = vmatprep.subr.mxu0 0.0
    %2234 = vmatpush2.msra.mxu0 0.0
    %2235 = vmatprep.subr.mxu0 0.0
    %2236 = vmatpush2.msra.mxu0 0.0
    %2237 = vmatprep.subr.mxu0 0.0
    %2238 = vmatpush2.msra.mxu0 0.0
    %2239 = vmatprep.subr.mxu0 0.0
    %2240 = vmatpush2.msra.mxu0 0.0
    %2241 = vmatprep.subr.mxu0 0.0
    %2242 = vmatpush2.msra.mxu0 0.0
    %2243 = vmatprep.mubr.f32.mxu0 0.0
    %2244 = vmatmul.mubr.f32.gmra.mxu0 %v2177
    %v2245 = vpop.f32.mrf.mxu0
    %v2246 = vadd.f32 %v315, %v2245
    %v2247 = vpop.f32.mrf.mxu0
    %2248 = vdwg.mxu0
    %2250 = vrot.lane.b32.xlu0 %v2038, 32
    %v2251 = vpop.permute.xlu0 %2250
    %v2252 = vsel %vm183, %v2251, 0
    %2254 = vmatprep.subr.mxu0 0.0
    %2255 = vmatpush1.msra.mxu0 0.0
    %2256 = vmatprep.subr.mxu0 0.0
    %2257 = vmatpush1.msra.mxu0 0.0
    %2258 = vmatprep.subr.mxu0 0.0
    %2259 = vmatpush1.msra.mxu0 0.0
    %2260 = vmatprep.subr.mxu0 0.0
    %2261 = vmatpush1.msra.mxu0 0.0
    %2262 = vmatprep.subr.mxu0 0.0
    %2263 = vmatpush1.msra.mxu0 0.0
    %2264 = vmatprep.subr.mxu0 0.0
    %2265 = vmatpush1.msra.mxu0 0.0
    %2266 = vmatprep.subr.mxu0 0.0
    %2267 = vmatpush1.msra.mxu0 0.0
    %2268 = vmatprep.subr.mxu0 0.0
    %2269 = vmatpush1.msra.mxu0 0.0
    %2270 = vmatprep.subr.mxu0 0.0
    %2271 = vmatpush1.msra.mxu0 0.0
    %2272 = vmatprep.subr.mxu0 0.0
    %2273 = vmatpush1.msra.mxu0 0.0
    %2274 = vmatprep.subr.mxu0 0.0
    %2275 = vmatpush1.msra.mxu0 0.0
    %2276 = vmatprep.subr.mxu0 0.0
    %2277 = vmatpush1.msra.mxu0 0.0
    %2278 = vmatprep.subr.mxu0 0.0
    %2279 = vmatpush1.msra.mxu0 %v90
    %2280 = vmatprep.subr.mxu0 0.0
    %2281 = vmatpush1.msra.mxu0 %v89
    %2282 = vmatprep.subr.mxu0 0.0
    %2283 = vmatpush1.msra.mxu0 %v88
    %2284 = vmatprep.subr.mxu0 0.0
    %2285 = vmatpush1.msra.mxu0 %v87
    %2286 = vmatprep.subr.mxu0 0.0
    %2287 = vmatpush2.msra.mxu0 0.0
    %2288 = vmatprep.subr.mxu0 0.0
    %2289 = vmatpush2.msra.mxu0 0.0
    %2290 = vmatprep.subr.mxu0 0.0
    %2291 = vmatpush2.msra.mxu0 0.0
    %2292 = vmatprep.subr.mxu0 0.0
    %2293 = vmatpush2.msra.mxu0 0.0
    %2294 = vmatprep.subr.mxu0 0.0
    %2295 = vmatpush2.msra.mxu0 0.0
    %2296 = vmatprep.subr.mxu0 0.0
    %2297 = vmatpush2.msra.mxu0 0.0
    %2298 = vmatprep.subr.mxu0 0.0
    %2299 = vmatpush2.msra.mxu0 0.0
    %2300 = vmatprep.subr.mxu0 0.0
    %2301 = vmatpush2.msra.mxu0 0.0
    %2302 = vmatprep.subr.mxu0 0.0
    %2303 = vmatpush2.msra.mxu0 0.0
    %2304 = vmatprep.subr.mxu0 0.0
    %2305 = vmatpush2.msra.mxu0 0.0
    %2306 = vmatprep.subr.mxu0 0.0
    %2307 = vmatpush2.msra.mxu0 0.0
    %2308 = vmatprep.subr.mxu0 0.0
    %2309 = vmatpush2.msra.mxu0 0.0
    %2310 = vmatprep.subr.mxu0 0.0
    %2311 = vmatpush2.msra.mxu0 0.0
    %2312 = vmatprep.subr.mxu0 0.0
    %2313 = vmatpush2.msra.mxu0 0.0
    %2314 = vmatprep.subr.mxu0 0.0
    %2315 = vmatpush2.msra.mxu0 0.0
    %2316 = vmatprep.subr.mxu0 0.0
    %2317 = vmatpush2.msra.mxu0 0.0
    %2318 = vmatprep.mubr.f32.mxu0 0.0
    %2319 = vmatmul.mubr.f32.gmra.mxu0 %v2252
    %v2320 = vpop.f32.mrf.mxu0
    %v2321 = vadd.f32 0.0, %v2320
    %v2322 = vpop.f32.mrf.mxu0
    %2323 = vdwg.mxu0
    %v2324 = vadd.f32 %v2246, %v2321
    %v2325 = vxor.u32 %v2324, 2147483648
    %v2326 = vmul.f32 %v2325, 1.442695
    %v2327 = vpow.pop %v2326
    %v2328 = vadd.f32 %v2327, 1.0
    %v2329 = vrcp.pop %v2328
    %v2330 = vmul.f32 1.0, %v2329
    %v2331 = vtanh.pop %v2324
    %v2332 = vmul.f32 %v2330, %v2032
    %2334 = vrot.lane.b32.xlu0 %v2331, 64
    %v2335 = vpop.permute.xlu0 %2334
    %v2337 = vmul.f32 %v2330, %v2335
    %2339 = vrot.lane.b32.xlu0 %v2337, 32
    %v2340 = vpop.permute.xlu0 %2339
    %v2342 = vadd.f32 %v2332, %v2340
    %v2343 = vtanh.pop %v2342
    %2345 = vrot.lane.b32.xlu0 %v2343, 64
    %v2346 = vpop.permute.xlu0 %2345
    %v2348 = vmul.f32 %v2330, %v2346
    %2349 = vmatprep.subr.mxu0 0.0
    %2350 = vmatpush1.msra.mxu0 0.0
    %2351 = vmatprep.subr.mxu0 0.0
    %2352 = vmatpush1.msra.mxu0 0.0
    %2353 = vmatprep.subr.mxu0 0.0
    %2354 = vmatpush1.msra.mxu0 0.0
    %2355 = vmatprep.subr.mxu0 0.0
    %2356 = vmatpush1.msra.mxu0 0.0
    %2357 = vmatprep.subr.mxu0 0.0
    %2358 = vmatpush1.msra.mxu0 0.0
    %2359 = vmatprep.subr.mxu0 0.0
    %2360 = vmatpush1.msra.mxu0 0.0
    %2361 = vmatprep.subr.mxu0 0.0
    %2362 = vmatpush1.msra.mxu0 0.0
    %2363 = vmatprep.subr.mxu0 0.0
    %2364 = vmatpush1.msra.mxu0 0.0
    %2365 = vmatprep.subr.mxu0 0.0
    %2366 = vmatpush1.msra.mxu0 0.0
    %2367 = vmatprep.subr.mxu0 0.0
    %2368 = vmatpush1.msra.mxu0 0.0
    %2369 = vmatprep.subr.mxu0 0.0
    %2370 = vmatpush1.msra.mxu0 0.0
    %2371 = vmatprep.subr.mxu0 0.0
    %2372 = vmatpush1.msra.mxu0 0.0
    %2373 = vmatprep.subr.mxu0 0.0
    %2374 = vmatpush1.msra.mxu0 %v86
    %2375 = vmatprep.subr.mxu0 0.0
    %2376 = vmatpush1.msra.mxu0 %v85
    %2377 = vmatprep.subr.mxu0 0.0
    %2378 = vmatpush1.msra.mxu0 %v84
    %2379 = vmatprep.subr.mxu0 0.0
    %2380 = vmatpush1.msra.mxu0 %v83
    %2381 = vmatprep.subr.mxu0 0.0
    %2382 = vmatpush2.msra.mxu0 0.0
    %2383 = vmatprep.subr.mxu0 0.0
    %2384 = vmatpush2.msra.mxu0 0.0
    %2385 = vmatprep.subr.mxu0 0.0
    %2386 = vmatpush2.msra.mxu0 0.0
    %2387 = vmatprep.subr.mxu0 0.0
    %2388 = vmatpush2.msra.mxu0 0.0
    %2389 = vmatprep.subr.mxu0 0.0
    %2390 = vmatpush2.msra.mxu0 0.0
    %2391 = vmatprep.subr.mxu0 0.0
    %2392 = vmatpush2.msra.mxu0 0.0
    %2393 = vmatprep.subr.mxu0 0.0
    %2394 = vmatpush2.msra.mxu0 0.0
    %2395 = vmatprep.subr.mxu0 0.0
    %2396 = vmatpush2.msra.mxu0 0.0
    %2397 = vmatprep.subr.mxu0 0.0
    %2398 = vmatpush2.msra.mxu0 0.0
    %2399 = vmatprep.subr.mxu0 0.0
    %2400 = vmatpush2.msra.mxu0 0.0
    %2401 = vmatprep.subr.mxu0 0.0
    %2402 = vmatpush2.msra.mxu0 0.0
    %2403 = vmatprep.subr.mxu0 0.0
    %2404 = vmatpush2.msra.mxu0 0.0
    %2405 = vmatprep.subr.mxu0 0.0
    %2406 = vmatpush2.msra.mxu0 0.0
    %2407 = vmatprep.subr.mxu0 0.0
    %2408 = vmatpush2.msra.mxu0 0.0
    %2409 = vmatprep.subr.mxu0 0.0
    %2410 = vmatpush2.msra.mxu0 0.0
    %2411 = vmatprep.subr.mxu0 0.0
    %2412 = vmatpush2.msra.mxu0 0.0
    %2413 = vmatprep.mubr.f32.mxu0 0.0
    %2414 = vmatmul.mubr.f32.gmra.mxu0 %v2177
    %v2415 = vpop.f32.mrf.mxu0
    %v2416 = vadd.f32 0.0, %v2415
    %v2417 = vpop.f32.mrf.mxu0
    %2418 = vdwg.mxu0
    %v2420 = vrot.slane %v2416, 1
    %v2421 = vrot.slane %v2416, 2
    %v2424 = vadd.f32 %v175, %v2420
    %v2425 = vadd.f32 %v180, %v2421
    %v2426 = vxor.u32 %v2424, 2147483648
    %v2427 = vxor.u32 %v2425, 2147483648
    %v2428 = vmul.f32 %v2426, 1.442695
    %v2429 = vpow.pop %v2428
    %v2430 = vmul.f32 %v2427, 1.442695
    %v2431 = vpow.pop %v2430
    %v2432 = vadd.f32 %v2429, 1.0
    %v2433 = vadd.f32 %v2431, 1.0
    %v2434 = vrcp.pop %v2432
    %v2435 = vmul.f32 1.0, %v2434
    %v2436 = vrcp.pop %v2433
    %v2437 = vmul.f32 1.0, %v2436
    %v2438 = vtanh.pop %v2424
    %v2439 = vtanh.pop %v2425
    %v2442 = vrot.slane %v2156, 7
    %v2443 = vrot.slane %v2157, 7
    %v2446 = vmul.f32 %v2435, %v2442
    %v2447 = vmul.f32 %v2437, %v2443
    %2450 = vrot.lane.b32.xlu0 %v2438, 64
    %v2451 = vpop.permute.xlu0 %2450
    %2452 = vrot.lane.b32.xlu0 %v2439, 64
    %v2453 = vpop.permute.xlu0 %2452
    %v2456 = vmul.f32 %v2435, %v2451
    %v2457 = vmul.f32 %v2437, %v2453
    %2460 = vrot.lane.b32.xlu0 %v2456, 32
    %v2461 = vpop.permute.xlu0 %2460
    %2462 = vrot.lane.b32.xlu0 %v2457, 32
    %v2463 = vpop.permute.xlu0 %2462
    %v2466 = vadd.f32 %v2446, %v2461
    %v2467 = vadd.f32 %v2447, %v2463
    %v2468 = vtanh.pop %v2466
    %v2469 = vtanh.pop %v2467
    %2472 = vrot.lane.b32.xlu0 %v2468, 64
    %v2473 = vpop.permute.xlu0 %2472
    %2474 = vrot.lane.b32.xlu0 %v2469, 64
    %v2475 = vpop.permute.xlu0 %2474
    %v2478 = vmul.f32 %v2435, %v2473
    %v2479 = vmul.f32 %v2437, %v2475
    %v2482 = vrot.slane %v2478, 7
    %v2483 = vrot.slane %v2479, 6
    %v2484 = vsel %vm320, %v2483, %v2482
    %2485 = vrot.lane.b32.xlu0 %v2484, 32
    %v2486 = vpop.permute.xlu0 %2485
    %v2487 = vsel %vm183, %v2486, 0
    %2489 = vmatprep.subr.mxu0 0.0
    %2490 = vmatpush1.msra.mxu0 0.0
    %2491 = vmatprep.subr.mxu0 0.0
    %2492 = vmatpush1.msra.mxu0 0.0
    %2493 = vmatprep.subr.mxu0 0.0
    %2494 = vmatpush1.msra.mxu0 0.0
    %2495 = vmatprep.subr.mxu0 0.0
    %2496 = vmatpush1.msra.mxu0 0.0
    %2497 = vmatprep.subr.mxu0 0.0
    %2498 = vmatpush1.msra.mxu0 0.0
    %2499 = vmatprep.subr.mxu0 0.0
    %2500 = vmatpush1.msra.mxu0 0.0
    %2501 = vmatprep.subr.mxu0 0.0
    %2502 = vmatpush1.msra.mxu0 0.0
    %2503 = vmatprep.subr.mxu0 0.0
    %2504 = vmatpush1.msra.mxu0 0.0
    %2505 = vmatprep.subr.mxu0 0.0
    %2506 = vmatpush1.msra.mxu0 0.0
    %2507 = vmatprep.subr.mxu0 0.0
    %2508 = vmatpush1.msra.mxu0 0.0
    %2509 = vmatprep.subr.mxu0 0.0
    %2510 = vmatpush1.msra.mxu0 0.0
    %2511 = vmatprep.subr.mxu0 0.0
    %2512 = vmatpush1.msra.mxu0 0.0
    %2513 = vmatprep.subr.mxu0 0.0
    %2514 = vmatpush1.msra.mxu0 %v82
    %2515 = vmatprep.subr.mxu0 0.0
    %2516 = vmatpush1.msra.mxu0 %v81
    %2517 = vmatprep.subr.mxu0 0.0
    %2518 = vmatpush1.msra.mxu0 %v80
    %2519 = vmatprep.subr.mxu0 0.0
    %2520 = vmatpush1.msra.mxu0 %v79
    %2521 = vmatprep.subr.mxu0 0.0
    %2522 = vmatpush2.msra.mxu0 0.0
    %2523 = vmatprep.subr.mxu0 0.0
    %2524 = vmatpush2.msra.mxu0 0.0
    %2525 = vmatprep.subr.mxu0 0.0
    %2526 = vmatpush2.msra.mxu0 0.0
    %2527 = vmatprep.subr.mxu0 0.0
    %2528 = vmatpush2.msra.mxu0 0.0
    %2529 = vmatprep.subr.mxu0 0.0
    %2530 = vmatpush2.msra.mxu0 0.0
    %2531 = vmatprep.subr.mxu0 0.0
    %2532 = vmatpush2.msra.mxu0 0.0
    %2533 = vmatprep.subr.mxu0 0.0
    %2534 = vmatpush2.msra.mxu0 0.0
    %2535 = vmatprep.subr.mxu0 0.0
    %2536 = vmatpush2.msra.mxu0 0.0
    %2537 = vmatprep.subr.mxu0 0.0
    %2538 = vmatpush2.msra.mxu0 0.0
    %2539 = vmatprep.subr.mxu0 0.0
    %2540 = vmatpush2.msra.mxu0 0.0
    %2541 = vmatprep.subr.mxu0 0.0
    %2542 = vmatpush2.msra.mxu0 0.0
    %2543 = vmatprep.subr.mxu0 0.0
    %2544 = vmatpush2.msra.mxu0 0.0
    %2545 = vmatprep.subr.mxu0 0.0
    %2546 = vmatpush2.msra.mxu0 0.0
    %2547 = vmatprep.subr.mxu0 0.0
    %2548 = vmatpush2.msra.mxu0 0.0
    %2549 = vmatprep.subr.mxu0 0.0
    %2550 = vmatpush2.msra.mxu0 0.0
    %2551 = vmatprep.subr.mxu0 0.0
    %2552 = vmatpush2.msra.mxu0 0.0
    %2553 = vmatprep.mubr.f32.mxu0 0.0
    %2554 = vmatmul.mubr.f32.gmra.mxu0 %v2487
    %v2555 = vpop.f32.mrf.mxu0
    %v2556 = vadd.f32 %v315, %v2555
    %v2557 = vpop.f32.mrf.mxu0
    %2558 = vdwg.mxu0
    %2560 = vrot.lane.b32.xlu0 %v2348, 32
    %v2561 = vpop.permute.xlu0 %2560
    %v2562 = vsel %vm183, %v2561, 0
    %2564 = vmatprep.subr.mxu0 0.0
    %2565 = vmatpush1.msra.mxu0 0.0
    %2566 = vmatprep.subr.mxu0 0.0
    %2567 = vmatpush1.msra.mxu0 0.0
    %2568 = vmatprep.subr.mxu0 0.0
    %2569 = vmatpush1.msra.mxu0 0.0
    %2570 = vmatprep.subr.mxu0 0.0
    %2571 = vmatpush1.msra.mxu0 0.0
    %2572 = vmatprep.subr.mxu0 0.0
    %2573 = vmatpush1.msra.mxu0 0.0
    %2574 = vmatprep.subr.mxu0 0.0
    %2575 = vmatpush1.msra.mxu0 0.0
    %2576 = vmatprep.subr.mxu0 0.0
    %2577 = vmatpush1.msra.mxu0 0.0
    %2578 = vmatprep.subr.mxu0 0.0
    %2579 = vmatpush1.msra.mxu0 0.0
    %2580 = vmatprep.subr.mxu0 0.0
    %2581 = vmatpush1.msra.mxu0 0.0
    %2582 = vmatprep.subr.mxu0 0.0
    %2583 = vmatpush1.msra.mxu0 0.0
    %2584 = vmatprep.subr.mxu0 0.0
    %2585 = vmatpush1.msra.mxu0 0.0
    %2586 = vmatprep.subr.mxu0 0.0
    %2587 = vmatpush1.msra.mxu0 0.0
    %2588 = vmatprep.subr.mxu0 0.0
    %2589 = vmatpush1.msra.mxu0 %v90
    %2590 = vmatprep.subr.mxu0 0.0
    %2591 = vmatpush1.msra.mxu0 %v89
    %2592 = vmatprep.subr.mxu0 0.0
    %2593 = vmatpush1.msra.mxu0 %v88
    %2594 = vmatprep.subr.mxu0 0.0
    %2595 = vmatpush1.msra.mxu0 %v87
    %2596 = vmatprep.subr.mxu0 0.0
    %2597 = vmatpush2.msra.mxu0 0.0
    %2598 = vmatprep.subr.mxu0 0.0
    %2599 = vmatpush2.msra.mxu0 0.0
    %2600 = vmatprep.subr.mxu0 0.0
    %2601 = vmatpush2.msra.mxu0 0.0
    %2602 = vmatprep.subr.mxu0 0.0
    %2603 = vmatpush2.msra.mxu0 0.0
    %2604 = vmatprep.subr.mxu0 0.0
    %2605 = vmatpush2.msra.mxu0 0.0
    %2606 = vmatprep.subr.mxu0 0.0
    %2607 = vmatpush2.msra.mxu0 0.0
    %2608 = vmatprep.subr.mxu0 0.0
    %2609 = vmatpush2.msra.mxu0 0.0
    %2610 = vmatprep.subr.mxu0 0.0
    %2611 = vmatpush2.msra.mxu0 0.0
    %2612 = vmatprep.subr.mxu0 0.0
    %2613 = vmatpush2.msra.mxu0 0.0
    %2614 = vmatprep.subr.mxu0 0.0
    %2615 = vmatpush2.msra.mxu0 0.0
    %2616 = vmatprep.subr.mxu0 0.0
    %2617 = vmatpush2.msra.mxu0 0.0
    %2618 = vmatprep.subr.mxu0 0.0
    %2619 = vmatpush2.msra.mxu0 0.0
    %2620 = vmatprep.subr.mxu0 0.0
    %2621 = vmatpush2.msra.mxu0 0.0
    %2622 = vmatprep.subr.mxu0 0.0
    %2623 = vmatpush2.msra.mxu0 0.0
    %2624 = vmatprep.subr.mxu0 0.0
    %2625 = vmatpush2.msra.mxu0 0.0
    %2626 = vmatprep.subr.mxu0 0.0
    %2627 = vmatpush2.msra.mxu0 0.0
    %2628 = vmatprep.mubr.f32.mxu0 0.0
    %2629 = vmatmul.mubr.f32.gmra.mxu0 %v2562
    %v2630 = vpop.f32.mrf.mxu0
    %v2631 = vadd.f32 0.0, %v2630
    %v2632 = vpop.f32.mrf.mxu0
    %2633 = vdwg.mxu0
    %v2634 = vadd.f32 %v2556, %v2631
    %v2635 = vxor.u32 %v2634, 2147483648
    %v2636 = vmul.f32 %v2635, 1.442695
    %v2637 = vpow.pop %v2636
    %v2638 = vadd.f32 %v2637, 1.0
    %v2639 = vrcp.pop %v2638
    %v2640 = vmul.f32 1.0, %v2639
    %v2641 = vtanh.pop %v2634
    %v2642 = vmul.f32 %v2640, %v2342
    %2644 = vrot.lane.b32.xlu0 %v2641, 64
    %v2645 = vpop.permute.xlu0 %2644
    %v2647 = vmul.f32 %v2640, %v2645
    %2649 = vrot.lane.b32.xlu0 %v2647, 32
    %v2650 = vpop.permute.xlu0 %2649
    %v2652 = vadd.f32 %v2642, %v2650
    %v2653 = vtanh.pop %v2652
    %2655 = vrot.lane.b32.xlu0 %v2653, 64
    %v2656 = vpop.permute.xlu0 %2655
    %v2658 = vmul.f32 %v2640, %v2656
    %v2660 = vlaneseq
    %v2661 = vshrl.u32 %v2660, 7
    %v2662 = vsub.s32 0, %v2661
    %v2663 = vrot.slane %v77, %v2662
    %2666 = vrot.lane.b32.xlu0 %v2658, 32
    %v2667 = vpop.permute.xlu0 %2666
    %v2668 = vsel %vm183, %v2667, 0
    %2670 = vmatprep.subr.mxu0 0.0
    %2671 = vmatpush1.msra.mxu0 0.0
    %2672 = vmatprep.subr.mxu0 0.0
    %2673 = vmatpush1.msra.mxu0 0.0
    %2674 = vmatprep.subr.mxu0 0.0
    %2675 = vmatpush1.msra.mxu0 0.0
    %2676 = vmatprep.subr.mxu0 0.0
    %2677 = vmatpush1.msra.mxu0 0.0
    %2678 = vmatprep.subr.mxu0 0.0
    %2679 = vmatpush1.msra.mxu0 0.0
    %2680 = vmatprep.subr.mxu0 0.0
    %2681 = vmatpush1.msra.mxu0 0.0
    %2682 = vmatprep.subr.mxu0 0.0
    %2683 = vmatpush1.msra.mxu0 0.0
    %2684 = vmatprep.subr.mxu0 0.0
    %2685 = vmatpush1.msra.mxu0 0.0
    %2686 = vmatprep.subr.mxu0 0.0
    %2687 = vmatpush1.msra.mxu0 0.0
    %2688 = vmatprep.subr.mxu0 0.0
    %2689 = vmatpush1.msra.mxu0 0.0
    %2690 = vmatprep.subr.mxu0 0.0
    %2691 = vmatpush1.msra.mxu0 0.0
    %2692 = vmatprep.subr.mxu0 0.0
    %2693 = vmatpush1.msra.mxu0 0.0
    %2694 = vmatprep.subr.mxu0 0.0
    %2695 = vmatpush1.msra.mxu0 %v76
    %2696 = vmatprep.subr.mxu0 0.0
    %2697 = vmatpush1.msra.mxu0 %v75
    %2698 = vmatprep.subr.mxu0 0.0
    %2699 = vmatpush1.msra.mxu0 %v74
    %2700 = vmatprep.subr.mxu0 0.0
    %2701 = vmatpush1.msra.mxu0 %v73
    %2702 = vmatprep.subr.mxu0 0.0
    %2703 = vmatpush2.msra.mxu0 0.0
    %2704 = vmatprep.subr.mxu0 0.0
    %2705 = vmatpush2.msra.mxu0 0.0
    %2706 = vmatprep.subr.mxu0 0.0
    %2707 = vmatpush2.msra.mxu0 0.0
    %2708 = vmatprep.subr.mxu0 0.0
    %2709 = vmatpush2.msra.mxu0 0.0
    %2710 = vmatprep.subr.mxu0 0.0
    %2711 = vmatpush2.msra.mxu0 0.0
    %2712 = vmatprep.subr.mxu0 0.0
    %2713 = vmatpush2.msra.mxu0 0.0
    %2714 = vmatprep.subr.mxu0 0.0
    %2715 = vmatpush2.msra.mxu0 0.0
    %2716 = vmatprep.subr.mxu0 0.0
    %2717 = vmatpush2.msra.mxu0 0.0
    %2718 = vmatprep.subr.mxu0 0.0
    %2719 = vmatpush2.msra.mxu0 0.0
    %2720 = vmatprep.subr.mxu0 0.0
    %2721 = vmatpush2.msra.mxu0 0.0
    %2722 = vmatprep.subr.mxu0 0.0
    %2723 = vmatpush2.msra.mxu0 0.0
    %2724 = vmatprep.subr.mxu0 0.0
    %2725 = vmatpush2.msra.mxu0 0.0
    %2726 = vmatprep.subr.mxu0 0.0
    %2727 = vmatpush2.msra.mxu0 0.0
    %2728 = vmatprep.subr.mxu0 0.0
    %2729 = vmatpush2.msra.mxu0 0.0
    %2730 = vmatprep.subr.mxu0 0.0
    %2731 = vmatpush2.msra.mxu0 0.0
    %2732 = vmatprep.subr.mxu0 0.0
    %2733 = vmatpush2.msra.mxu0 0.0
    %2734 = vmatprep.mubr.f32.mxu0 0.0
    %2735 = vmatmul.mubr.f32.gmra.mxu0 %v2668
    %v2736 = vpop.f32.mrf.mxu0
    %v2737 = vadd.f32 %v2663, %v2736
    %v2738 = vpop.f32.mrf.mxu0
    %2739 = vdwg.mxu0
    %vm2740 = vcmask 1024
    %2741 = vst.msk [vmem:[%s9] sm:$0x3] %vm2740, %v2737
    // Predicated region
    $region50: #{lstm_model_forward.1} parent=1 // pred_check
      _
    $region51: #{lstm_model_forward.1} parent=1 // pred_check_branch
      %2743 = sbr.rel (0) target = $region53
    $region52: #{lstm_model_forward.1} parent=1 // pred_region
      _
    $region53: #{lstm_model_forward.1} parent=1 // pred_fallthru
      _
    // Predicated region
    $region54: #{lstm_model_forward.1} parent=1 // pred_check
      _
    $region55: #{lstm_model_forward.1} parent=1 // pred_check_branch
      %2745 = sbr.rel (0) target = $region57
    $region56: #{lstm_model_forward.1} parent=1 // pred_region
      _
    $region57: #{lstm_model_forward.1} parent=1 // pred_fallthru
      _
    %2746 = vsyncpa [#allocation4], 1
    %2747 = vsyncpa [#allocation6], 1

</llo_original>
